<compile_context>
chip_gen: v5e
topology: v5e:2x2
jax: 0.10.0
libtpu: 0.0.40
codegen_flags: <defaults>
</compile_context>

<pallas_src>
import functools

import jax
import jax.numpy as jnp
from jax.experimental import pallas as pl
from jax.experimental.pallas import tpu as pltpu


# ----------------------------------------------------------------------------
# Fused kernel: all propagation layers + running mean in one pallas_call.
# Grid = (layer, output-row tile, contraction tile), executed sequentially.
# ----------------------------------------------------------------------------
def _fused_kernel(adj_ref, ego_hbm_ref, out_ref, e_buf, acc_ref, sum_ref, init_sem,
                  *, inv_n_layers, n_pad, u_pad, u_tiles, i_tiles, n_layers,
                  tile, k_max):
    l = pl.program_id(0)          # layer index (outer, sequential)
    i = pl.program_id(1)          # output row tile
    k = pl.program_id(2)          # contraction tile

    # One-time init: DMA the layer-0 embeddings into half 0 of the ping-pong
    # buffer. The ego input lives in HBM (memory_space=pl.ANY) so it never
    # occupies a double-buffered VMEM input block.
    @pl.when((l == 0) & (i == 0) & (k == 0))
    def _init():
        cp = pltpu.make_async_copy(
            ego_hbm_ref, e_buf.at[pl.ds(0, n_pad), :], init_sem.at[0])
        cp.start()
        cp.wait()

    # Bipartite row stripes: user rows (i < u_tiles) contract against the item
    # embeddings, item rows against the user embeddings.
    is_user_rows = i < u_tiles
    src_base = jnp.where(is_user_rows, u_pad, 0)       # e-row offset of contracted side
    nk_i = jnp.where(is_user_rows, i_tiles, u_tiles)    # k tiles actually needed

    cur = l % 2                   # half of e_buf holding the layer-l input
    nxt = 1 - cur

    @pl.when(k == 0)
    def _zero_acc():
        acc_ref[...] = jnp.zeros_like(acc_ref)

    # Native bf16 x bf16 -> f32 MXU dot; only the (tile, D) e-slice is cast.
    @pl.when(k < nk_i)
    def _mac():
        src = pl.ds(pl.multiple_of(cur * n_pad + src_base + k * tile, tile), tile)
        acc_ref[...] += jnp.dot(
            adj_ref[...],
            e_buf[src, :].astype(jnp.bfloat16),
            preferred_element_type=jnp.float32,
        )

    # Epilogue for this (layer, row tile): commit the new layer to the ping-pong
    # buffer, fold it into the running layer-sum, and emit the mean on the
    # final layer only.
    @pl.when(k == k_max - 1)
    def _epilogue():
        new_layer = acc_ref[...]
        dst = pl.ds(pl.multiple_of(nxt * n_pad + i * tile, tile), tile)
        e_buf[dst, :] = new_layer

        rows = pl.ds(pl.multiple_of(i * tile, tile), tile)

        @pl.when(l == 0)
        def _first_layer():
            sum_ref[rows, :] = new_layer

        @pl.when(l != 0)
        def _later_layers():
            sum_ref[rows, :] = sum_ref[rows, :] + new_layer

        @pl.when(l == n_layers - 1)
        def _emit():
            out_ref[...] = (sum_ref[rows, :] * inv_n_layers).astype(out_ref.dtype)


@functools.partial(jax.jit,
                   static_argnames=("n_layers", "tile", "u_tiles", "i_tiles"))
def _fused_propagate(adj_packed, ego_f32, *, n_layers, tile, u_tiles, i_tiles):
    n_pad, d = ego_f32.shape
    k_max = max(u_tiles, i_tiles)
    n_row_tiles = u_tiles + i_tiles
    assert adj_packed.shape == (n_pad, k_max * tile)
    assert n_pad == n_row_tiles * tile

    grid = (n_layers, n_row_tiles, k_max)

    kernel = functools.partial(
        _fused_kernel,
        inv_n_layers=1.0 / float(n_layers),
        n_pad=n_pad, u_pad=u_tiles * tile,
        u_tiles=u_tiles, i_tiles=i_tiles,
        n_layers=n_layers, tile=tile, k_max=k_max,
    )

    # Resident VMEM footprint: e ping-pong + layer-sum + k accumulator
    # + double-buffered adjacency tile (bf16) + double-buffered output tile.
    vmem_needed = (2 * n_pad * d * 4        # e ping-pong
                   + n_pad * d * 4          # running layer-sum
                   + tile * d * 4           # k-reduction accumulator
                   + 2 * tile * tile * 2    # adj double buffer (bf16)
                   + 2 * tile * d * 4)      # out double buffer
    vmem_limit = min(max(int(vmem_needed * 1.5) + (2 << 20), 32 << 20), 120 << 20)

    return pl.pallas_call(
        kernel,
        out_shape=jax.ShapeDtypeStruct((n_pad, d), jnp.float32),
        grid_spec=pltpu.PrefetchScalarGridSpec(
            num_scalar_prefetch=0,
            grid=grid,
            in_specs=[
                # Packed bipartite adjacency: the only per-layer HBM stream (bf16).
                pl.BlockSpec((tile, tile), lambda l, i, k: (i, k)),
                # Layer-0 embeddings stay in HBM; DMA'd once inside the kernel.
                pl.BlockSpec(memory_space=pl.ANY),
            ],
            out_specs=pl.BlockSpec((tile, d), lambda l, i, k: (i, 0)),
            scratch_shapes=[
                pltpu.VMEM((2 * n_pad, d), jnp.float32),  # e ping-pong (cur/next)
                pltpu.VMEM((tile, d), jnp.float32),       # per-row-tile accumulator
                pltpu.VMEM((n_pad, d), jnp.float32),      # running layer-sum
                pltpu.SemaphoreType.DMA((1,)),            # init-DMA completion
            ],
        ),
        compiler_params=pltpu.CompilerParams(
            # Layer->layer and row-tile dependencies run through VMEM scratch,
            # so every grid axis must stay sequential on one core.
            dimension_semantics=("arbitrary", "arbitrary", "arbitrary"),
            vmem_limit_bytes=vmem_limit,
        ),
    )(adj_packed, ego_f32)


# ----------------------------------------------------------------------------
# XSGCL_Encoder forward: n_layers of propagation, mean over layers, split.
# Assumes the user-user / item-item quadrants of norm_adj are structurally
# zero (true for the LightGCN-style D^-1/2 A D^-1/2 bipartite adjacency).
# ----------------------------------------------------------------------------
def xsgcl_encoder_forward(norm_adj, user_emb, item_emb, n_layers, *, tile=512):
    user_num = user_emb.shape[0]
    item_num = item_emb.shape[0]
    d = user_emb.shape[1]

    u_pad = -(-user_num // tile) * tile
    i_pad = -(-item_num // tile) * tile
    n_pad = u_pad + i_pad
    w = max(u_pad, i_pad)          # packed contraction width (= k_max * tile)

    # Packed bipartite adjacency (bf16, cast before padding):
    #   rows [0, u_pad):        R  = norm_adj[users, items]   (contract vs items)
    #   rows [u_pad, n_pad):    R' = norm_adj[items, users]   (contract vs users)
    adj_packed = jnp.zeros((n_pad, w), jnp.bfloat16)
    adj_packed = adj_packed.at[:user_num, :item_num].set(
        norm_adj[:user_num, user_num:].astype(jnp.bfloat16))
    adj_packed = adj_packed.at[u_pad:u_pad + item_num, :user_num].set(
        norm_adj[user_num:, :user_num].astype(jnp.bfloat16))

    # Layer-0 embeddings in the same padded row layout (zero rows are inert).
    ego_p = jnp.zeros((n_pad, d), jnp.float32)
    ego_p = ego_p.at[:user_num].set(user_emb.astype(jnp.float32))
    ego_p = ego_p.at[u_pad:u_pad + item_num].set(item_emb.astype(jnp.float32))

    final = _fused_propagate(
        adj_packed, ego_p,
        n_layers=int(n_layers), tile=int(tile),
        u_tiles=u_pad // tile, i_tiles=i_pad // tile,
    )
    return final[:user_num], final[u_pad:u_pad + item_num]


# ----------------------------------------------------------------------------
# Deterministic parameter / graph construction (synthetic, no checkpoints).
# ----------------------------------------------------------------------------
def _xavier_uniform(key, shape):
    fan_in, fan_out = shape
    bound = jnp.sqrt(6.0 / (fan_in + fan_out))
    return jax.random.uniform(key, shape, jnp.float32, -bound, bound)


def _build_norm_adj(key, user_num, item_num, density=0.05):
    """Symmetric-normalized bipartite adjacency D^-1/2 A D^-1/2 (dense f32)."""
    n = user_num + item_num
    r = (jax.random.uniform(key, (user_num, item_num)) < density).astype(jnp.float32)
    a = jnp.zeros((n, n), jnp.float32)
    a = a.at[:user_num, user_num:].set(r)
    a = a.at[user_num:, :user_num].set(r.T)
    deg = a.sum(axis=1)
    d_inv_sqrt = jnp.where(deg > 0, 1.0 / jnp.sqrt(jnp.maximum(deg, 1e-12)), 0.0)
    return a * d_inv_sqrt[:, None] * d_inv_sqrt[None, :]


def _reference_forward(norm_adj, user_emb, item_emb, n_layers):
    """Exact module math (full f32)."""
    ego = jnp.concatenate([user_emb, item_emb], axis=0)
    outs = []
    for _ in range(n_layers):
        ego = norm_adj @ ego
        outs.append(ego)
    final = jnp.mean(jnp.stack(outs, axis=1), axis=1)
    return final[: user_emb.shape[0]], final[user_emb.shape[0]:]


def _reference_kernel_math(norm_adj, user_emb, item_emb, n_layers):
    """Module math with the kernel's numerics: bf16 adjacency and bf16
    activations at the MXU, f32 accumulation (tiling/summation order differ)."""
    adj_q = norm_adj.astype(jnp.bfloat16)
    ego = jnp.concatenate([user_emb, item_emb], axis=0).astype(jnp.float32)
    outs = []
    for _ in range(n_layers):
        ego = jnp.dot(adj_q, ego.astype(jnp.bfloat16),
                      preferred_element_type=jnp.float32)
        outs.append(ego)
    final = jnp.mean(jnp.stack(outs, axis=1), axis=1)
    return final[: user_emb.shape[0]], final[user_emb.shape[0]:]


if __name__ == "__main__":
    # Small shapes consistent with the module: N = 100 + 156 = 256, emb_size = 64,
    # n_layers = 3 (eps / layer_cl are unused in this forward path).
    user_num, item_num, emb_size, n_layers = 100, 156, 64, 3

    key = jax.random.PRNGKey(0)
    k_u, k_i, k_adj = jax.random.split(key, 3)
    user_emb = _xavier_uniform(k_u, (user_num, emb_size))
    item_emb = _xavier_uniform(k_i, (item_num, emb_size))
    norm_adj = _build_norm_adj(k_adj, user_num, item_num)

    u_out, i_out = xsgcl_encoder_forward(
        norm_adj, user_emb, item_emb, n_layers=n_layers
    )
    u_out = jax.block_until_ready(u_out)
    i_out = jax.block_until_ready(i_out)
    assert u_out.shape == (user_num, emb_size)
    assert i_out.shape == (item_num, emb_size)

    # Check 1: same math as the kernel (bf16 adjacency + bf16 activations at the
    # MXU, f32 accumulation) -- only tiling / summation order differ.
    u_q, i_q = _reference_kernel_math(norm_adj, user_emb, item_emb, n_layers)
    assert jnp.allclose(u_out, u_q, atol=1e-3, rtol=1e-2)
    assert jnp.allclose(i_out, i_q, atol=1e-3, rtol=1e-2)

    # Check 2: module semantics in full f32; bf16 quantization of the adjacency
    # and per-layer activations is the only intentional deviation.
    u_ref, i_ref = _reference_forward(norm_adj, user_emb, item_emb, n_layers)
    assert jnp.allclose(u_out, u_ref, atol=1e-2, rtol=5e-2)
    assert jnp.allclose(i_out, i_ref, atol=1e-2, rtol=5e-2)

    print("KERNEL_OK")
</pallas_src>

<mosaic_0001>
module attributes {stable_mosaic.version = 11 : i64} {
  func.func @_fused_kernel(%arg0: i32, %arg1: i32, %arg2: i32, %arg3: memref<512x512xbf16, #tpu.memory_space<vmem>>, %arg4: memref<1024x64xf32, #tpu.memory_space<any>>, %arg5: memref<512x64xf32, #tpu.memory_space<vmem>>, %arg6: memref<2048x64xf32, #tpu.memory_space<vmem>>, %arg7: memref<512x64xf32, #tpu.memory_space<vmem>>, %arg8: memref<1024x64xf32, #tpu.memory_space<vmem>>, %arg9: memref<1x!tpu.dma_semaphore, #tpu.memory_space<semaphore_mem>>) attributes {dimension_semantics = [#tpu.dimension_semantics<arbitrary>, #tpu.dimension_semantics<arbitrary>, #tpu.dimension_semantics<arbitrary>], iteration_bounds = array<i64: 3, 2, 1>, scalar_prefetch = 0 : i64, scratch_operands = 4 : i64, tpu.core_type = #tpu.core_type<tc>, window_params = [{transform_indices = @transform_0, window_bounds = array<i64: 512, 512>}, {}, {transform_indices = @transform_2, window_bounds = array<i64: 512, 64>}]} {
    %c0_i32 = arith.constant 0 : i32
    %0 = arith.cmpi eq, %arg0, %c0_i32 : i32
    %c0_i32_0 = arith.constant 0 : i32
    %1 = arith.cmpi eq, %arg1, %c0_i32_0 : i32
    %2 = arith.andi %0, %1 : i1
    %c0_i32_1 = arith.constant 0 : i32
    %3 = arith.cmpi eq, %arg2, %c0_i32_1 : i32
    %4 = arith.andi %2, %3 : i1
    %5 = arith.extui %4 : i1 to i32
    %c0_i32_2 = arith.constant 0 : i32
    %6 = arith.cmpi ne, %5, %c0_i32_2 : i32
    scf.if %6 {
      %c0_i32_17 = arith.constant 0 : i32
      %c0_i32_18 = arith.constant 0 : i32
      %c0_i32_19 = arith.constant 0 : i32
      %30 = tpu.memref_slice %arg6[%c0_i32_18, %c0_i32_19] : memref<2048x64xf32, #tpu.memory_space<vmem>> -> memref<1024x64xf32, #tpu.memory_space<vmem>>
      %31 = tpu.memref_slice %arg9[%c0_i32_17] : memref<1x!tpu.dma_semaphore, #tpu.memory_space<semaphore_mem>> -> memref<1x!tpu.dma_semaphore, #tpu.memory_space<semaphore_mem>>
      %32 = tpu.memref_squeeze %31 : memref<1x!tpu.dma_semaphore, #tpu.memory_space<semaphore_mem>> -> memref<!tpu.dma_semaphore, #tpu.memory_space<semaphore_mem>>
      tpu.enqueue_dma source(%arg4 : memref<1024x64xf32, #tpu.memory_space<any>>) target(%30 : memref<1024x64xf32, #tpu.memory_space<vmem>>) target_semaphore(%32 : memref<!tpu.dma_semaphore, #tpu.memory_space<semaphore_mem>>)
      %c0_i32_20 = arith.constant 0 : i32
      %c0_i32_21 = arith.constant 0 : i32
      %c0_i32_22 = arith.constant 0 : i32
      %33 = tpu.memref_slice %arg6[%c0_i32_21, %c0_i32_22] : memref<2048x64xf32, #tpu.memory_space<vmem>> -> memref<1024x64xf32, #tpu.memory_space<vmem>>
      %34 = tpu.memref_slice %arg9[%c0_i32_20] : memref<1x!tpu.dma_semaphore, #tpu.memory_space<semaphore_mem>> -> memref<1x!tpu.dma_semaphore, #tpu.memory_space<semaphore_mem>>
      %35 = tpu.memref_squeeze %34 : memref<1x!tpu.dma_semaphore, #tpu.memory_space<semaphore_mem>> -> memref<!tpu.dma_semaphore, #tpu.memory_space<semaphore_mem>>
      tpu.wait_dma2 semaphore(%35 : memref<!tpu.dma_semaphore, #tpu.memory_space<semaphore_mem>>) src(%arg4 : memref<1024x64xf32, #tpu.memory_space<any>>) dst(%33 : memref<1024x64xf32, #tpu.memory_space<vmem>>)
    } else {
    }
    %c1_i32 = arith.constant 1 : i32
    %7 = arith.cmpi slt, %arg1, %c1_i32 : i32
    %c512_i32 = arith.constant 512 : i32
    %c0_i32_3 = arith.constant 0 : i32
    %8 = arith.select %7, %c512_i32, %c0_i32_3 : i32
    %c1_i32_4 = arith.constant 1 : i32
    %c1_i32_5 = arith.constant 1 : i32
    %9 = arith.select %7, %c1_i32_4, %c1_i32_5 : i32
    %c2_i32 = arith.constant 2 : i32
    %c0_i32_6 = arith.constant 0 : i32
    %10 = arith.cmpi eq, %c2_i32, %c0_i32_6 : i32
    %c1_i32_7 = arith.constant 1 : i32
    %11 = arith.select %10, %c1_i32_7, %c2_i32 : i32
    %12 = arith.remsi %arg0, %11 : i32
    %c0_i32_8 = arith.constant 0 : i32
    %13 = arith.cmpi ne, %12, %c0_i32_8 : i32
    %c0_i32_9 = arith.constant 0 : i32
    %14 = arith.cmpi slt, %12, %c0_i32_9 : i32
    %c0_i32_10 = arith.constant 0 : i32
    %15 = arith.cmpi slt, %11, %c0_i32_10 : i32
    %16 = arith.xori %14, %15 : i1
    %17 = arith.andi %16, %13 : i1
    %18 = arith.addi %12, %11 : i32
    %19 = arith.select %17, %18, %12 : i32
    %c1_i32_11 = arith.constant 1 : i32
    %20 = arith.subi %c1_i32_11, %19 : i32
    %c0_i32_12 = arith.constant 0 : i32
    %21 = arith.cmpi eq, %arg2, %c0_i32_12 : i32
    %22 = arith.extui %21 : i1 to i32
    %c0_i32_13 = arith.constant 0 : i32
    %23 = arith.cmpi ne, %22, %c0_i32_13 : i32
    scf.if %23 {
      %cst = arith.constant 0.000000e+00 : f32
      %30 = vector.broadcast %cst : f32 to vector<512x64xf32>
      %c0 = arith.constant 0 : index
      %c0_17 = arith.constant 0 : index
      %31 = vector.load %arg7[%c0, %c0_17] : memref<512x64xf32, #tpu.memory_space<vmem>>, vector<512x64xf32>
      tpu.vector_store %arg7[%c0, %c0_17], %30 {strides = array<i32>} : memref<512x64xf32, #tpu.memory_space<vmem>>, vector<512x64xf32>,
    } else {
    }
    %24 = arith.cmpi slt, %arg2, %9 : i32
    %25 = arith.extui %24 : i1 to i32
    %c0_i32_14 = arith.constant 0 : i32
    %26 = arith.cmpi ne, %25, %c0_i32_14 : i32
    scf.if %26 {
      %c1024_i32 = arith.constant 1024 : i32
      %30 = arith.muli %19, %c1024_i32 : i32
      %31 = arith.addi %30, %8 : i32
      %c512_i32_17 = arith.constant 512 : i32
      %32 = arith.muli %arg2, %c512_i32_17 : i32
      %33 = arith.addi %31, %32 : i32
      %34 = tpu.assume_multiple %33, 512 : i32
      %c0 = arith.constant 0 : index
      %c0_18 = arith.constant 0 : index
      %35 = vector.load %arg7[%c0, %c0_18] : memref<512x64xf32, #tpu.memory_space<vmem>>, vector<512x64xf32>
      %c0_19 = arith.constant 0 : index
      %c0_20 = arith.constant 0 : index
      %36 = vector.load %arg3[%c0_19, %c0_20] : memref<512x512xbf16, #tpu.memory_space<vmem>>, vector<512x512xbf16>
      %37 = arith.index_cast %34 : i32 to index
      %c0_21 = arith.constant 0 : index
      %38 = vector.load %arg6[%37, %c0_21] : memref<2048x64xf32, #tpu.memory_space<vmem>>, vector<512x64xf32>
      %39 = arith.truncf %38 : vector<512x64xf32> to vector<512x64xbf16>
      %cst = arith.constant dense<0.000000e+00> : vector<512x64xf32>
      %40 = tpu.matmul %36, %39, %cst {dimension_numbers = #tpu.dot_dimension_numbers<[1], [0], [0], [1], [0, 0, 1, 1], [], []>} : vector<512x512xbf16>, vector<512x64xbf16>, vector<512x64xf32> -> vector<512x64xf32>
      %41 = arith.addf %35, %40 : vector<512x64xf32>
      %c0_22 = arith.constant 0 : index
      %c0_23 = arith.constant 0 : index
      %42 = vector.load %arg7[%c0_22, %c0_23] : memref<512x64xf32, #tpu.memory_space<vmem>>, vector<512x64xf32>
      tpu.vector_store %arg7[%c0_22, %c0_23], %41 {strides = array<i32>} : memref<512x64xf32, #tpu.memory_space<vmem>>, vector<512x64xf32>,
    } else {
    }
    %c0_i32_15 = arith.constant 0 : i32
    %27 = arith.cmpi eq, %arg2, %c0_i32_15 : i32
    %28 = arith.extui %27 : i1 to i32
    %c0_i32_16 = arith.constant 0 : i32
    %29 = arith.cmpi ne, %28, %c0_i32_16 : i32
    scf.if %29 {
      %c0 = arith.constant 0 : index
      %c0_17 = arith.constant 0 : index
      %30 = vector.load %arg7[%c0, %c0_17] : memref<512x64xf32, #tpu.memory_space<vmem>>, vector<512x64xf32>
      %c1024_i32 = arith.constant 1024 : i32
      %31 = arith.muli %20, %c1024_i32 : i32
      %c512_i32_18 = arith.constant 512 : i32
      %32 = arith.muli %arg1, %c512_i32_18 : i32
      %33 = arith.addi %31, %32 : i32
      %34 = tpu.assume_multiple %33, 512 : i32
      %35 = arith.index_cast %34 : i32 to index
      %c0_19 = arith.constant 0 : index
      %36 = vector.load %arg6[%35, %c0_19] : memref<2048x64xf32, #tpu.memory_space<vmem>>, vector<512x64xf32>
      tpu.vector_store %arg6[%35, %c0_19], %30 {strides = array<i32>} : memref<2048x64xf32, #tpu.memory_space<vmem>>, vector<512x64xf32>,
      %c512_i32_20 = arith.constant 512 : i32
      %37 = arith.muli %arg1, %c512_i32_20 : i32
      %38 = tpu.assume_multiple %37, 512 : i32
      %c0_i32_21 = arith.constant 0 : i32
      %39 = arith.cmpi eq, %arg0, %c0_i32_21 : i32
      %40 = arith.extui %39 : i1 to i32
      %c0_i32_22 = arith.constant 0 : i32
      %41 = arith.cmpi ne, %40, %c0_i32_22 : i32
      scf.if %41 {
        %48 = arith.index_cast %38 : i32 to index
        %c0_27 = arith.constant 0 : index
        %49 = vector.load %arg8[%48, %c0_27] : memref<1024x64xf32, #tpu.memory_space<vmem>>, vector<512x64xf32>
        tpu.vector_store %arg8[%48, %c0_27], %30 {strides = array<i32>} : memref<1024x64xf32, #tpu.memory_space<vmem>>, vector<512x64xf32>,
      } else {
      }
      %c0_i32_23 = arith.constant 0 : i32
      %42 = arith.cmpi ne, %arg0, %c0_i32_23 : i32
      %43 = arith.extui %42 : i1 to i32
      %c0_i32_24 = arith.constant 0 : i32
      %44 = arith.cmpi ne, %43, %c0_i32_24 : i32
      scf.if %44 {
        %48 = arith.index_cast %38 : i32 to index
        %c0_27 = arith.constant 0 : index
        %49 = vector.load %arg8[%48, %c0_27] : memref<1024x64xf32, #tpu.memory_space<vmem>>, vector<512x64xf32>
        %50 = arith.addf %49, %30 : vector<512x64xf32>
        %51 = arith.index_cast %38 : i32 to index
        %c0_28 = arith.constant 0 : index
        %52 = vector.load %arg8[%51, %c0_28] : memref<1024x64xf32, #tpu.memory_space<vmem>>, vector<512x64xf32>
        tpu.vector_store %arg8[%51, %c0_28], %50 {strides = array<i32>} : memref<1024x64xf32, #tpu.memory_space<vmem>>, vector<512x64xf32>,
      } else {
      }
      %c2_i32_25 = arith.constant 2 : i32
      %45 = arith.cmpi eq, %arg0, %c2_i32_25 : i32
      %46 = arith.extui %45 : i1 to i32
      %c0_i32_26 = arith.constant 0 : i32
      %47 = arith.cmpi ne, %46, %c0_i32_26 : i32
      scf.if %47 {
        %48 = arith.index_cast %38 : i32 to index
        %c0_27 = arith.constant 0 : index
        %49 = vector.load %arg8[%48, %c0_27] : memref<1024x64xf32, #tpu.memory_space<vmem>>, vector<512x64xf32>
        %cst = arith.constant 0.333333343 : f32
        %50 = vector.broadcast %cst : f32 to vector<512x64xf32>
        %51 = arith.mulf %49, %50 : vector<512x64xf32>
        %c0_28 = arith.constant 0 : index
        %c0_29 = arith.constant 0 : index
        %52 = vector.load %arg5[%c0_28, %c0_29] : memref<512x64xf32, #tpu.memory_space<vmem>>, vector<512x64xf32>
        tpu.vector_store %arg5[%c0_28, %c0_29], %51 {strides = array<i32>} : memref<512x64xf32, #tpu.memory_space<vmem>>, vector<512x64xf32>,
      } else {
      }
    } else {
    }
    return
  }
  func.func @transform_0(%arg0: i32, %arg1: i32, %arg2: i32) -> (i32, i32) {
    %c0_i32 = arith.constant 0 : i32
    return %arg1, %arg2 : i32, i32
  }
  func.func @transform_2(%arg0: i32, %arg1: i32, %arg2: i32) -> (i32, i32) {
    %c0_i32 = arith.constant 0 : i32
    %c0_i32_0 = arith.constant 0 : i32
    return %arg1, %c0_i32 : i32, i32
  }
}

</mosaic_0001>

<llo_original>
// kernel: _fused_propagate.1
$region0: #{_fused_propagate.1}
  #allocation0 [shape = 'u32[]', space=smem, size = 0x4, offset = 0x4, fixed_abs, tag = 'smem constant byte address 0x4 - core index']
  #allocation1 [shape = 'u32[72,128]{1,0:T(1,128)}', space=vmem, size = 0x9000, scoped, tag = 'internal scratch']
  #allocation2 [shape = 'f32[2048,64]{1,0:T(8,128)}', space=vmem, size = 0x100000, scoped, tag = 'scratch operand']
  #allocation3 [shape = 'f32[512,64]{1,0:T(8,128)}', space=vmem, size = 0x40000, scoped, tag = 'scratch operand']
  #allocation4 [shape = 'f32[1024,64]{1,0:T(8,128)}', space=vmem, size = 0x80000, scoped, tag = 'scratch operand']
  #allocation5 [shape = 's32[1]{0}', space=sflag, size = 0x4, scoped, tag = 'scratch operand']
  #allocation8 [shape = 's32[]', space=sflag, size = 0x4, offset = 0, fixed_abs, tag = 'sflag constant byte address 0x0 - dummy sync flag']
  %s0 = inlined_call_operand.hbm [shape: bf16[1024,512], index: 0, kind: input, shape index: {}]
  %s1 = inlined_call_operand.vmem [shape: f32[1024,64], index: 1, kind: input, shape index: {}]
  %s2 = inlined_call_operand.vmem [shape: f32[1024,64], index: 2, kind: output, shape index: {}]
  %s3 = sld [smem:[#allocation0]]
  $region88: #{_fused_propagate.1} parent=0
    _
  %s5 = ssub.s32 1, %s3
  %s6 = scalar_select 0, %s5, %s3
  $region1: #{_fused_propagate.1} parent=0
    #allocation6 [shape = 'u8[1048576]{0}', space=vmem, size = 0x100000, scoped, tag = 'input window, operand 0']
    #allocation7 [shape = 's32[2]{0}', space=sflag, size = 0x8, scoped, tag = 'scoped memory for _fused_propagate.1']
    %7 = vsyncpa [#allocation7], 0
    %s8 = scalar_lea.sflag [#allocation7], 1
    %9 = vsyncpa %s8, 0
    loop: start=0, step=1, limit=8
    $region2: #{_fused_propagate.1} parent=1 // loop_pre_header
      _
    $region3: #{_fused_propagate.1} parent=1 // loop_header
      %s11 = sphi 0, %s15
      %p12 = scmp.ge.s32.totalorder %s11, 8
      %s18 = sphi 0, %s37
      %s19 = sphi 0, %s33
      %s20 = sphi 0, %s29
      %s21 = sphi 0, %s18
      %s22 = sphi 0, %s19
      %s23 = sphi 0, %s20
      %s24 = sphi 0, %s21
      %s25 = sphi 0, %s22
      %s26 = sphi 0, %s23
      %s42 = sphi 0, %s44
      %s45 = sphi 0, %s42
      %s46 = sphi 0, %s45
      %s62 = sphi 0, %s46
      %s68 = sphi 0, %s70
      %s71 = sphi 0, %s68
      %s72 = sphi 0, %s71
      %s88 = sphi 0, %s72
    $region4: #{_fused_propagate.1} parent=1 // loop_header_branch
      %14 = sbr.rel (%p12) target = $region8
    $region5: #{_fused_propagate.1} parent=1 // loop_body
      %s16 = ssub.s32 %s11, 1
      %s17 = ssub.s32 %s11, 2
      %s27 = sadd.s32 1, %s20
      %p28 = scmp.ge.s32.totalorder %s27, 1
      %s29 = scalar_select %p28, 0, %s27
      %s30 = sadd.s32 1, %s19
      %s31 = scalar_select %p28, %s30, %s19
      %p32 = scmp.ge.s32.totalorder %s31, 2
      %s33 = scalar_select %p32, 0, %s31
      %s34 = sadd.s32 1, %s18
      %s35 = scalar_select %p32, %s34, %s18
      %p36 = scmp.ge.s32.totalorder %s35, 3
      %s37 = scalar_select %p36, 0, %s35
      %s38 = ssub.s32 %s19, %s33
      %s39 = ssub.s32 %s20, %s29
      %s40 = sor.u32 %s38, %s39
      %p41 = scmp.eq.s32.totalorder %s40, 0
      %s43 = sadd.s32 %s42, 1
      %s44 = scalar_select %p41, %s42, %s43
      %p47 = pneg %p41
      %p48 = scmp.eq.s32.totalorder %s11, 5
      %p49 = por %p47, %p48
      %p50 = scmp.ne.s32.totalorder %s42, %s45
      %p51 = scmp.eq.s32.totalorder %s11, 0
      %p52 = por %p50, %p51
      %p53 = scmp.ne.s32.totalorder %s42, %s45
      %p54 = scmp.eq.s32.totalorder %s16, 5
      %p55 = por %p53, %p54
      %p56 = scmp.ne.s32.totalorder %s45, %s46
      %p57 = scmp.eq.s32.totalorder %s16, 0
      %p58 = por %p56, %p57
      %p59 = scmp.ne.s32.totalorder %s45, %s46
      %p60 = scmp.eq.s32.totalorder %s17, 5
      %p61 = por %p59, %p60
      %p63 = scmp.ne.s32.totalorder %s46, %s62
      %p64 = scmp.eq.s32.totalorder %s17, 0
      %p65 = por %p63, %p64
      %s66 = ssub.s32 %s19, %s33
      %p67 = scmp.eq.s32.totalorder %s66, 0
      %s69 = sadd.s32 %s68, 1
      %s70 = scalar_select %p67, %s68, %s69
      %p73 = pneg %p67
      %p74 = scmp.eq.s32.totalorder %s11, 5
      %p75 = por %p73, %p74
      %p76 = scmp.ne.s32.totalorder %s68, %s71
      %p77 = scmp.eq.s32.totalorder %s11, 0
      %p78 = por %p76, %p77
      %p79 = scmp.ne.s32.totalorder %s68, %s71
      %p80 = scmp.eq.s32.totalorder %s16, 5
      %p81 = por %p79, %p80
      %p82 = scmp.ne.s32.totalorder %s71, %s72
      %p83 = scmp.eq.s32.totalorder %s16, 0
      %p84 = por %p82, %p83
      %p85 = scmp.ne.s32.totalorder %s71, %s72
      %p86 = scmp.eq.s32.totalorder %s17, 5
      %p87 = por %p85, %p86
      %p89 = scmp.ne.s32.totalorder %s72, %s88
      %p90 = scmp.eq.s32.totalorder %s17, 0
      %p91 = por %p89, %p90
      %p92 = scmp.le.s32.totalorder 1, %s11
      %p93 = scmp.lt.s32.totalorder %s11, 7
      %p94 = pnand %p92, %p93
      %p95 = pneg %p94
      // Predicated region
      $region9: #{_fused_propagate.1} parent=5 // pred_check
        _
      $region10: #{_fused_propagate.1} parent=5 // pred_check_branch
        %97 = sbr.rel (%p94) target = $region12
      $region11: #{_fused_propagate.1} parent=5 // pred_region
        %s98 = ssub.s32 %s11, 1
      $region12: #{_fused_propagate.1} parent=5 // pred_fallthru
        _
      %p99 = scmp.lt.s32.totalorder %s11, 6
      // Predicated region
      $region13: #{_fused_propagate.1} parent=5 // pred_check
        %p100 = pneg %p99
      $region14: #{_fused_propagate.1} parent=5 // pred_check_branch
        %102 = sbr.rel (%p100) target = $region16
      $region15: #{_fused_propagate.1} parent=5 // pred_region
        // Predicated region
        $region17: #{_fused_propagate.1} parent=15 // pred_check
          %p103 = pneg %p52
        $region18: #{_fused_propagate.1} parent=15 // pred_check_branch
          %105 = sbr.rel (%p103) target = $region20
        $region19: #{_fused_propagate.1} parent=15 // pred_region
          %s106 = sand.u32 %s42, 1
          %s107 = scalar_lea.sflag [#allocation7], %s106
          %s108 = sand.u32 %s42, 1
          %s109 = smul.addr %s108, 1024
          %s110 = scalar_lea.vmem [#allocation6], %s109
          %s111 = smul.u32 64, %s19
          %s112 = smul.u32 4, %s20
          %114 = vsyncadd %s107, 0
          %s115 = smul.addr %s111, 4
          %s116 = sadd.s32 %s112, %s115
          %s117 = smul.addr %s116, 4
          %s118 = scalar_lea.hbm %s0, %s117
          %s119 = sshll.u32 %s118, 4
          %s120 = int_to_ptr.hbm [resolvable:$true] %s119
          %s121 = sshll.u32 %s110, 4
          %s122 = int_to_ptr.vmem [resolvable:$true] %s121
          %127 = dma.hbm_to_vmem [thread:$0]  %s120, 16384, %s122, %s107, 256, 256, 16
        $region20: #{_fused_propagate.1} parent=15 // pred_fallthru
          _
      $region16: #{_fused_propagate.1} parent=5 // pred_fallthru
        _
      %p128 = scmp.le.s32.totalorder 1, %s11
      %p129 = scmp.lt.s32.totalorder %s11, 7
      %p130 = pnand %p128, %p129
      %p131 = pneg %p130
      // Predicated region
      $region21: #{_fused_propagate.1} parent=5 // pred_check
        _
      $region22: #{_fused_propagate.1} parent=5 // pred_check_branch
        %133 = sbr.rel (%p130) target = $region24
      $region23: #{_fused_propagate.1} parent=5 // pred_region
        %s134 = ssub.s32 %s11, 1
        %s135 = sand.u32 %s45, 1
        %s136 = scalar_lea.sflag [#allocation7], %s135
        %s137 = sand.u32 %s45, 1
        %s138 = smul.addr %s137, 1024
        %s139 = scalar_lea.vmem [#allocation6], %s138
        // Predicated region
        $region25: #{_fused_propagate.1} parent=23 // pred_check
          %p140 = pneg %p58
        $region26: #{_fused_propagate.1} parent=23 // pred_check_branch
          %142 = sbr.rel (%p140) target = $region28
        $region27: #{_fused_propagate.1} parent=23 // pred_region
          %144 = dma.done %s136, 16384
        $region28: #{_fused_propagate.1} parent=23 // pred_fallthru
          _
        %s145 = sand.u32 %s45, 1
        %s146 = scalar_lea.sflag [#allocation7], %s145
        %s147 = sand.u32 %s45, 1
        %s148 = smul.addr %s147, 1024
        %s149 = scalar_lea.vmem [#allocation6], %s148
        %p150 = pneg %p58
        %p151 = pneg %p55
        %p152 = pneg %p84
        %p153 = pneg %p81
        %s154 = smul.u32 64, %s22
        %p155 = scmp.lt.s32.totalorder %s154, 127
        %s156 = scalar_select %p155, %s154, 127
        %s157 = smul.addr %s156, 8
        %s158 = scalar_lea.vmem %s2, %s157
        %s159 = smul.u32 64, %s22
        %s160 = smul.u32 4, %s23
        %s161 = smul.u32 64, %s22
        %p162 = scmp.lt.s32.totalorder %s161, 127
        %s163 = scalar_select %p162, %s161, 127
        %s164 = smul.addr %s163, 8
        %s165 = scalar_lea.vmem %s2, %s164
        %s166 = smul.u32 64, %s22
        %p167 = scmp.eq.s32.totalorder %s21, 0
        %p168 = scmp.eq.s32.totalorder %s22, 0
        %p169 = pnand %p167, %p168
        %p170 = pneg %p169
        %p171 = scmp.eq.s32.totalorder %s23, 0
        %p172 = pnand %p170, %p171
        %p173 = pneg %p172
        // Predicated region
        $region29: #{_fused_propagate.1} parent=23 // pred_check
          _
        $region30: #{_fused_propagate.1} parent=23 // pred_check_branch
          %175 = sbr.rel (%p172) target = $region32
        $region31: #{_fused_propagate.1} parent=23 // pred_region
          // Predicated region
          $region33: #{_fused_propagate.1} parent=31 // pred_check
            _
          $region34: #{_fused_propagate.1} parent=31 // pred_check_branch
            %177 = sbr.rel (0) target = $region36
          $region35: #{_fused_propagate.1} parent=31 // pred_region
            loop: start=0, step=1, limit=1
            $region37: #{_fused_propagate.1} parent=35 // loop_pre_header
              _
            $region38: #{_fused_propagate.1} parent=35 // loop_header
              %s179 = sphi 0, %s183
              %p180 = scmp.ge.s32.totalorder %s179, 1
              %s184 = sphi %s1, %s1
              %s185 = sphi [#allocation2], [#allocation2]
            $region39: #{_fused_propagate.1} parent=35 // loop_header_branch
              %182 = sbr.rel (%p180) target = $region43
            $region40: #{_fused_propagate.1} parent=35 // loop_body
              %v186 = vld [vmem:[%s184] sm:$0xff]
              %187 = vst [vmem:[%s185] sm:$0xff] %v186
              %v188 = vld [vmem:[%s184 + $0x8] sm:$0xff]
              %189 = vst [vmem:[%s185 + $0x8] sm:$0xff] %v188
              %v190 = vld [vmem:[%s184 + $0x10] sm:$0xff]
              %191 = vst [vmem:[%s185 + $0x10] sm:$0xff] %v190
              %v192 = vld [vmem:[%s184 + $0x18] sm:$0xff]
              %193 = vst [vmem:[%s185 + $0x18] sm:$0xff] %v192
              %v194 = vld [vmem:[%s184 + $0x20] sm:$0xff]
              %195 = vst [vmem:[%s185 + $0x20] sm:$0xff] %v194
              %v196 = vld [vmem:[%s184 + $0x28] sm:$0xff]
              %197 = vst [vmem:[%s185 + $0x28] sm:$0xff] %v196
              %v198 = vld [vmem:[%s184 + $0x30] sm:$0xff]
              %199 = vst [vmem:[%s185 + $0x30] sm:$0xff] %v198
              %v200 = vld [vmem:[%s184 + $0x38] sm:$0xff]
              %201 = vst [vmem:[%s185 + $0x38] sm:$0xff] %v200
              %v202 = vld [vmem:[%s184 + $0x40] sm:$0xff]
              %203 = vst [vmem:[%s185 + $0x40] sm:$0xff] %v202
              %v204 = vld [vmem:[%s184 + $0x48] sm:$0xff]
              %205 = vst [vmem:[%s185 + $0x48] sm:$0xff] %v204
              %v206 = vld [vmem:[%s184 + $0x50] sm:$0xff]
              %207 = vst [vmem:[%s185 + $0x50] sm:$0xff] %v206
              %v208 = vld [vmem:[%s184 + $0x58] sm:$0xff]
              %209 = vst [vmem:[%s185 + $0x58] sm:$0xff] %v208
              %v210 = vld [vmem:[%s184 + $0x60] sm:$0xff]
              %211 = vst [vmem:[%s185 + $0x60] sm:$0xff] %v210
              %v212 = vld [vmem:[%s184 + $0x68] sm:$0xff]
              %213 = vst [vmem:[%s185 + $0x68] sm:$0xff] %v212
              %v214 = vld [vmem:[%s184 + $0x70] sm:$0xff]
              %215 = vst [vmem:[%s185 + $0x70] sm:$0xff] %v214
              %v216 = vld [vmem:[%s184 + $0x78] sm:$0xff]
              %217 = vst [vmem:[%s185 + $0x78] sm:$0xff] %v216
              %v218 = vld [vmem:[%s184 + $0x80] sm:$0xff]
              %219 = vst [vmem:[%s185 + $0x80] sm:$0xff] %v218
              %v220 = vld [vmem:[%s184 + $0x88] sm:$0xff]
              %221 = vst [vmem:[%s185 + $0x88] sm:$0xff] %v220
              %v222 = vld [vmem:[%s184 + $0x90] sm:$0xff]
              %223 = vst [vmem:[%s185 + $0x90] sm:$0xff] %v222
              %v224 = vld [vmem:[%s184 + $0x98] sm:$0xff]
              %225 = vst [vmem:[%s185 + $0x98] sm:$0xff] %v224
              %v226 = vld [vmem:[%s184 + $0xa0] sm:$0xff]
              %227 = vst [vmem:[%s185 + $0xa0] sm:$0xff] %v226
              %v228 = vld [vmem:[%s184 + $0xa8] sm:$0xff]
              %229 = vst [vmem:[%s185 + $0xa8] sm:$0xff] %v228
              %v230 = vld [vmem:[%s184 + $0xb0] sm:$0xff]
              %231 = vst [vmem:[%s185 + $0xb0] sm:$0xff] %v230
              %v232 = vld [vmem:[%s184 + $0xb8] sm:$0xff]
              %233 = vst [vmem:[%s185 + $0xb8] sm:$0xff] %v232
              %v234 = vld [vmem:[%s184 + $0xc0] sm:$0xff]
              %235 = vst [vmem:[%s185 + $0xc0] sm:$0xff] %v234
              %v236 = vld [vmem:[%s184 + $0xc8] sm:$0xff]
              %237 = vst [vmem:[%s185 + $0xc8] sm:$0xff] %v236
              %v238 = vld [vmem:[%s184 + $0xd0] sm:$0xff]
              %239 = vst [vmem:[%s185 + $0xd0] sm:$0xff] %v238
              %v240 = vld [vmem:[%s184 + $0xd8] sm:$0xff]
              %241 = vst [vmem:[%s185 + $0xd8] sm:$0xff] %v240
              %v242 = vld [vmem:[%s184 + $0xe0] sm:$0xff]
              %243 = vst [vmem:[%s185 + $0xe0] sm:$0xff] %v242
              %v244 = vld [vmem:[%s184 + $0xe8] sm:$0xff]
              %245 = vst [vmem:[%s185 + $0xe8] sm:$0xff] %v244
              %v246 = vld [vmem:[%s184 + $0xf0] sm:$0xff]
              %247 = vst [vmem:[%s185 + $0xf0] sm:$0xff] %v246
              %v248 = vld [vmem:[%s184 + $0xf8] sm:$0xff]
              %249 = vst [vmem:[%s185 + $0xf8] sm:$0xff] %v248
              %v250 = vld [vmem:[%s184 + $0x100] sm:$0xff]
              %251 = vst [vmem:[%s185 + $0x100] sm:$0xff] %v250
              %v252 = vld [vmem:[%s184 + $0x108] sm:$0xff]
              %253 = vst [vmem:[%s185 + $0x108] sm:$0xff] %v252
              %v254 = vld [vmem:[%s184 + $0x110] sm:$0xff]
              %255 = vst [vmem:[%s185 + $0x110] sm:$0xff] %v254
              %v256 = vld [vmem:[%s184 + $0x118] sm:$0xff]
              %257 = vst [vmem:[%s185 + $0x118] sm:$0xff] %v256
              %v258 = vld [vmem:[%s184 + $0x120] sm:$0xff]
              %259 = vst [vmem:[%s185 + $0x120] sm:$0xff] %v258
              %v260 = vld [vmem:[%s184 + $0x128] sm:$0xff]
              %261 = vst [vmem:[%s185 + $0x128] sm:$0xff] %v260
              %v262 = vld [vmem:[%s184 + $0x130] sm:$0xff]
              %263 = vst [vmem:[%s185 + $0x130] sm:$0xff] %v262
              %v264 = vld [vmem:[%s184 + $0x138] sm:$0xff]
              %265 = vst [vmem:[%s185 + $0x138] sm:$0xff] %v264
              %v266 = vld [vmem:[%s184 + $0x140] sm:$0xff]
              %267 = vst [vmem:[%s185 + $0x140] sm:$0xff] %v266
              %v268 = vld [vmem:[%s184 + $0x148] sm:$0xff]
              %269 = vst [vmem:[%s185 + $0x148] sm:$0xff] %v268
              %v270 = vld [vmem:[%s184 + $0x150] sm:$0xff]
              %271 = vst [vmem:[%s185 + $0x150] sm:$0xff] %v270
              %v272 = vld [vmem:[%s184 + $0x158] sm:$0xff]
              %273 = vst [vmem:[%s185 + $0x158] sm:$0xff] %v272
              %v274 = vld [vmem:[%s184 + $0x160] sm:$0xff]
              %275 = vst [vmem:[%s185 + $0x160] sm:$0xff] %v274
              %v276 = vld [vmem:[%s184 + $0x168] sm:$0xff]
              %277 = vst [vmem:[%s185 + $0x168] sm:$0xff] %v276
              %v278 = vld [vmem:[%s184 + $0x170] sm:$0xff]
              %279 = vst [vmem:[%s185 + $0x170] sm:$0xff] %v278
              %v280 = vld [vmem:[%s184 + $0x178] sm:$0xff]
              %281 = vst [vmem:[%s185 + $0x178] sm:$0xff] %v280
              %v282 = vld [vmem:[%s184 + $0x180] sm:$0xff]
              %283 = vst [vmem:[%s185 + $0x180] sm:$0xff] %v282
              %v284 = vld [vmem:[%s184 + $0x188] sm:$0xff]
              %285 = vst [vmem:[%s185 + $0x188] sm:$0xff] %v284
              %v286 = vld [vmem:[%s184 + $0x190] sm:$0xff]
              %287 = vst [vmem:[%s185 + $0x190] sm:$0xff] %v286
              %v288 = vld [vmem:[%s184 + $0x198] sm:$0xff]
              %289 = vst [vmem:[%s185 + $0x198] sm:$0xff] %v288
              %v290 = vld [vmem:[%s184 + $0x1a0] sm:$0xff]
              %291 = vst [vmem:[%s185 + $0x1a0] sm:$0xff] %v290
              %v292 = vld [vmem:[%s184 + $0x1a8] sm:$0xff]
              %293 = vst [vmem:[%s185 + $0x1a8] sm:$0xff] %v292
              %v294 = vld [vmem:[%s184 + $0x1b0] sm:$0xff]
              %295 = vst [vmem:[%s185 + $0x1b0] sm:$0xff] %v294
              %v296 = vld [vmem:[%s184 + $0x1b8] sm:$0xff]
              %297 = vst [vmem:[%s185 + $0x1b8] sm:$0xff] %v296
              %v298 = vld [vmem:[%s184 + $0x1c0] sm:$0xff]
              %299 = vst [vmem:[%s185 + $0x1c0] sm:$0xff] %v298
              %v300 = vld [vmem:[%s184 + $0x1c8] sm:$0xff]
              %301 = vst [vmem:[%s185 + $0x1c8] sm:$0xff] %v300
              %v302 = vld [vmem:[%s184 + $0x1d0] sm:$0xff]
              %303 = vst [vmem:[%s185 + $0x1d0] sm:$0xff] %v302
              %v304 = vld [vmem:[%s184 + $0x1d8] sm:$0xff]
              %305 = vst [vmem:[%s185 + $0x1d8] sm:$0xff] %v304
              %v306 = vld [vmem:[%s184 + $0x1e0] sm:$0xff]
              %307 = vst [vmem:[%s185 + $0x1e0] sm:$0xff] %v306
              %v308 = vld [vmem:[%s184 + $0x1e8] sm:$0xff]
              %309 = vst [vmem:[%s185 + $0x1e8] sm:$0xff] %v308
              %v310 = vld [vmem:[%s184 + $0x1f0] sm:$0xff]
              %311 = vst [vmem:[%s185 + $0x1f0] sm:$0xff] %v310
              %v312 = vld [vmem:[%s184 + $0x1f8] sm:$0xff]
              %313 = vst [vmem:[%s185 + $0x1f8] sm:$0xff] %v312
              %v314 = vld [vmem:[%s184 + $0x200] sm:$0xff]
              %315 = vst [vmem:[%s185 + $0x200] sm:$0xff] %v314
              %v316 = vld [vmem:[%s184 + $0x208] sm:$0xff]
              %317 = vst [vmem:[%s185 + $0x208] sm:$0xff] %v316
              %v318 = vld [vmem:[%s184 + $0x210] sm:$0xff]
              %319 = vst [vmem:[%s185 + $0x210] sm:$0xff] %v318
              %v320 = vld [vmem:[%s184 + $0x218] sm:$0xff]
              %321 = vst [vmem:[%s185 + $0x218] sm:$0xff] %v320
              %v322 = vld [vmem:[%s184 + $0x220] sm:$0xff]
              %323 = vst [vmem:[%s185 + $0x220] sm:$0xff] %v322
              %v324 = vld [vmem:[%s184 + $0x228] sm:$0xff]
              %325 = vst [vmem:[%s185 + $0x228] sm:$0xff] %v324
              %v326 = vld [vmem:[%s184 + $0x230] sm:$0xff]
              %327 = vst [vmem:[%s185 + $0x230] sm:$0xff] %v326
              %v328 = vld [vmem:[%s184 + $0x238] sm:$0xff]
              %329 = vst [vmem:[%s185 + $0x238] sm:$0xff] %v328
              %v330 = vld [vmem:[%s184 + $0x240] sm:$0xff]
              %331 = vst [vmem:[%s185 + $0x240] sm:$0xff] %v330
              %v332 = vld [vmem:[%s184 + $0x248] sm:$0xff]
              %333 = vst [vmem:[%s185 + $0x248] sm:$0xff] %v332
              %v334 = vld [vmem:[%s184 + $0x250] sm:$0xff]
              %335 = vst [vmem:[%s185 + $0x250] sm:$0xff] %v334
              %v336 = vld [vmem:[%s184 + $0x258] sm:$0xff]
              %337 = vst [vmem:[%s185 + $0x258] sm:$0xff] %v336
              %v338 = vld [vmem:[%s184 + $0x260] sm:$0xff]
              %339 = vst [vmem:[%s185 + $0x260] sm:$0xff] %v338
              %v340 = vld [vmem:[%s184 + $0x268] sm:$0xff]
              %341 = vst [vmem:[%s185 + $0x268] sm:$0xff] %v340
              %v342 = vld [vmem:[%s184 + $0x270] sm:$0xff]
              %343 = vst [vmem:[%s185 + $0x270] sm:$0xff] %v342
              %v344 = vld [vmem:[%s184 + $0x278] sm:$0xff]
              %345 = vst [vmem:[%s185 + $0x278] sm:$0xff] %v344
              %v346 = vld [vmem:[%s184 + $0x280] sm:$0xff]
              %347 = vst [vmem:[%s185 + $0x280] sm:$0xff] %v346
              %v348 = vld [vmem:[%s184 + $0x288] sm:$0xff]
              %349 = vst [vmem:[%s185 + $0x288] sm:$0xff] %v348
              %v350 = vld [vmem:[%s184 + $0x290] sm:$0xff]
              %351 = vst [vmem:[%s185 + $0x290] sm:$0xff] %v350
              %v352 = vld [vmem:[%s184 + $0x298] sm:$0xff]
              %353 = vst [vmem:[%s185 + $0x298] sm:$0xff] %v352
              %v354 = vld [vmem:[%s184 + $0x2a0] sm:$0xff]
              %355 = vst [vmem:[%s185 + $0x2a0] sm:$0xff] %v354
              %v356 = vld [vmem:[%s184 + $0x2a8] sm:$0xff]
              %357 = vst [vmem:[%s185 + $0x2a8] sm:$0xff] %v356
              %v358 = vld [vmem:[%s184 + $0x2b0] sm:$0xff]
              %359 = vst [vmem:[%s185 + $0x2b0] sm:$0xff] %v358
              %v360 = vld [vmem:[%s184 + $0x2b8] sm:$0xff]
              %361 = vst [vmem:[%s185 + $0x2b8] sm:$0xff] %v360
              %v362 = vld [vmem:[%s184 + $0x2c0] sm:$0xff]
              %363 = vst [vmem:[%s185 + $0x2c0] sm:$0xff] %v362
              %v364 = vld [vmem:[%s184 + $0x2c8] sm:$0xff]
              %365 = vst [vmem:[%s185 + $0x2c8] sm:$0xff] %v364
              %v366 = vld [vmem:[%s184 + $0x2d0] sm:$0xff]
              %367 = vst [vmem:[%s185 + $0x2d0] sm:$0xff] %v366
              %v368 = vld [vmem:[%s184 + $0x2d8] sm:$0xff]
              %369 = vst [vmem:[%s185 + $0x2d8] sm:$0xff] %v368
              %v370 = vld [vmem:[%s184 + $0x2e0] sm:$0xff]
              %371 = vst [vmem:[%s185 + $0x2e0] sm:$0xff] %v370
              %v372 = vld [vmem:[%s184 + $0x2e8] sm:$0xff]
              %373 = vst [vmem:[%s185 + $0x2e8] sm:$0xff] %v372
              %v374 = vld [vmem:[%s184 + $0x2f0] sm:$0xff]
              %375 = vst [vmem:[%s185 + $0x2f0] sm:$0xff] %v374
              %v376 = vld [vmem:[%s184 + $0x2f8] sm:$0xff]
              %377 = vst [vmem:[%s185 + $0x2f8] sm:$0xff] %v376
              %v378 = vld [vmem:[%s184 + $0x300] sm:$0xff]
              %379 = vst [vmem:[%s185 + $0x300] sm:$0xff] %v378
              %v380 = vld [vmem:[%s184 + $0x308] sm:$0xff]
              %381 = vst [vmem:[%s185 + $0x308] sm:$0xff] %v380
              %v382 = vld [vmem:[%s184 + $0x310] sm:$0xff]
              %383 = vst [vmem:[%s185 + $0x310] sm:$0xff] %v382
              %v384 = vld [vmem:[%s184 + $0x318] sm:$0xff]
              %385 = vst [vmem:[%s185 + $0x318] sm:$0xff] %v384
              %v386 = vld [vmem:[%s184 + $0x320] sm:$0xff]
              %387 = vst [vmem:[%s185 + $0x320] sm:$0xff] %v386
              %v388 = vld [vmem:[%s184 + $0x328] sm:$0xff]
              %389 = vst [vmem:[%s185 + $0x328] sm:$0xff] %v388
              %v390 = vld [vmem:[%s184 + $0x330] sm:$0xff]
              %391 = vst [vmem:[%s185 + $0x330] sm:$0xff] %v390
              %v392 = vld [vmem:[%s184 + $0x338] sm:$0xff]
              %393 = vst [vmem:[%s185 + $0x338] sm:$0xff] %v392
              %v394 = vld [vmem:[%s184 + $0x340] sm:$0xff]
              %395 = vst [vmem:[%s185 + $0x340] sm:$0xff] %v394
              %v396 = vld [vmem:[%s184 + $0x348] sm:$0xff]
              %397 = vst [vmem:[%s185 + $0x348] sm:$0xff] %v396
              %v398 = vld [vmem:[%s184 + $0x350] sm:$0xff]
              %399 = vst [vmem:[%s185 + $0x350] sm:$0xff] %v398
              %v400 = vld [vmem:[%s184 + $0x358] sm:$0xff]
              %401 = vst [vmem:[%s185 + $0x358] sm:$0xff] %v400
              %v402 = vld [vmem:[%s184 + $0x360] sm:$0xff]
              %403 = vst [vmem:[%s185 + $0x360] sm:$0xff] %v402
              %v404 = vld [vmem:[%s184 + $0x368] sm:$0xff]
              %405 = vst [vmem:[%s185 + $0x368] sm:$0xff] %v404
              %v406 = vld [vmem:[%s184 + $0x370] sm:$0xff]
              %407 = vst [vmem:[%s185 + $0x370] sm:$0xff] %v406
              %v408 = vld [vmem:[%s184 + $0x378] sm:$0xff]
              %409 = vst [vmem:[%s185 + $0x378] sm:$0xff] %v408
              %v410 = vld [vmem:[%s184 + $0x380] sm:$0xff]
              %411 = vst [vmem:[%s185 + $0x380] sm:$0xff] %v410
              %v412 = vld [vmem:[%s184 + $0x388] sm:$0xff]
              %413 = vst [vmem:[%s185 + $0x388] sm:$0xff] %v412
              %v414 = vld [vmem:[%s184 + $0x390] sm:$0xff]
              %415 = vst [vmem:[%s185 + $0x390] sm:$0xff] %v414
              %v416 = vld [vmem:[%s184 + $0x398] sm:$0xff]
              %417 = vst [vmem:[%s185 + $0x398] sm:$0xff] %v416
              %v418 = vld [vmem:[%s184 + $0x3a0] sm:$0xff]
              %419 = vst [vmem:[%s185 + $0x3a0] sm:$0xff] %v418
              %v420 = vld [vmem:[%s184 + $0x3a8] sm:$0xff]
              %421 = vst [vmem:[%s185 + $0x3a8] sm:$0xff] %v420
              %v422 = vld [vmem:[%s184 + $0x3b0] sm:$0xff]
              %423 = vst [vmem:[%s185 + $0x3b0] sm:$0xff] %v422
              %v424 = vld [vmem:[%s184 + $0x3b8] sm:$0xff]
              %425 = vst [vmem:[%s185 + $0x3b8] sm:$0xff] %v424
              %v426 = vld [vmem:[%s184 + $0x3c0] sm:$0xff]
              %427 = vst [vmem:[%s185 + $0x3c0] sm:$0xff] %v426
              %v428 = vld [vmem:[%s184 + $0x3c8] sm:$0xff]
              %429 = vst [vmem:[%s185 + $0x3c8] sm:$0xff] %v428
              %v430 = vld [vmem:[%s184 + $0x3d0] sm:$0xff]
              %431 = vst [vmem:[%s185 + $0x3d0] sm:$0xff] %v430
              %v432 = vld [vmem:[%s184 + $0x3d8] sm:$0xff]
              %433 = vst [vmem:[%s185 + $0x3d8] sm:$0xff] %v432
              %v434 = vld [vmem:[%s184 + $0x3e0] sm:$0xff]
              %435 = vst [vmem:[%s185 + $0x3e0] sm:$0xff] %v434
              %v436 = vld [vmem:[%s184 + $0x3e8] sm:$0xff]
              %437 = vst [vmem:[%s185 + $0x3e8] sm:$0xff] %v436
              %v438 = vld [vmem:[%s184 + $0x3f0] sm:$0xff]
              %439 = vst [vmem:[%s185 + $0x3f0] sm:$0xff] %v438
              %v440 = vld [vmem:[%s184 + $0x3f8] sm:$0xff]
              %441 = vst [vmem:[%s185 + $0x3f8] sm:$0xff] %v440
            $region41: #{_fused_propagate.1} parent=35 // loop_footer
              %s183 = sadd.s32 1, %s179
            $region42: #{_fused_propagate.1} parent=35 // loop_footer_branch
              %178 = sbr.rel target = $region38
            $region43: #{_fused_propagate.1} parent=35 // loop_exit
              _
          $region36: #{_fused_propagate.1} parent=31 // pred_fallthru
            _
          // Predicated region
          $region44: #{_fused_propagate.1} parent=31 // pred_check
            _
          $region45: #{_fused_propagate.1} parent=31 // pred_check_branch
            %443 = sbr.rel target = $region47
          $region46: #{_fused_propagate.1} parent=31 // pred_region
            _
          $region47: #{_fused_propagate.1} parent=31 // pred_fallthru
            _
          // Predicated region
          $region48: #{_fused_propagate.1} parent=31 // pred_check
            _
          $region49: #{_fused_propagate.1} parent=31 // pred_check_branch
            %446 = sbr.rel (0) target = $region51
          $region50: #{_fused_propagate.1} parent=31 // pred_region
            %447 = vsyncadd [#allocation5], 16384
          $region51: #{_fused_propagate.1} parent=31 // pred_fallthru
            _
          %s448 = smul.u32 1024, 1
          %s449 = sshll.u32 %s448, 4
          %450 = dma.done [#allocation5], %s449
        $region32: #{_fused_propagate.1} parent=23 // pred_fallthru
          _
        %p451 = scmp.lt.s32.totalorder %s22, 1
        %s452 = scalar_select %p451, 512, 0
        %p453 = scmp.lt.s32.totalorder %s21, 0
        %s454 = ssub.s32 0, %s21
        %s455 = scalar_select %p453, %s454, %s21
        %s456 = sand.u32 %s455, 1
        %s457 = ssub.s32 0, %s456
        %s458 = scalar_select %p453, %s457, %s456
        %p459 = scmp.ne.s32.totalorder %s458, 0
        %p460 = scmp.lt.s32.totalorder %s458, 0
        %p461 = pnand %p460, %p459
        %p462 = pneg %p461
        %s463 = sadd.s32 %s458, 2
        %s464 = scalar_select %p462, %s463, %s458
        %s465 = ssub.s32 1, %s464
        // Predicated region
        $region52: #{_fused_propagate.1} parent=23 // pred_check
          %p466 = pneg %p171
        $region53: #{_fused_propagate.1} parent=23 // pred_check_branch
          %468 = sbr.rel (%p466) target = $region55
        $region54: #{_fused_propagate.1} parent=23 // pred_region
          %vm469 = vcmask 523264
          %470 = vst.msk [vmem:[#allocation3] sm:$0xff] %vm469, 0.0
          %471 = vst.msk [vmem:[#allocation3 + $0x8] sm:$0xff] %vm469, 0.0
          %472 = vst.msk [vmem:[#allocation3 + $0x10] sm:$0xff] %vm469, 0.0
          %473 = vst.msk [vmem:[#allocation3 + $0x18] sm:$0xff] %vm469, 0.0
          %474 = vst.msk [vmem:[#allocation3 + $0x20] sm:$0xff] %vm469, 0.0
          %475 = vst.msk [vmem:[#allocation3 + $0x28] sm:$0xff] %vm469, 0.0
          %476 = vst.msk [vmem:[#allocation3 + $0x30] sm:$0xff] %vm469, 0.0
          %477 = vst.msk [vmem:[#allocation3 + $0x38] sm:$0xff] %vm469, 0.0
          %478 = vst.msk [vmem:[#allocation3 + $0x40] sm:$0xff] %vm469, 0.0
          %479 = vst.msk [vmem:[#allocation3 + $0x48] sm:$0xff] %vm469, 0.0
          %480 = vst.msk [vmem:[#allocation3 + $0x50] sm:$0xff] %vm469, 0.0
          %481 = vst.msk [vmem:[#allocation3 + $0x58] sm:$0xff] %vm469, 0.0
          %482 = vst.msk [vmem:[#allocation3 + $0x60] sm:$0xff] %vm469, 0.0
          %483 = vst.msk [vmem:[#allocation3 + $0x68] sm:$0xff] %vm469, 0.0
          %484 = vst.msk [vmem:[#allocation3 + $0x70] sm:$0xff] %vm469, 0.0
          %485 = vst.msk [vmem:[#allocation3 + $0x78] sm:$0xff] %vm469, 0.0
          %486 = vst.msk [vmem:[#allocation3 + $0x80] sm:$0xff] %vm469, 0.0
          %487 = vst.msk [vmem:[#allocation3 + $0x88] sm:$0xff] %vm469, 0.0
          %488 = vst.msk [vmem:[#allocation3 + $0x90] sm:$0xff] %vm469, 0.0
          %489 = vst.msk [vmem:[#allocation3 + $0x98] sm:$0xff] %vm469, 0.0
          %490 = vst.msk [vmem:[#allocation3 + $0xa0] sm:$0xff] %vm469, 0.0
          %491 = vst.msk [vmem:[#allocation3 + $0xa8] sm:$0xff] %vm469, 0.0
          %492 = vst.msk [vmem:[#allocation3 + $0xb0] sm:$0xff] %vm469, 0.0
          %493 = vst.msk [vmem:[#allocation3 + $0xb8] sm:$0xff] %vm469, 0.0
          %494 = vst.msk [vmem:[#allocation3 + $0xc0] sm:$0xff] %vm469, 0.0
          %495 = vst.msk [vmem:[#allocation3 + $0xc8] sm:$0xff] %vm469, 0.0
          %496 = vst.msk [vmem:[#allocation3 + $0xd0] sm:$0xff] %vm469, 0.0
          %497 = vst.msk [vmem:[#allocation3 + $0xd8] sm:$0xff] %vm469, 0.0
          %498 = vst.msk [vmem:[#allocation3 + $0xe0] sm:$0xff] %vm469, 0.0
          %499 = vst.msk [vmem:[#allocation3 + $0xe8] sm:$0xff] %vm469, 0.0
          %500 = vst.msk [vmem:[#allocation3 + $0xf0] sm:$0xff] %vm469, 0.0
          %501 = vst.msk [vmem:[#allocation3 + $0xf8] sm:$0xff] %vm469, 0.0
          %502 = vst.msk [vmem:[#allocation3 + $0x100] sm:$0xff] %vm469, 0.0
          %503 = vst.msk [vmem:[#allocation3 + $0x108] sm:$0xff] %vm469, 0.0
          %504 = vst.msk [vmem:[#allocation3 + $0x110] sm:$0xff] %vm469, 0.0
          %505 = vst.msk [vmem:[#allocation3 + $0x118] sm:$0xff] %vm469, 0.0
          %506 = vst.msk [vmem:[#allocation3 + $0x120] sm:$0xff] %vm469, 0.0
          %507 = vst.msk [vmem:[#allocation3 + $0x128] sm:$0xff] %vm469, 0.0
          %508 = vst.msk [vmem:[#allocation3 + $0x130] sm:$0xff] %vm469, 0.0
          %509 = vst.msk [vmem:[#allocation3 + $0x138] sm:$0xff] %vm469, 0.0
          %510 = vst.msk [vmem:[#allocation3 + $0x140] sm:$0xff] %vm469, 0.0
          %511 = vst.msk [vmem:[#allocation3 + $0x148] sm:$0xff] %vm469, 0.0
          %512 = vst.msk [vmem:[#allocation3 + $0x150] sm:$0xff] %vm469, 0.0
          %513 = vst.msk [vmem:[#allocation3 + $0x158] sm:$0xff] %vm469, 0.0
          %514 = vst.msk [vmem:[#allocation3 + $0x160] sm:$0xff] %vm469, 0.0
          %515 = vst.msk [vmem:[#allocation3 + $0x168] sm:$0xff] %vm469, 0.0
          %516 = vst.msk [vmem:[#allocation3 + $0x170] sm:$0xff] %vm469, 0.0
          %517 = vst.msk [vmem:[#allocation3 + $0x178] sm:$0xff] %vm469, 0.0
          %518 = vst.msk [vmem:[#allocation3 + $0x180] sm:$0xff] %vm469, 0.0
          %519 = vst.msk [vmem:[#allocation3 + $0x188] sm:$0xff] %vm469, 0.0
          %520 = vst.msk [vmem:[#allocation3 + $0x190] sm:$0xff] %vm469, 0.0
          %521 = vst.msk [vmem:[#allocation3 + $0x198] sm:$0xff] %vm469, 0.0
          %522 = vst.msk [vmem:[#allocation3 + $0x1a0] sm:$0xff] %vm469, 0.0
          %523 = vst.msk [vmem:[#allocation3 + $0x1a8] sm:$0xff] %vm469, 0.0
          %524 = vst.msk [vmem:[#allocation3 + $0x1b0] sm:$0xff] %vm469, 0.0
          %525 = vst.msk [vmem:[#allocation3 + $0x1b8] sm:$0xff] %vm469, 0.0
          %526 = vst.msk [vmem:[#allocation3 + $0x1c0] sm:$0xff] %vm469, 0.0
          %527 = vst.msk [vmem:[#allocation3 + $0x1c8] sm:$0xff] %vm469, 0.0
          %528 = vst.msk [vmem:[#allocation3 + $0x1d0] sm:$0xff] %vm469, 0.0
          %529 = vst.msk [vmem:[#allocation3 + $0x1d8] sm:$0xff] %vm469, 0.0
          %530 = vst.msk [vmem:[#allocation3 + $0x1e0] sm:$0xff] %vm469, 0.0
          %531 = vst.msk [vmem:[#allocation3 + $0x1e8] sm:$0xff] %vm469, 0.0
          %532 = vst.msk [vmem:[#allocation3 + $0x1f0] sm:$0xff] %vm469, 0.0
          %533 = vst.msk [vmem:[#allocation3 + $0x1f8] sm:$0xff] %vm469, 0.0
        $region55: #{_fused_propagate.1} parent=23 // pred_fallthru
          _
        %p534 = scmp.lt.s32.totalorder %s23, 1
        // Predicated region
        $region56: #{_fused_propagate.1} parent=23 // pred_check
          %p535 = pneg %p534
        $region57: #{_fused_propagate.1} parent=23 // pred_check_branch
          %537 = sbr.rel (%p535) target = $region59
        $region58: #{_fused_propagate.1} parent=23 // pred_region
          %s538 = smul.u32 %s464, 1024
          %s539 = sadd.s32 %s538, %s452
          %s540 = smul.u32 %s23, 512
          %s541 = sadd.s32 %s539, %s540
          %v542 = vld [vmem:[#allocation3] sm:$0xff]
          %v543 = vld [vmem:[#allocation3 + $0x8] sm:$0xff]
          %v544 = vld [vmem:[#allocation3 + $0x10] sm:$0xff]
          %v545 = vld [vmem:[#allocation3 + $0x18] sm:$0xff]
          %v546 = vld [vmem:[#allocation3 + $0x20] sm:$0xff]
          %v547 = vld [vmem:[#allocation3 + $0x28] sm:$0xff]
          %v548 = vld [vmem:[#allocation3 + $0x30] sm:$0xff]
          %v549 = vld [vmem:[#allocation3 + $0x38] sm:$0xff]
          %v550 = vld [vmem:[#allocation3 + $0x40] sm:$0xff]
          %v551 = vld [vmem:[#allocation3 + $0x48] sm:$0xff]
          %v552 = vld [vmem:[#allocation3 + $0x50] sm:$0xff]
          %v553 = vld [vmem:[#allocation3 + $0x58] sm:$0xff]
          %v554 = vld [vmem:[#allocation3 + $0x60] sm:$0xff]
          %v555 = vld [vmem:[#allocation3 + $0x68] sm:$0xff]
          %v556 = vld [vmem:[#allocation3 + $0x70] sm:$0xff]
          %v557 = vld [vmem:[#allocation3 + $0x78] sm:$0xff]
          %v558 = vld [vmem:[#allocation3 + $0x80] sm:$0xff]
          %v559 = vld [vmem:[#allocation3 + $0x88] sm:$0xff]
          %v560 = vld [vmem:[#allocation3 + $0x90] sm:$0xff]
          %v561 = vld [vmem:[#allocation3 + $0x98] sm:$0xff]
          %v562 = vld [vmem:[#allocation3 + $0xa0] sm:$0xff]
          %v563 = vld [vmem:[#allocation3 + $0xa8] sm:$0xff]
          %v564 = vld [vmem:[#allocation3 + $0xb0] sm:$0xff]
          %v565 = vld [vmem:[#allocation3 + $0xb8] sm:$0xff]
          %v566 = vld [vmem:[#allocation3 + $0xc0] sm:$0xff]
          %v567 = vld [vmem:[#allocation3 + $0xc8] sm:$0xff]
          %v568 = vld [vmem:[#allocation3 + $0xd0] sm:$0xff]
          %v569 = vld [vmem:[#allocation3 + $0xd8] sm:$0xff]
          %v570 = vld [vmem:[#allocation3 + $0xe0] sm:$0xff]
          %v571 = vld [vmem:[#allocation3 + $0xe8] sm:$0xff]
          %v572 = vld [vmem:[#allocation3 + $0xf0] sm:$0xff]
          %v573 = vld [vmem:[#allocation3 + $0xf8] sm:$0xff]
          %v574 = vld [vmem:[#allocation3 + $0x100] sm:$0xff]
          %v575 = vld [vmem:[#allocation3 + $0x108] sm:$0xff]
          %v576 = vld [vmem:[#allocation3 + $0x110] sm:$0xff]
          %v577 = vld [vmem:[#allocation3 + $0x118] sm:$0xff]
          %v578 = vld [vmem:[#allocation3 + $0x120] sm:$0xff]
          %v579 = vld [vmem:[#allocation3 + $0x128] sm:$0xff]
          %v580 = vld [vmem:[#allocation3 + $0x130] sm:$0xff]
          %v581 = vld [vmem:[#allocation3 + $0x138] sm:$0xff]
          %v582 = vld [vmem:[#allocation3 + $0x140] sm:$0xff]
          %v583 = vld [vmem:[#allocation3 + $0x148] sm:$0xff]
          %v584 = vld [vmem:[#allocation3 + $0x150] sm:$0xff]
          %v585 = vld [vmem:[#allocation3 + $0x158] sm:$0xff]
          %v586 = vld [vmem:[#allocation3 + $0x160] sm:$0xff]
          %v587 = vld [vmem:[#allocation3 + $0x168] sm:$0xff]
          %v588 = vld [vmem:[#allocation3 + $0x170] sm:$0xff]
          %v589 = vld [vmem:[#allocation3 + $0x178] sm:$0xff]
          %v590 = vld [vmem:[#allocation3 + $0x180] sm:$0xff]
          %v591 = vld [vmem:[#allocation3 + $0x188] sm:$0xff]
          %v592 = vld [vmem:[#allocation3 + $0x190] sm:$0xff]
          %v593 = vld [vmem:[#allocation3 + $0x198] sm:$0xff]
          %v594 = vld [vmem:[#allocation3 + $0x1a0] sm:$0xff]
          %v595 = vld [vmem:[#allocation3 + $0x1a8] sm:$0xff]
          %v596 = vld [vmem:[#allocation3 + $0x1b0] sm:$0xff]
          %v597 = vld [vmem:[#allocation3 + $0x1b8] sm:$0xff]
          %v598 = vld [vmem:[#allocation3 + $0x1c0] sm:$0xff]
          %v599 = vld [vmem:[#allocation3 + $0x1c8] sm:$0xff]
          %v600 = vld [vmem:[#allocation3 + $0x1d0] sm:$0xff]
          %v601 = vld [vmem:[#allocation3 + $0x1d8] sm:$0xff]
          %v602 = vld [vmem:[#allocation3 + $0x1e0] sm:$0xff]
          %v603 = vld [vmem:[#allocation3 + $0x1e8] sm:$0xff]
          %v604 = vld [vmem:[#allocation3 + $0x1f0] sm:$0xff]
          %v605 = vld [vmem:[#allocation3 + $0x1f8] sm:$0xff]
          %v606 = vld [vmem:[%s139] sm:$0xff]
          %v607 = vld [vmem:[%s139 + $0x8] sm:$0xff]
          %v608 = vld [vmem:[%s139 + $0x10] sm:$0xff]
          %v609 = vld [vmem:[%s139 + $0x18] sm:$0xff]
          %v610 = vld [vmem:[%s139 + $0x20] sm:$0xff]
          %v611 = vld [vmem:[%s139 + $0x28] sm:$0xff]
          %v612 = vld [vmem:[%s139 + $0x30] sm:$0xff]
          %v613 = vld [vmem:[%s139 + $0x38] sm:$0xff]
          %v614 = vld [vmem:[%s139 + $0x40] sm:$0xff]
          %v615 = vld [vmem:[%s139 + $0x48] sm:$0xff]
          %v616 = vld [vmem:[%s139 + $0x50] sm:$0xff]
          %v617 = vld [vmem:[%s139 + $0x58] sm:$0xff]
          %v618 = vld [vmem:[%s139 + $0x60] sm:$0xff]
          %v619 = vld [vmem:[%s139 + $0x68] sm:$0xff]
          %v620 = vld [vmem:[%s139 + $0x70] sm:$0xff]
          %v621 = vld [vmem:[%s139 + $0x78] sm:$0xff]
          %v622 = vld [vmem:[%s139 + $0x80] sm:$0xff]
          %v623 = vld [vmem:[%s139 + $0x88] sm:$0xff]
          %v624 = vld [vmem:[%s139 + $0x90] sm:$0xff]
          %v625 = vld [vmem:[%s139 + $0x98] sm:$0xff]
          %v626 = vld [vmem:[%s139 + $0xa0] sm:$0xff]
          %v627 = vld [vmem:[%s139 + $0xa8] sm:$0xff]
          %v628 = vld [vmem:[%s139 + $0xb0] sm:$0xff]
          %v629 = vld [vmem:[%s139 + $0xb8] sm:$0xff]
          %v630 = vld [vmem:[%s139 + $0xc0] sm:$0xff]
          %v631 = vld [vmem:[%s139 + $0xc8] sm:$0xff]
          %v632 = vld [vmem:[%s139 + $0xd0] sm:$0xff]
          %v633 = vld [vmem:[%s139 + $0xd8] sm:$0xff]
          %v634 = vld [vmem:[%s139 + $0xe0] sm:$0xff]
          %v635 = vld [vmem:[%s139 + $0xe8] sm:$0xff]
          %v636 = vld [vmem:[%s139 + $0xf0] sm:$0xff]
          %v637 = vld [vmem:[%s139 + $0xf8] sm:$0xff]
          %v638 = vld [vmem:[%s139 + $0x100] sm:$0xff]
          %v639 = vld [vmem:[%s139 + $0x108] sm:$0xff]
          %v640 = vld [vmem:[%s139 + $0x110] sm:$0xff]
          %v641 = vld [vmem:[%s139 + $0x118] sm:$0xff]
          %v642 = vld [vmem:[%s139 + $0x120] sm:$0xff]
          %v643 = vld [vmem:[%s139 + $0x128] sm:$0xff]
          %v644 = vld [vmem:[%s139 + $0x130] sm:$0xff]
          %v645 = vld [vmem:[%s139 + $0x138] sm:$0xff]
          %v646 = vld [vmem:[%s139 + $0x140] sm:$0xff]
          %v647 = vld [vmem:[%s139 + $0x148] sm:$0xff]
          %v648 = vld [vmem:[%s139 + $0x150] sm:$0xff]
          %v649 = vld [vmem:[%s139 + $0x158] sm:$0xff]
          %v650 = vld [vmem:[%s139 + $0x160] sm:$0xff]
          %v651 = vld [vmem:[%s139 + $0x168] sm:$0xff]
          %v652 = vld [vmem:[%s139 + $0x170] sm:$0xff]
          %v653 = vld [vmem:[%s139 + $0x178] sm:$0xff]
          %v654 = vld [vmem:[%s139 + $0x180] sm:$0xff]
          %v655 = vld [vmem:[%s139 + $0x188] sm:$0xff]
          %v656 = vld [vmem:[%s139 + $0x190] sm:$0xff]
          %v657 = vld [vmem:[%s139 + $0x198] sm:$0xff]
          %v658 = vld [vmem:[%s139 + $0x1a0] sm:$0xff]
          %v659 = vld [vmem:[%s139 + $0x1a8] sm:$0xff]
          %v660 = vld [vmem:[%s139 + $0x1b0] sm:$0xff]
          %v661 = vld [vmem:[%s139 + $0x1b8] sm:$0xff]
          %v662 = vld [vmem:[%s139 + $0x1c0] sm:$0xff]
          %v663 = vld [vmem:[%s139 + $0x1c8] sm:$0xff]
          %v664 = vld [vmem:[%s139 + $0x1d0] sm:$0xff]
          %v665 = vld [vmem:[%s139 + $0x1d8] sm:$0xff]
          %v666 = vld [vmem:[%s139 + $0x1e0] sm:$0xff]
          %v667 = vld [vmem:[%s139 + $0x1e8] sm:$0xff]
          %v668 = vld [vmem:[%s139 + $0x1f0] sm:$0xff]
          %v669 = vld [vmem:[%s139 + $0x1f8] sm:$0xff]
          %v670 = vld [vmem:[%s139 + $0x200] sm:$0xff]
          %v671 = vld [vmem:[%s139 + $0x208] sm:$0xff]
          %v672 = vld [vmem:[%s139 + $0x210] sm:$0xff]
          %v673 = vld [vmem:[%s139 + $0x218] sm:$0xff]
          %v674 = vld [vmem:[%s139 + $0x220] sm:$0xff]
          %v675 = vld [vmem:[%s139 + $0x228] sm:$0xff]
          %v676 = vld [vmem:[%s139 + $0x230] sm:$0xff]
          %v677 = vld [vmem:[%s139 + $0x238] sm:$0xff]
          %v678 = vld [vmem:[%s139 + $0x240] sm:$0xff]
          %v679 = vld [vmem:[%s139 + $0x248] sm:$0xff]
          %v680 = vld [vmem:[%s139 + $0x250] sm:$0xff]
          %v681 = vld [vmem:[%s139 + $0x258] sm:$0xff]
          %v682 = vld [vmem:[%s139 + $0x260] sm:$0xff]
          %v683 = vld [vmem:[%s139 + $0x268] sm:$0xff]
          %v684 = vld [vmem:[%s139 + $0x270] sm:$0xff]
          %v685 = vld [vmem:[%s139 + $0x278] sm:$0xff]
          %v686 = vld [vmem:[%s139 + $0x280] sm:$0xff]
          %v687 = vld [vmem:[%s139 + $0x288] sm:$0xff]
          %v688 = vld [vmem:[%s139 + $0x290] sm:$0xff]
          %v689 = vld [vmem:[%s139 + $0x298] sm:$0xff]
          %v690 = vld [vmem:[%s139 + $0x2a0] sm:$0xff]
          %v691 = vld [vmem:[%s139 + $0x2a8] sm:$0xff]
          %v692 = vld [vmem:[%s139 + $0x2b0] sm:$0xff]
          %v693 = vld [vmem:[%s139 + $0x2b8] sm:$0xff]
          %v694 = vld [vmem:[%s139 + $0x2c0] sm:$0xff]
          %v695 = vld [vmem:[%s139 + $0x2c8] sm:$0xff]
          %v696 = vld [vmem:[%s139 + $0x2d0] sm:$0xff]
          %v697 = vld [vmem:[%s139 + $0x2d8] sm:$0xff]
          %v698 = vld [vmem:[%s139 + $0x2e0] sm:$0xff]
          %v699 = vld [vmem:[%s139 + $0x2e8] sm:$0xff]
          %v700 = vld [vmem:[%s139 + $0x2f0] sm:$0xff]
          %v701 = vld [vmem:[%s139 + $0x2f8] sm:$0xff]
          %v702 = vld [vmem:[%s139 + $0x300] sm:$0xff]
          %v703 = vld [vmem:[%s139 + $0x308] sm:$0xff]
          %v704 = vld [vmem:[%s139 + $0x310] sm:$0xff]
          %v705 = vld [vmem:[%s139 + $0x318] sm:$0xff]
          %v706 = vld [vmem:[%s139 + $0x320] sm:$0xff]
          %v707 = vld [vmem:[%s139 + $0x328] sm:$0xff]
          %v708 = vld [vmem:[%s139 + $0x330] sm:$0xff]
          %v709 = vld [vmem:[%s139 + $0x338] sm:$0xff]
          %v710 = vld [vmem:[%s139 + $0x340] sm:$0xff]
          %v711 = vld [vmem:[%s139 + $0x348] sm:$0xff]
          %v712 = vld [vmem:[%s139 + $0x350] sm:$0xff]
          %v713 = vld [vmem:[%s139 + $0x358] sm:$0xff]
          %v714 = vld [vmem:[%s139 + $0x360] sm:$0xff]
          %v715 = vld [vmem:[%s139 + $0x368] sm:$0xff]
          %v716 = vld [vmem:[%s139 + $0x370] sm:$0xff]
          %v717 = vld [vmem:[%s139 + $0x378] sm:$0xff]
          %v718 = vld [vmem:[%s139 + $0x380] sm:$0xff]
          %v719 = vld [vmem:[%s139 + $0x388] sm:$0xff]
          %v720 = vld [vmem:[%s139 + $0x390] sm:$0xff]
          %v721 = vld [vmem:[%s139 + $0x398] sm:$0xff]
          %v722 = vld [vmem:[%s139 + $0x3a0] sm:$0xff]
          %v723 = vld [vmem:[%s139 + $0x3a8] sm:$0xff]
          %v724 = vld [vmem:[%s139 + $0x3b0] sm:$0xff]
          %v725 = vld [vmem:[%s139 + $0x3b8] sm:$0xff]
          %v726 = vld [vmem:[%s139 + $0x3c0] sm:$0xff]
          %v727 = vld [vmem:[%s139 + $0x3c8] sm:$0xff]
          %v728 = vld [vmem:[%s139 + $0x3d0] sm:$0xff]
          %v729 = vld [vmem:[%s139 + $0x3d8] sm:$0xff]
          %v730 = vld [vmem:[%s139 + $0x3e0] sm:$0xff]
          %v731 = vld [vmem:[%s139 + $0x3e8] sm:$0xff]
          %v732 = vld [vmem:[%s139 + $0x3f0] sm:$0xff]
          %v733 = vld [vmem:[%s139 + $0x3f8] sm:$0xff]
          %s734 = scalar_lea.vmem [#allocation2], %s541
          %v735 = vld [vmem:[%s734] sm:$0xff]
          %v736 = vld [vmem:[%s734 + $0x8] sm:$0xff]
          %v737 = vld [vmem:[%s734 + $0x10] sm:$0xff]
          %v738 = vld [vmem:[%s734 + $0x18] sm:$0xff]
          %v739 = vld [vmem:[%s734 + $0x20] sm:$0xff]
          %v740 = vld [vmem:[%s734 + $0x28] sm:$0xff]
          %v741 = vld [vmem:[%s734 + $0x30] sm:$0xff]
          %v742 = vld [vmem:[%s734 + $0x38] sm:$0xff]
          %v743 = vld [vmem:[%s734 + $0x40] sm:$0xff]
          %v744 = vld [vmem:[%s734 + $0x48] sm:$0xff]
          %v745 = vld [vmem:[%s734 + $0x50] sm:$0xff]
          %v746 = vld [vmem:[%s734 + $0x58] sm:$0xff]
          %v747 = vld [vmem:[%s734 + $0x60] sm:$0xff]
          %v748 = vld [vmem:[%s734 + $0x68] sm:$0xff]
          %v749 = vld [vmem:[%s734 + $0x70] sm:$0xff]
          %v750 = vld [vmem:[%s734 + $0x78] sm:$0xff]
          %v751 = vld [vmem:[%s734 + $0x80] sm:$0xff]
          %v752 = vld [vmem:[%s734 + $0x88] sm:$0xff]
          %v753 = vld [vmem:[%s734 + $0x90] sm:$0xff]
          %v754 = vld [vmem:[%s734 + $0x98] sm:$0xff]
          %v755 = vld [vmem:[%s734 + $0xa0] sm:$0xff]
          %v756 = vld [vmem:[%s734 + $0xa8] sm:$0xff]
          %v757 = vld [vmem:[%s734 + $0xb0] sm:$0xff]
          %v758 = vld [vmem:[%s734 + $0xb8] sm:$0xff]
          %v759 = vld [vmem:[%s734 + $0xc0] sm:$0xff]
          %v760 = vld [vmem:[%s734 + $0xc8] sm:$0xff]
          %v761 = vld [vmem:[%s734 + $0xd0] sm:$0xff]
          %v762 = vld [vmem:[%s734 + $0xd8] sm:$0xff]
          %v763 = vld [vmem:[%s734 + $0xe0] sm:$0xff]
          %v764 = vld [vmem:[%s734 + $0xe8] sm:$0xff]
          %v765 = vld [vmem:[%s734 + $0xf0] sm:$0xff]
          %v766 = vld [vmem:[%s734 + $0xf8] sm:$0xff]
          %v767 = vld [vmem:[%s734 + $0x100] sm:$0xff]
          %v768 = vld [vmem:[%s734 + $0x108] sm:$0xff]
          %v769 = vld [vmem:[%s734 + $0x110] sm:$0xff]
          %v770 = vld [vmem:[%s734 + $0x118] sm:$0xff]
          %v771 = vld [vmem:[%s734 + $0x120] sm:$0xff]
          %v772 = vld [vmem:[%s734 + $0x128] sm:$0xff]
          %v773 = vld [vmem:[%s734 + $0x130] sm:$0xff]
          %v774 = vld [vmem:[%s734 + $0x138] sm:$0xff]
          %v775 = vld [vmem:[%s734 + $0x140] sm:$0xff]
          %v776 = vld [vmem:[%s734 + $0x148] sm:$0xff]
          %v777 = vld [vmem:[%s734 + $0x150] sm:$0xff]
          %v778 = vld [vmem:[%s734 + $0x158] sm:$0xff]
          %v779 = vld [vmem:[%s734 + $0x160] sm:$0xff]
          %v780 = vld [vmem:[%s734 + $0x168] sm:$0xff]
          %v781 = vld [vmem:[%s734 + $0x170] sm:$0xff]
          %v782 = vld [vmem:[%s734 + $0x178] sm:$0xff]
          %v783 = vld [vmem:[%s734 + $0x180] sm:$0xff]
          %v784 = vld [vmem:[%s734 + $0x188] sm:$0xff]
          %v785 = vld [vmem:[%s734 + $0x190] sm:$0xff]
          %v786 = vld [vmem:[%s734 + $0x198] sm:$0xff]
          %v787 = vld [vmem:[%s734 + $0x1a0] sm:$0xff]
          %v788 = vld [vmem:[%s734 + $0x1a8] sm:$0xff]
          %v789 = vld [vmem:[%s734 + $0x1b0] sm:$0xff]
          %v790 = vld [vmem:[%s734 + $0x1b8] sm:$0xff]
          %v791 = vld [vmem:[%s734 + $0x1c0] sm:$0xff]
          %v792 = vld [vmem:[%s734 + $0x1c8] sm:$0xff]
          %v793 = vld [vmem:[%s734 + $0x1d0] sm:$0xff]
          %v794 = vld [vmem:[%s734 + $0x1d8] sm:$0xff]
          %v795 = vld [vmem:[%s734 + $0x1e0] sm:$0xff]
          %v796 = vld [vmem:[%s734 + $0x1e8] sm:$0xff]
          %v797 = vld [vmem:[%s734 + $0x1f0] sm:$0xff]
          %v798 = vld [vmem:[%s734 + $0x1f8] sm:$0xff]
          %v799 = vpack.c.bf16 %v736, %v735
          %v800 = vpack.c.bf16 %v738, %v737
          %v801 = vpack.c.bf16 %v740, %v739
          %v802 = vpack.c.bf16 %v742, %v741
          %v803 = vpack.c.bf16 %v744, %v743
          %v804 = vpack.c.bf16 %v746, %v745
          %v805 = vpack.c.bf16 %v748, %v747
          %v806 = vpack.c.bf16 %v750, %v749
          %v807 = vpack.c.bf16 %v752, %v751
          %v808 = vpack.c.bf16 %v754, %v753
          %v809 = vpack.c.bf16 %v756, %v755
          %v810 = vpack.c.bf16 %v758, %v757
          %v811 = vpack.c.bf16 %v760, %v759
          %v812 = vpack.c.bf16 %v762, %v761
          %v813 = vpack.c.bf16 %v764, %v763
          %v814 = vpack.c.bf16 %v766, %v765
          %v815 = vpack.c.bf16 %v768, %v767
          %v816 = vpack.c.bf16 %v770, %v769
          %v817 = vpack.c.bf16 %v772, %v771
          %v818 = vpack.c.bf16 %v774, %v773
          %v819 = vpack.c.bf16 %v776, %v775
          %v820 = vpack.c.bf16 %v778, %v777
          %v821 = vpack.c.bf16 %v780, %v779
          %v822 = vpack.c.bf16 %v782, %v781
          %v823 = vpack.c.bf16 %v784, %v783
          %v824 = vpack.c.bf16 %v786, %v785
          %v825 = vpack.c.bf16 %v788, %v787
          %v826 = vpack.c.bf16 %v790, %v789
          %v827 = vpack.c.bf16 %v792, %v791
          %v828 = vpack.c.bf16 %v794, %v793
          %v829 = vpack.c.bf16 %v796, %v795
          %v830 = vpack.c.bf16 %v798, %v797
          %v959 = vunpack.c.l.b16 %v606
          %v960 = vunpack.c.h.b16 %v606
          %v961 = vunpack.c.l.b16 %v607
          %v962 = vunpack.c.h.b16 %v607
          %v963 = vunpack.c.l.b16 %v608
          %v964 = vunpack.c.h.b16 %v608
          %v965 = vunpack.c.l.b16 %v609
          %v966 = vunpack.c.h.b16 %v609
          %v967 = vunpack.c.l.b16 %v610
          %v968 = vunpack.c.h.b16 %v610
          %v969 = vunpack.c.l.b16 %v611
          %v970 = vunpack.c.h.b16 %v611
          %v971 = vunpack.c.l.b16 %v612
          %v972 = vunpack.c.h.b16 %v612
          %v973 = vunpack.c.l.b16 %v613
          %v974 = vunpack.c.h.b16 %v613
          %v975 = vunpack.c.l.b16 %v614
          %v976 = vunpack.c.h.b16 %v614
          %v977 = vunpack.c.l.b16 %v615
          %v978 = vunpack.c.h.b16 %v615
          %v979 = vunpack.c.l.b16 %v616
          %v980 = vunpack.c.h.b16 %v616
          %v981 = vunpack.c.l.b16 %v617
          %v982 = vunpack.c.h.b16 %v617
          %v983 = vunpack.c.l.b16 %v618
          %v984 = vunpack.c.h.b16 %v618
          %v985 = vunpack.c.l.b16 %v619
          %v986 = vunpack.c.h.b16 %v619
          %v987 = vunpack.c.l.b16 %v620
          %v988 = vunpack.c.h.b16 %v620
          %v989 = vunpack.c.l.b16 %v621
          %v990 = vunpack.c.h.b16 %v621
          %v991 = vunpack.c.l.b16 %v622
          %v992 = vunpack.c.h.b16 %v622
          %v993 = vunpack.c.l.b16 %v623
          %v994 = vunpack.c.h.b16 %v623
          %v995 = vunpack.c.l.b16 %v624
          %v996 = vunpack.c.h.b16 %v624
          %v997 = vunpack.c.l.b16 %v625
          %v998 = vunpack.c.h.b16 %v625
          %v999 = vunpack.c.l.b16 %v626
          %v1000 = vunpack.c.h.b16 %v626
          %v1001 = vunpack.c.l.b16 %v627
          %v1002 = vunpack.c.h.b16 %v627
          %v1003 = vunpack.c.l.b16 %v628
          %v1004 = vunpack.c.h.b16 %v628
          %v1005 = vunpack.c.l.b16 %v629
          %v1006 = vunpack.c.h.b16 %v629
          %v1007 = vunpack.c.l.b16 %v630
          %v1008 = vunpack.c.h.b16 %v630
          %v1009 = vunpack.c.l.b16 %v631
          %v1010 = vunpack.c.h.b16 %v631
          %v1011 = vunpack.c.l.b16 %v632
          %v1012 = vunpack.c.h.b16 %v632
          %v1013 = vunpack.c.l.b16 %v633
          %v1014 = vunpack.c.h.b16 %v633
          %v1015 = vunpack.c.l.b16 %v634
          %v1016 = vunpack.c.h.b16 %v634
          %v1017 = vunpack.c.l.b16 %v635
          %v1018 = vunpack.c.h.b16 %v635
          %v1019 = vunpack.c.l.b16 %v636
          %v1020 = vunpack.c.h.b16 %v636
          %v1021 = vunpack.c.l.b16 %v637
          %v1022 = vunpack.c.h.b16 %v637
          %v1023 = vunpack.c.l.b16 %v638
          %v1024 = vunpack.c.h.b16 %v638
          %v1025 = vunpack.c.l.b16 %v639
          %v1026 = vunpack.c.h.b16 %v639
          %v1027 = vunpack.c.l.b16 %v640
          %v1028 = vunpack.c.h.b16 %v640
          %v1029 = vunpack.c.l.b16 %v641
          %v1030 = vunpack.c.h.b16 %v641
          %v1031 = vunpack.c.l.b16 %v642
          %v1032 = vunpack.c.h.b16 %v642
          %v1033 = vunpack.c.l.b16 %v643
          %v1034 = vunpack.c.h.b16 %v643
          %v1035 = vunpack.c.l.b16 %v644
          %v1036 = vunpack.c.h.b16 %v644
          %v1037 = vunpack.c.l.b16 %v645
          %v1038 = vunpack.c.h.b16 %v645
          %v1039 = vunpack.c.l.b16 %v646
          %v1040 = vunpack.c.h.b16 %v646
          %v1041 = vunpack.c.l.b16 %v647
          %v1042 = vunpack.c.h.b16 %v647
          %v1043 = vunpack.c.l.b16 %v648
          %v1044 = vunpack.c.h.b16 %v648
          %v1045 = vunpack.c.l.b16 %v649
          %v1046 = vunpack.c.h.b16 %v649
          %v1047 = vunpack.c.l.b16 %v650
          %v1048 = vunpack.c.h.b16 %v650
          %v1049 = vunpack.c.l.b16 %v651
          %v1050 = vunpack.c.h.b16 %v651
          %v1051 = vunpack.c.l.b16 %v652
          %v1052 = vunpack.c.h.b16 %v652
          %v1053 = vunpack.c.l.b16 %v653
          %v1054 = vunpack.c.h.b16 %v653
          %v1055 = vunpack.c.l.b16 %v654
          %v1056 = vunpack.c.h.b16 %v654
          %v1057 = vunpack.c.l.b16 %v655
          %v1058 = vunpack.c.h.b16 %v655
          %v1059 = vunpack.c.l.b16 %v656
          %v1060 = vunpack.c.h.b16 %v656
          %v1061 = vunpack.c.l.b16 %v657
          %v1062 = vunpack.c.h.b16 %v657
          %v1063 = vunpack.c.l.b16 %v658
          %v1064 = vunpack.c.h.b16 %v658
          %v1065 = vunpack.c.l.b16 %v659
          %v1066 = vunpack.c.h.b16 %v659
          %v1067 = vunpack.c.l.b16 %v660
          %v1068 = vunpack.c.h.b16 %v660
          %v1069 = vunpack.c.l.b16 %v661
          %v1070 = vunpack.c.h.b16 %v661
          %v1071 = vunpack.c.l.b16 %v662
          %v1072 = vunpack.c.h.b16 %v662
          %v1073 = vunpack.c.l.b16 %v663
          %v1074 = vunpack.c.h.b16 %v663
          %v1075 = vunpack.c.l.b16 %v664
          %v1076 = vunpack.c.h.b16 %v664
          %v1077 = vunpack.c.l.b16 %v665
          %v1078 = vunpack.c.h.b16 %v665
          %v1079 = vunpack.c.l.b16 %v666
          %v1080 = vunpack.c.h.b16 %v666
          %v1081 = vunpack.c.l.b16 %v667
          %v1082 = vunpack.c.h.b16 %v667
          %v1083 = vunpack.c.l.b16 %v668
          %v1084 = vunpack.c.h.b16 %v668
          %v1085 = vunpack.c.l.b16 %v669
          %v1086 = vunpack.c.h.b16 %v669
          %v1087 = vunpack.c.l.b16 %v670
          %v1088 = vunpack.c.h.b16 %v670
          %v1089 = vunpack.c.l.b16 %v671
          %v1090 = vunpack.c.h.b16 %v671
          %v1091 = vunpack.c.l.b16 %v672
          %v1092 = vunpack.c.h.b16 %v672
          %v1093 = vunpack.c.l.b16 %v673
          %v1094 = vunpack.c.h.b16 %v673
          %v1095 = vunpack.c.l.b16 %v674
          %v1096 = vunpack.c.h.b16 %v674
          %v1097 = vunpack.c.l.b16 %v675
          %v1098 = vunpack.c.h.b16 %v675
          %v1099 = vunpack.c.l.b16 %v676
          %v1100 = vunpack.c.h.b16 %v676
          %v1101 = vunpack.c.l.b16 %v677
          %v1102 = vunpack.c.h.b16 %v677
          %v1103 = vunpack.c.l.b16 %v678
          %v1104 = vunpack.c.h.b16 %v678
          %v1105 = vunpack.c.l.b16 %v679
          %v1106 = vunpack.c.h.b16 %v679
          %v1107 = vunpack.c.l.b16 %v680
          %v1108 = vunpack.c.h.b16 %v680
          %v1109 = vunpack.c.l.b16 %v681
          %v1110 = vunpack.c.h.b16 %v681
          %v1111 = vunpack.c.l.b16 %v682
          %v1112 = vunpack.c.h.b16 %v682
          %v1113 = vunpack.c.l.b16 %v683
          %v1114 = vunpack.c.h.b16 %v683
          %v1115 = vunpack.c.l.b16 %v684
          %v1116 = vunpack.c.h.b16 %v684
          %v1117 = vunpack.c.l.b16 %v685
          %v1118 = vunpack.c.h.b16 %v685
          %v1119 = vunpack.c.l.b16 %v686
          %v1120 = vunpack.c.h.b16 %v686
          %v1121 = vunpack.c.l.b16 %v687
          %v1122 = vunpack.c.h.b16 %v687
          %v1123 = vunpack.c.l.b16 %v688
          %v1124 = vunpack.c.h.b16 %v688
          %v1125 = vunpack.c.l.b16 %v689
          %v1126 = vunpack.c.h.b16 %v689
          %v1127 = vunpack.c.l.b16 %v690
          %v1128 = vunpack.c.h.b16 %v690
          %v1129 = vunpack.c.l.b16 %v691
          %v1130 = vunpack.c.h.b16 %v691
          %v1131 = vunpack.c.l.b16 %v692
          %v1132 = vunpack.c.h.b16 %v692
          %v1133 = vunpack.c.l.b16 %v693
          %v1134 = vunpack.c.h.b16 %v693
          %v1135 = vunpack.c.l.b16 %v694
          %v1136 = vunpack.c.h.b16 %v694
          %v1137 = vunpack.c.l.b16 %v695
          %v1138 = vunpack.c.h.b16 %v695
          %v1139 = vunpack.c.l.b16 %v696
          %v1140 = vunpack.c.h.b16 %v696
          %v1141 = vunpack.c.l.b16 %v697
          %v1142 = vunpack.c.h.b16 %v697
          %v1143 = vunpack.c.l.b16 %v698
          %v1144 = vunpack.c.h.b16 %v698
          %v1145 = vunpack.c.l.b16 %v699
          %v1146 = vunpack.c.h.b16 %v699
          %v1147 = vunpack.c.l.b16 %v700
          %v1148 = vunpack.c.h.b16 %v700
          %v1149 = vunpack.c.l.b16 %v701
          %v1150 = vunpack.c.h.b16 %v701
          %v1151 = vunpack.c.l.b16 %v702
          %v1152 = vunpack.c.h.b16 %v702
          %v1153 = vunpack.c.l.b16 %v703
          %v1154 = vunpack.c.h.b16 %v703
          %v1155 = vunpack.c.l.b16 %v704
          %v1156 = vunpack.c.h.b16 %v704
          %v1157 = vunpack.c.l.b16 %v705
          %v1158 = vunpack.c.h.b16 %v705
          %v1159 = vunpack.c.l.b16 %v706
          %v1160 = vunpack.c.h.b16 %v706
          %v1161 = vunpack.c.l.b16 %v707
          %v1162 = vunpack.c.h.b16 %v707
          %v1163 = vunpack.c.l.b16 %v708
          %v1164 = vunpack.c.h.b16 %v708
          %v1165 = vunpack.c.l.b16 %v709
          %v1166 = vunpack.c.h.b16 %v709
          %v1167 = vunpack.c.l.b16 %v710
          %v1168 = vunpack.c.h.b16 %v710
          %v1169 = vunpack.c.l.b16 %v711
          %v1170 = vunpack.c.h.b16 %v711
          %v1171 = vunpack.c.l.b16 %v712
          %v1172 = vunpack.c.h.b16 %v712
          %v1173 = vunpack.c.l.b16 %v713
          %v1174 = vunpack.c.h.b16 %v713
          %v1175 = vunpack.c.l.b16 %v714
          %v1176 = vunpack.c.h.b16 %v714
          %v1177 = vunpack.c.l.b16 %v715
          %v1178 = vunpack.c.h.b16 %v715
          %v1179 = vunpack.c.l.b16 %v716
          %v1180 = vunpack.c.h.b16 %v716
          %v1181 = vunpack.c.l.b16 %v717
          %v1182 = vunpack.c.h.b16 %v717
          %v1183 = vunpack.c.l.b16 %v718
          %v1184 = vunpack.c.h.b16 %v718
          %v1185 = vunpack.c.l.b16 %v719
          %v1186 = vunpack.c.h.b16 %v719
          %v1187 = vunpack.c.l.b16 %v720
          %v1188 = vunpack.c.h.b16 %v720
          %v1189 = vunpack.c.l.b16 %v721
          %v1190 = vunpack.c.h.b16 %v721
          %v1191 = vunpack.c.l.b16 %v722
          %v1192 = vunpack.c.h.b16 %v722
          %v1193 = vunpack.c.l.b16 %v723
          %v1194 = vunpack.c.h.b16 %v723
          %v1195 = vunpack.c.l.b16 %v724
          %v1196 = vunpack.c.h.b16 %v724
          %v1197 = vunpack.c.l.b16 %v725
          %v1198 = vunpack.c.h.b16 %v725
          %v1199 = vunpack.c.l.b16 %v726
          %v1200 = vunpack.c.h.b16 %v726
          %v1201 = vunpack.c.l.b16 %v727
          %v1202 = vunpack.c.h.b16 %v727
          %v1203 = vunpack.c.l.b16 %v728
          %v1204 = vunpack.c.h.b16 %v728
          %v1205 = vunpack.c.l.b16 %v729
          %v1206 = vunpack.c.h.b16 %v729
          %v1207 = vunpack.c.l.b16 %v730
          %v1208 = vunpack.c.h.b16 %v730
          %v1209 = vunpack.c.l.b16 %v731
          %v1210 = vunpack.c.h.b16 %v731
          %v1211 = vunpack.c.l.b16 %v732
          %v1212 = vunpack.c.h.b16 %v732
          %v1213 = vunpack.c.l.b16 %v733
          %v1214 = vunpack.c.h.b16 %v733
          %v1215 = vpack.c.b16 %v963, %v959
          %v1216 = vpack.c.b16 %v964, %v960
          %v1217 = vpack.c.b16 %v965, %v961
          %v1218 = vpack.c.b16 %v966, %v962
          %v1219 = vpack.c.b16 %v971, %v967
          %v1220 = vpack.c.b16 %v972, %v968
          %v1221 = vpack.c.b16 %v973, %v969
          %v1222 = vpack.c.b16 %v974, %v970
          %v1223 = vpack.c.b16 %v979, %v975
          %v1224 = vpack.c.b16 %v980, %v976
          %v1225 = vpack.c.b16 %v981, %v977
          %v1226 = vpack.c.b16 %v982, %v978
          %v1227 = vpack.c.b16 %v987, %v983
          %v1228 = vpack.c.b16 %v988, %v984
          %v1229 = vpack.c.b16 %v989, %v985
          %v1230 = vpack.c.b16 %v990, %v986
          %v1231 = vpack.c.b16 %v995, %v991
          %v1232 = vpack.c.b16 %v996, %v992
          %v1233 = vpack.c.b16 %v997, %v993
          %v1234 = vpack.c.b16 %v998, %v994
          %v1235 = vpack.c.b16 %v1003, %v999
          %v1236 = vpack.c.b16 %v1004, %v1000
          %v1237 = vpack.c.b16 %v1005, %v1001
          %v1238 = vpack.c.b16 %v1006, %v1002
          %v1239 = vpack.c.b16 %v1011, %v1007
          %v1240 = vpack.c.b16 %v1012, %v1008
          %v1241 = vpack.c.b16 %v1013, %v1009
          %v1242 = vpack.c.b16 %v1014, %v1010
          %v1243 = vpack.c.b16 %v1019, %v1015
          %v1244 = vpack.c.b16 %v1020, %v1016
          %v1245 = vpack.c.b16 %v1021, %v1017
          %v1246 = vpack.c.b16 %v1022, %v1018
          %v1247 = vpack.c.b16 %v1027, %v1023
          %v1248 = vpack.c.b16 %v1028, %v1024
          %v1249 = vpack.c.b16 %v1029, %v1025
          %v1250 = vpack.c.b16 %v1030, %v1026
          %v1251 = vpack.c.b16 %v1035, %v1031
          %v1252 = vpack.c.b16 %v1036, %v1032
          %v1253 = vpack.c.b16 %v1037, %v1033
          %v1254 = vpack.c.b16 %v1038, %v1034
          %v1255 = vpack.c.b16 %v1043, %v1039
          %v1256 = vpack.c.b16 %v1044, %v1040
          %v1257 = vpack.c.b16 %v1045, %v1041
          %v1258 = vpack.c.b16 %v1046, %v1042
          %v1259 = vpack.c.b16 %v1051, %v1047
          %v1260 = vpack.c.b16 %v1052, %v1048
          %v1261 = vpack.c.b16 %v1053, %v1049
          %v1262 = vpack.c.b16 %v1054, %v1050
          %v1263 = vpack.c.b16 %v1059, %v1055
          %v1264 = vpack.c.b16 %v1060, %v1056
          %v1265 = vpack.c.b16 %v1061, %v1057
          %v1266 = vpack.c.b16 %v1062, %v1058
          %v1267 = vpack.c.b16 %v1067, %v1063
          %v1268 = vpack.c.b16 %v1068, %v1064
          %v1269 = vpack.c.b16 %v1069, %v1065
          %v1270 = vpack.c.b16 %v1070, %v1066
          %v1271 = vpack.c.b16 %v1075, %v1071
          %v1272 = vpack.c.b16 %v1076, %v1072
          %v1273 = vpack.c.b16 %v1077, %v1073
          %v1274 = vpack.c.b16 %v1078, %v1074
          %v1275 = vpack.c.b16 %v1083, %v1079
          %v1276 = vpack.c.b16 %v1084, %v1080
          %v1277 = vpack.c.b16 %v1085, %v1081
          %v1278 = vpack.c.b16 %v1086, %v1082
          %v1279 = vpack.c.b16 %v1091, %v1087
          %v1280 = vpack.c.b16 %v1092, %v1088
          %v1281 = vpack.c.b16 %v1093, %v1089
          %v1282 = vpack.c.b16 %v1094, %v1090
          %v1283 = vpack.c.b16 %v1099, %v1095
          %v1284 = vpack.c.b16 %v1100, %v1096
          %v1285 = vpack.c.b16 %v1101, %v1097
          %v1286 = vpack.c.b16 %v1102, %v1098
          %v1287 = vpack.c.b16 %v1107, %v1103
          %v1288 = vpack.c.b16 %v1108, %v1104
          %v1289 = vpack.c.b16 %v1109, %v1105
          %v1290 = vpack.c.b16 %v1110, %v1106
          %v1291 = vpack.c.b16 %v1115, %v1111
          %v1292 = vpack.c.b16 %v1116, %v1112
          %v1293 = vpack.c.b16 %v1117, %v1113
          %v1294 = vpack.c.b16 %v1118, %v1114
          %v1295 = vpack.c.b16 %v1123, %v1119
          %v1296 = vpack.c.b16 %v1124, %v1120
          %v1297 = vpack.c.b16 %v1125, %v1121
          %v1298 = vpack.c.b16 %v1126, %v1122
          %v1299 = vpack.c.b16 %v1131, %v1127
          %v1300 = vpack.c.b16 %v1132, %v1128
          %v1301 = vpack.c.b16 %v1133, %v1129
          %v1302 = vpack.c.b16 %v1134, %v1130
          %v1303 = vpack.c.b16 %v1139, %v1135
          %v1304 = vpack.c.b16 %v1140, %v1136
          %v1305 = vpack.c.b16 %v1141, %v1137
          %v1306 = vpack.c.b16 %v1142, %v1138
          %v1307 = vpack.c.b16 %v1147, %v1143
          %v1308 = vpack.c.b16 %v1148, %v1144
          %v1309 = vpack.c.b16 %v1149, %v1145
          %v1310 = vpack.c.b16 %v1150, %v1146
          %v1311 = vpack.c.b16 %v1155, %v1151
          %v1312 = vpack.c.b16 %v1156, %v1152
          %v1313 = vpack.c.b16 %v1157, %v1153
          %v1314 = vpack.c.b16 %v1158, %v1154
          %v1315 = vpack.c.b16 %v1163, %v1159
          %v1316 = vpack.c.b16 %v1164, %v1160
          %v1317 = vpack.c.b16 %v1165, %v1161
          %v1318 = vpack.c.b16 %v1166, %v1162
          %v1319 = vpack.c.b16 %v1171, %v1167
          %v1320 = vpack.c.b16 %v1172, %v1168
          %v1321 = vpack.c.b16 %v1173, %v1169
          %v1322 = vpack.c.b16 %v1174, %v1170
          %v1323 = vpack.c.b16 %v1179, %v1175
          %v1324 = vpack.c.b16 %v1180, %v1176
          %v1325 = vpack.c.b16 %v1181, %v1177
          %v1326 = vpack.c.b16 %v1182, %v1178
          %v1327 = vpack.c.b16 %v1187, %v1183
          %v1328 = vpack.c.b16 %v1188, %v1184
          %v1329 = vpack.c.b16 %v1189, %v1185
          %v1330 = vpack.c.b16 %v1190, %v1186
          %v1331 = vpack.c.b16 %v1195, %v1191
          %v1332 = vpack.c.b16 %v1196, %v1192
          %v1333 = vpack.c.b16 %v1197, %v1193
          %v1334 = vpack.c.b16 %v1198, %v1194
          %v1335 = vpack.c.b16 %v1203, %v1199
          %v1336 = vpack.c.b16 %v1204, %v1200
          %v1337 = vpack.c.b16 %v1205, %v1201
          %v1338 = vpack.c.b16 %v1206, %v1202
          %v1339 = vpack.c.b16 %v1211, %v1207
          %v1340 = vpack.c.b16 %v1212, %v1208
          %v1341 = vpack.c.b16 %v1213, %v1209
          %v1342 = vpack.c.b16 %v1214, %v1210
          %1471 = vmatpush.bf16.msra.mxu0 %v806
          %1472 = vmatpush.bf16.msra.mxu0 %v805
          %1473 = vmatpush.bf16.msra.mxu0 %v804
          %1474 = vmatpush.bf16.msra.mxu0 %v803
          %1475 = vmatpush.bf16.msra.mxu0 %v802
          %1476 = vmatpush.bf16.msra.mxu0 %v801
          %1477 = vmatpush.bf16.msra.mxu0 %v800
          %1478 = vmatpush.bf16.msra.mxu0 %v799
          %1479 = vmatmul.bf16.gmra.mxu0 %v1215
          %v1480 = vpop.f32.mrf.mxu0
          %v1481 = vadd.f32 0.0, %v1480
          %v1482 = vpop.f32.mrf.mxu0
          %v1483 = vadd.f32 0.0, %v1482
          %1484 = vmatmul.bf16.gmra.mxu0 %v1219
          %v1485 = vpop.f32.mrf.mxu0
          %v1486 = vadd.f32 0.0, %v1485
          %v1487 = vpop.f32.mrf.mxu0
          %v1488 = vadd.f32 0.0, %v1487
          %1489 = vmatmul.bf16.gmra.mxu0 %v1223
          %v1490 = vpop.f32.mrf.mxu0
          %v1491 = vadd.f32 0.0, %v1490
          %v1492 = vpop.f32.mrf.mxu0
          %v1493 = vadd.f32 0.0, %v1492
          %1494 = vmatmul.bf16.gmra.mxu0 %v1227
          %v1495 = vpop.f32.mrf.mxu0
          %v1496 = vadd.f32 0.0, %v1495
          %v1497 = vpop.f32.mrf.mxu0
          %v1498 = vadd.f32 0.0, %v1497
          %1499 = vmatmul.bf16.gmra.mxu0 %v1231
          %v1500 = vpop.f32.mrf.mxu0
          %v1501 = vadd.f32 0.0, %v1500
          %v1502 = vpop.f32.mrf.mxu0
          %v1503 = vadd.f32 0.0, %v1502
          %1504 = vmatmul.bf16.gmra.mxu0 %v1235
          %v1505 = vpop.f32.mrf.mxu0
          %v1506 = vadd.f32 0.0, %v1505
          %v1507 = vpop.f32.mrf.mxu0
          %v1508 = vadd.f32 0.0, %v1507
          %1509 = vmatmul.bf16.gmra.mxu0 %v1239
          %v1510 = vpop.f32.mrf.mxu0
          %v1511 = vadd.f32 0.0, %v1510
          %v1512 = vpop.f32.mrf.mxu0
          %v1513 = vadd.f32 0.0, %v1512
          %1514 = vmatmul.bf16.gmra.mxu0 %v1243
          %v1515 = vpop.f32.mrf.mxu0
          %v1516 = vadd.f32 0.0, %v1515
          %v1517 = vpop.f32.mrf.mxu0
          %v1518 = vadd.f32 0.0, %v1517
          %1519 = vmatmul.bf16.gmra.mxu0 %v1247
          %v1520 = vpop.f32.mrf.mxu0
          %v1521 = vadd.f32 0.0, %v1520
          %v1522 = vpop.f32.mrf.mxu0
          %v1523 = vadd.f32 0.0, %v1522
          %1524 = vmatmul.bf16.gmra.mxu0 %v1251
          %v1525 = vpop.f32.mrf.mxu0
          %v1526 = vadd.f32 0.0, %v1525
          %v1527 = vpop.f32.mrf.mxu0
          %v1528 = vadd.f32 0.0, %v1527
          %1529 = vmatmul.bf16.gmra.mxu0 %v1255
          %v1530 = vpop.f32.mrf.mxu0
          %v1531 = vadd.f32 0.0, %v1530
          %v1532 = vpop.f32.mrf.mxu0
          %v1533 = vadd.f32 0.0, %v1532
          %1534 = vmatmul.bf16.gmra.mxu0 %v1259
          %v1535 = vpop.f32.mrf.mxu0
          %v1536 = vadd.f32 0.0, %v1535
          %v1537 = vpop.f32.mrf.mxu0
          %v1538 = vadd.f32 0.0, %v1537
          %1539 = vmatmul.bf16.gmra.mxu0 %v1263
          %v1540 = vpop.f32.mrf.mxu0
          %v1541 = vadd.f32 0.0, %v1540
          %v1542 = vpop.f32.mrf.mxu0
          %v1543 = vadd.f32 0.0, %v1542
          %1544 = vmatmul.bf16.gmra.mxu0 %v1267
          %v1545 = vpop.f32.mrf.mxu0
          %v1546 = vadd.f32 0.0, %v1545
          %v1547 = vpop.f32.mrf.mxu0
          %v1548 = vadd.f32 0.0, %v1547
          %1549 = vmatmul.bf16.gmra.mxu0 %v1271
          %v1550 = vpop.f32.mrf.mxu0
          %v1551 = vadd.f32 0.0, %v1550
          %v1552 = vpop.f32.mrf.mxu0
          %v1553 = vadd.f32 0.0, %v1552
          %1554 = vmatmul.bf16.gmra.mxu0 %v1275
          %v1555 = vpop.f32.mrf.mxu0
          %v1556 = vadd.f32 0.0, %v1555
          %v1557 = vpop.f32.mrf.mxu0
          %v1558 = vadd.f32 0.0, %v1557
          %1559 = vmatmul.bf16.gmra.mxu0 %v1279
          %v1560 = vpop.f32.mrf.mxu0
          %v1561 = vadd.f32 0.0, %v1560
          %v1562 = vpop.f32.mrf.mxu0
          %v1563 = vadd.f32 0.0, %v1562
          %1564 = vmatmul.bf16.gmra.mxu0 %v1283
          %v1565 = vpop.f32.mrf.mxu0
          %v1566 = vadd.f32 0.0, %v1565
          %v1567 = vpop.f32.mrf.mxu0
          %v1568 = vadd.f32 0.0, %v1567
          %1569 = vmatmul.bf16.gmra.mxu0 %v1287
          %v1570 = vpop.f32.mrf.mxu0
          %v1571 = vadd.f32 0.0, %v1570
          %v1572 = vpop.f32.mrf.mxu0
          %v1573 = vadd.f32 0.0, %v1572
          %1574 = vmatmul.bf16.gmra.mxu0 %v1291
          %v1575 = vpop.f32.mrf.mxu0
          %v1576 = vadd.f32 0.0, %v1575
          %v1577 = vpop.f32.mrf.mxu0
          %v1578 = vadd.f32 0.0, %v1577
          %1579 = vmatmul.bf16.gmra.mxu0 %v1295
          %v1580 = vpop.f32.mrf.mxu0
          %v1581 = vadd.f32 0.0, %v1580
          %v1582 = vpop.f32.mrf.mxu0
          %v1583 = vadd.f32 0.0, %v1582
          %1584 = vmatmul.bf16.gmra.mxu0 %v1299
          %v1585 = vpop.f32.mrf.mxu0
          %v1586 = vadd.f32 0.0, %v1585
          %v1587 = vpop.f32.mrf.mxu0
          %v1588 = vadd.f32 0.0, %v1587
          %1589 = vmatmul.bf16.gmra.mxu0 %v1303
          %v1590 = vpop.f32.mrf.mxu0
          %v1591 = vadd.f32 0.0, %v1590
          %v1592 = vpop.f32.mrf.mxu0
          %v1593 = vadd.f32 0.0, %v1592
          %1594 = vmatmul.bf16.gmra.mxu0 %v1307
          %v1595 = vpop.f32.mrf.mxu0
          %v1596 = vadd.f32 0.0, %v1595
          %v1597 = vpop.f32.mrf.mxu0
          %v1598 = vadd.f32 0.0, %v1597
          %1599 = vmatmul.bf16.gmra.mxu0 %v1311
          %v1600 = vpop.f32.mrf.mxu0
          %v1601 = vadd.f32 0.0, %v1600
          %v1602 = vpop.f32.mrf.mxu0
          %v1603 = vadd.f32 0.0, %v1602
          %1604 = vmatmul.bf16.gmra.mxu0 %v1315
          %v1605 = vpop.f32.mrf.mxu0
          %v1606 = vadd.f32 0.0, %v1605
          %v1607 = vpop.f32.mrf.mxu0
          %v1608 = vadd.f32 0.0, %v1607
          %1609 = vmatmul.bf16.gmra.mxu0 %v1319
          %v1610 = vpop.f32.mrf.mxu0
          %v1611 = vadd.f32 0.0, %v1610
          %v1612 = vpop.f32.mrf.mxu0
          %v1613 = vadd.f32 0.0, %v1612
          %1614 = vmatmul.bf16.gmra.mxu0 %v1323
          %v1615 = vpop.f32.mrf.mxu0
          %v1616 = vadd.f32 0.0, %v1615
          %v1617 = vpop.f32.mrf.mxu0
          %v1618 = vadd.f32 0.0, %v1617
          %1619 = vmatmul.bf16.gmra.mxu0 %v1327
          %v1620 = vpop.f32.mrf.mxu0
          %v1621 = vadd.f32 0.0, %v1620
          %v1622 = vpop.f32.mrf.mxu0
          %v1623 = vadd.f32 0.0, %v1622
          %1624 = vmatmul.bf16.gmra.mxu0 %v1331
          %v1625 = vpop.f32.mrf.mxu0
          %v1626 = vadd.f32 0.0, %v1625
          %v1627 = vpop.f32.mrf.mxu0
          %v1628 = vadd.f32 0.0, %v1627
          %1629 = vmatmul.bf16.gmra.mxu0 %v1335
          %v1630 = vpop.f32.mrf.mxu0
          %v1631 = vadd.f32 0.0, %v1630
          %v1632 = vpop.f32.mrf.mxu0
          %v1633 = vadd.f32 0.0, %v1632
          %1634 = vmatmul.bf16.gmra.mxu0 %v1339
          %v1635 = vpop.f32.mrf.mxu0
          %v1636 = vadd.f32 0.0, %v1635
          %v1637 = vpop.f32.mrf.mxu0
          %v1638 = vadd.f32 0.0, %v1637
          %1639 = vdwg.mxu0
          %1640 = vmatpush.bf16.msra.mxu0 %v814
          %1641 = vmatpush.bf16.msra.mxu0 %v813
          %1642 = vmatpush.bf16.msra.mxu0 %v812
          %1643 = vmatpush.bf16.msra.mxu0 %v811
          %1644 = vmatpush.bf16.msra.mxu0 %v810
          %1645 = vmatpush.bf16.msra.mxu0 %v809
          %1646 = vmatpush.bf16.msra.mxu0 %v808
          %1647 = vmatpush.bf16.msra.mxu0 %v807
          %1648 = vmatmul.bf16.gmra.mxu0 %v1216
          %v1649 = vpop.f32.mrf.mxu0
          %v1650 = vadd.f32 %v1481, %v1649
          %v1651 = vpop.f32.mrf.mxu0
          %v1652 = vadd.f32 %v1483, %v1651
          %1653 = vmatmul.bf16.gmra.mxu0 %v1220
          %v1654 = vpop.f32.mrf.mxu0
          %v1655 = vadd.f32 %v1486, %v1654
          %v1656 = vpop.f32.mrf.mxu0
          %v1657 = vadd.f32 %v1488, %v1656
          %1658 = vmatmul.bf16.gmra.mxu0 %v1224
          %v1659 = vpop.f32.mrf.mxu0
          %v1660 = vadd.f32 %v1491, %v1659
          %v1661 = vpop.f32.mrf.mxu0
          %v1662 = vadd.f32 %v1493, %v1661
          %1663 = vmatmul.bf16.gmra.mxu0 %v1228
          %v1664 = vpop.f32.mrf.mxu0
          %v1665 = vadd.f32 %v1496, %v1664
          %v1666 = vpop.f32.mrf.mxu0
          %v1667 = vadd.f32 %v1498, %v1666
          %1668 = vmatmul.bf16.gmra.mxu0 %v1232
          %v1669 = vpop.f32.mrf.mxu0
          %v1670 = vadd.f32 %v1501, %v1669
          %v1671 = vpop.f32.mrf.mxu0
          %v1672 = vadd.f32 %v1503, %v1671
          %1673 = vmatmul.bf16.gmra.mxu0 %v1236
          %v1674 = vpop.f32.mrf.mxu0
          %v1675 = vadd.f32 %v1506, %v1674
          %v1676 = vpop.f32.mrf.mxu0
          %v1677 = vadd.f32 %v1508, %v1676
          %1678 = vmatmul.bf16.gmra.mxu0 %v1240
          %v1679 = vpop.f32.mrf.mxu0
          %v1680 = vadd.f32 %v1511, %v1679
          %v1681 = vpop.f32.mrf.mxu0
          %v1682 = vadd.f32 %v1513, %v1681
          %1683 = vmatmul.bf16.gmra.mxu0 %v1244
          %v1684 = vpop.f32.mrf.mxu0
          %v1685 = vadd.f32 %v1516, %v1684
          %v1686 = vpop.f32.mrf.mxu0
          %v1687 = vadd.f32 %v1518, %v1686
          %1688 = vmatmul.bf16.gmra.mxu0 %v1248
          %v1689 = vpop.f32.mrf.mxu0
          %v1690 = vadd.f32 %v1521, %v1689
          %v1691 = vpop.f32.mrf.mxu0
          %v1692 = vadd.f32 %v1523, %v1691
          %1693 = vmatmul.bf16.gmra.mxu0 %v1252
          %v1694 = vpop.f32.mrf.mxu0
          %v1695 = vadd.f32 %v1526, %v1694
          %v1696 = vpop.f32.mrf.mxu0
          %v1697 = vadd.f32 %v1528, %v1696
          %1698 = vmatmul.bf16.gmra.mxu0 %v1256
          %v1699 = vpop.f32.mrf.mxu0
          %v1700 = vadd.f32 %v1531, %v1699
          %v1701 = vpop.f32.mrf.mxu0
          %v1702 = vadd.f32 %v1533, %v1701
          %1703 = vmatmul.bf16.gmra.mxu0 %v1260
          %v1704 = vpop.f32.mrf.mxu0
          %v1705 = vadd.f32 %v1536, %v1704
          %v1706 = vpop.f32.mrf.mxu0
          %v1707 = vadd.f32 %v1538, %v1706
          %1708 = vmatmul.bf16.gmra.mxu0 %v1264
          %v1709 = vpop.f32.mrf.mxu0
          %v1710 = vadd.f32 %v1541, %v1709
          %v1711 = vpop.f32.mrf.mxu0
          %v1712 = vadd.f32 %v1543, %v1711
          %1713 = vmatmul.bf16.gmra.mxu0 %v1268
          %v1714 = vpop.f32.mrf.mxu0
          %v1715 = vadd.f32 %v1546, %v1714
          %v1716 = vpop.f32.mrf.mxu0
          %v1717 = vadd.f32 %v1548, %v1716
          %1718 = vmatmul.bf16.gmra.mxu0 %v1272
          %v1719 = vpop.f32.mrf.mxu0
          %v1720 = vadd.f32 %v1551, %v1719
          %v1721 = vpop.f32.mrf.mxu0
          %v1722 = vadd.f32 %v1553, %v1721
          %1723 = vmatmul.bf16.gmra.mxu0 %v1276
          %v1724 = vpop.f32.mrf.mxu0
          %v1725 = vadd.f32 %v1556, %v1724
          %v1726 = vpop.f32.mrf.mxu0
          %v1727 = vadd.f32 %v1558, %v1726
          %1728 = vmatmul.bf16.gmra.mxu0 %v1280
          %v1729 = vpop.f32.mrf.mxu0
          %v1730 = vadd.f32 %v1561, %v1729
          %v1731 = vpop.f32.mrf.mxu0
          %v1732 = vadd.f32 %v1563, %v1731
          %1733 = vmatmul.bf16.gmra.mxu0 %v1284
          %v1734 = vpop.f32.mrf.mxu0
          %v1735 = vadd.f32 %v1566, %v1734
          %v1736 = vpop.f32.mrf.mxu0
          %v1737 = vadd.f32 %v1568, %v1736
          %1738 = vmatmul.bf16.gmra.mxu0 %v1288
          %v1739 = vpop.f32.mrf.mxu0
          %v1740 = vadd.f32 %v1571, %v1739
          %v1741 = vpop.f32.mrf.mxu0
          %v1742 = vadd.f32 %v1573, %v1741
          %1743 = vmatmul.bf16.gmra.mxu0 %v1292
          %v1744 = vpop.f32.mrf.mxu0
          %v1745 = vadd.f32 %v1576, %v1744
          %v1746 = vpop.f32.mrf.mxu0
          %v1747 = vadd.f32 %v1578, %v1746
          %1748 = vmatmul.bf16.gmra.mxu0 %v1296
          %v1749 = vpop.f32.mrf.mxu0
          %v1750 = vadd.f32 %v1581, %v1749
          %v1751 = vpop.f32.mrf.mxu0
          %v1752 = vadd.f32 %v1583, %v1751
          %1753 = vmatmul.bf16.gmra.mxu0 %v1300
          %v1754 = vpop.f32.mrf.mxu0
          %v1755 = vadd.f32 %v1586, %v1754
          %v1756 = vpop.f32.mrf.mxu0
          %v1757 = vadd.f32 %v1588, %v1756
          %1758 = vmatmul.bf16.gmra.mxu0 %v1304
          %v1759 = vpop.f32.mrf.mxu0
          %v1760 = vadd.f32 %v1591, %v1759
          %v1761 = vpop.f32.mrf.mxu0
          %v1762 = vadd.f32 %v1593, %v1761
          %1763 = vmatmul.bf16.gmra.mxu0 %v1308
          %v1764 = vpop.f32.mrf.mxu0
          %v1765 = vadd.f32 %v1596, %v1764
          %v1766 = vpop.f32.mrf.mxu0
          %v1767 = vadd.f32 %v1598, %v1766
          %1768 = vmatmul.bf16.gmra.mxu0 %v1312
          %v1769 = vpop.f32.mrf.mxu0
          %v1770 = vadd.f32 %v1601, %v1769
          %v1771 = vpop.f32.mrf.mxu0
          %v1772 = vadd.f32 %v1603, %v1771
          %1773 = vmatmul.bf16.gmra.mxu0 %v1316
          %v1774 = vpop.f32.mrf.mxu0
          %v1775 = vadd.f32 %v1606, %v1774
          %v1776 = vpop.f32.mrf.mxu0
          %v1777 = vadd.f32 %v1608, %v1776
          %1778 = vmatmul.bf16.gmra.mxu0 %v1320
          %v1779 = vpop.f32.mrf.mxu0
          %v1780 = vadd.f32 %v1611, %v1779
          %v1781 = vpop.f32.mrf.mxu0
          %v1782 = vadd.f32 %v1613, %v1781
          %1783 = vmatmul.bf16.gmra.mxu0 %v1324
          %v1784 = vpop.f32.mrf.mxu0
          %v1785 = vadd.f32 %v1616, %v1784
          %v1786 = vpop.f32.mrf.mxu0
          %v1787 = vadd.f32 %v1618, %v1786
          %1788 = vmatmul.bf16.gmra.mxu0 %v1328
          %v1789 = vpop.f32.mrf.mxu0
          %v1790 = vadd.f32 %v1621, %v1789
          %v1791 = vpop.f32.mrf.mxu0
          %v1792 = vadd.f32 %v1623, %v1791
          %1793 = vmatmul.bf16.gmra.mxu0 %v1332
          %v1794 = vpop.f32.mrf.mxu0
          %v1795 = vadd.f32 %v1626, %v1794
          %v1796 = vpop.f32.mrf.mxu0
          %v1797 = vadd.f32 %v1628, %v1796
          %1798 = vmatmul.bf16.gmra.mxu0 %v1336
          %v1799 = vpop.f32.mrf.mxu0
          %v1800 = vadd.f32 %v1631, %v1799
          %v1801 = vpop.f32.mrf.mxu0
          %v1802 = vadd.f32 %v1633, %v1801
          %1803 = vmatmul.bf16.gmra.mxu0 %v1340
          %v1804 = vpop.f32.mrf.mxu0
          %v1805 = vadd.f32 %v1636, %v1804
          %v1806 = vpop.f32.mrf.mxu0
          %v1807 = vadd.f32 %v1638, %v1806
          %1808 = vdwg.mxu0
          %1809 = vmatpush.bf16.msra.mxu0 %v822
          %1810 = vmatpush.bf16.msra.mxu0 %v821
          %1811 = vmatpush.bf16.msra.mxu0 %v820
          %1812 = vmatpush.bf16.msra.mxu0 %v819
          %1813 = vmatpush.bf16.msra.mxu0 %v818
          %1814 = vmatpush.bf16.msra.mxu0 %v817
          %1815 = vmatpush.bf16.msra.mxu0 %v816
          %1816 = vmatpush.bf16.msra.mxu0 %v815
          %1817 = vmatmul.bf16.gmra.mxu0 %v1217
          %v1818 = vpop.f32.mrf.mxu0
          %v1819 = vadd.f32 %v1650, %v1818
          %v1820 = vpop.f32.mrf.mxu0
          %v1821 = vadd.f32 %v1652, %v1820
          %1822 = vmatmul.bf16.gmra.mxu0 %v1221
          %v1823 = vpop.f32.mrf.mxu0
          %v1824 = vadd.f32 %v1655, %v1823
          %v1825 = vpop.f32.mrf.mxu0
          %v1826 = vadd.f32 %v1657, %v1825
          %1827 = vmatmul.bf16.gmra.mxu0 %v1225
          %v1828 = vpop.f32.mrf.mxu0
          %v1829 = vadd.f32 %v1660, %v1828
          %v1830 = vpop.f32.mrf.mxu0
          %v1831 = vadd.f32 %v1662, %v1830
          %1832 = vmatmul.bf16.gmra.mxu0 %v1229
          %v1833 = vpop.f32.mrf.mxu0
          %v1834 = vadd.f32 %v1665, %v1833
          %v1835 = vpop.f32.mrf.mxu0
          %v1836 = vadd.f32 %v1667, %v1835
          %1837 = vmatmul.bf16.gmra.mxu0 %v1233
          %v1838 = vpop.f32.mrf.mxu0
          %v1839 = vadd.f32 %v1670, %v1838
          %v1840 = vpop.f32.mrf.mxu0
          %v1841 = vadd.f32 %v1672, %v1840
          %1842 = vmatmul.bf16.gmra.mxu0 %v1237
          %v1843 = vpop.f32.mrf.mxu0
          %v1844 = vadd.f32 %v1675, %v1843
          %v1845 = vpop.f32.mrf.mxu0
          %v1846 = vadd.f32 %v1677, %v1845
          %1847 = vmatmul.bf16.gmra.mxu0 %v1241
          %v1848 = vpop.f32.mrf.mxu0
          %v1849 = vadd.f32 %v1680, %v1848
          %v1850 = vpop.f32.mrf.mxu0
          %v1851 = vadd.f32 %v1682, %v1850
          %1852 = vmatmul.bf16.gmra.mxu0 %v1245
          %v1853 = vpop.f32.mrf.mxu0
          %v1854 = vadd.f32 %v1685, %v1853
          %v1855 = vpop.f32.mrf.mxu0
          %v1856 = vadd.f32 %v1687, %v1855
          %1857 = vmatmul.bf16.gmra.mxu0 %v1249
          %v1858 = vpop.f32.mrf.mxu0
          %v1859 = vadd.f32 %v1690, %v1858
          %v1860 = vpop.f32.mrf.mxu0
          %v1861 = vadd.f32 %v1692, %v1860
          %1862 = vmatmul.bf16.gmra.mxu0 %v1253
          %v1863 = vpop.f32.mrf.mxu0
          %v1864 = vadd.f32 %v1695, %v1863
          %v1865 = vpop.f32.mrf.mxu0
          %v1866 = vadd.f32 %v1697, %v1865
          %1867 = vmatmul.bf16.gmra.mxu0 %v1257
          %v1868 = vpop.f32.mrf.mxu0
          %v1869 = vadd.f32 %v1700, %v1868
          %v1870 = vpop.f32.mrf.mxu0
          %v1871 = vadd.f32 %v1702, %v1870
          %1872 = vmatmul.bf16.gmra.mxu0 %v1261
          %v1873 = vpop.f32.mrf.mxu0
          %v1874 = vadd.f32 %v1705, %v1873
          %v1875 = vpop.f32.mrf.mxu0
          %v1876 = vadd.f32 %v1707, %v1875
          %1877 = vmatmul.bf16.gmra.mxu0 %v1265
          %v1878 = vpop.f32.mrf.mxu0
          %v1879 = vadd.f32 %v1710, %v1878
          %v1880 = vpop.f32.mrf.mxu0
          %v1881 = vadd.f32 %v1712, %v1880
          %1882 = vmatmul.bf16.gmra.mxu0 %v1269
          %v1883 = vpop.f32.mrf.mxu0
          %v1884 = vadd.f32 %v1715, %v1883
          %v1885 = vpop.f32.mrf.mxu0
          %v1886 = vadd.f32 %v1717, %v1885
          %1887 = vmatmul.bf16.gmra.mxu0 %v1273
          %v1888 = vpop.f32.mrf.mxu0
          %v1889 = vadd.f32 %v1720, %v1888
          %v1890 = vpop.f32.mrf.mxu0
          %v1891 = vadd.f32 %v1722, %v1890
          %1892 = vmatmul.bf16.gmra.mxu0 %v1277
          %v1893 = vpop.f32.mrf.mxu0
          %v1894 = vadd.f32 %v1725, %v1893
          %v1895 = vpop.f32.mrf.mxu0
          %v1896 = vadd.f32 %v1727, %v1895
          %1897 = vmatmul.bf16.gmra.mxu0 %v1281
          %v1898 = vpop.f32.mrf.mxu0
          %v1899 = vadd.f32 %v1730, %v1898
          %v1900 = vpop.f32.mrf.mxu0
          %v1901 = vadd.f32 %v1732, %v1900
          %1902 = vmatmul.bf16.gmra.mxu0 %v1285
          %v1903 = vpop.f32.mrf.mxu0
          %v1904 = vadd.f32 %v1735, %v1903
          %v1905 = vpop.f32.mrf.mxu0
          %v1906 = vadd.f32 %v1737, %v1905
          %1907 = vmatmul.bf16.gmra.mxu0 %v1289
          %v1908 = vpop.f32.mrf.mxu0
          %v1909 = vadd.f32 %v1740, %v1908
          %v1910 = vpop.f32.mrf.mxu0
          %v1911 = vadd.f32 %v1742, %v1910
          %1912 = vmatmul.bf16.gmra.mxu0 %v1293
          %v1913 = vpop.f32.mrf.mxu0
          %v1914 = vadd.f32 %v1745, %v1913
          %v1915 = vpop.f32.mrf.mxu0
          %v1916 = vadd.f32 %v1747, %v1915
          %1917 = vmatmul.bf16.gmra.mxu0 %v1297
          %v1918 = vpop.f32.mrf.mxu0
          %v1919 = vadd.f32 %v1750, %v1918
          %v1920 = vpop.f32.mrf.mxu0
          %v1921 = vadd.f32 %v1752, %v1920
          %1922 = vmatmul.bf16.gmra.mxu0 %v1301
          %v1923 = vpop.f32.mrf.mxu0
          %v1924 = vadd.f32 %v1755, %v1923
          %v1925 = vpop.f32.mrf.mxu0
          %v1926 = vadd.f32 %v1757, %v1925
          %1927 = vmatmul.bf16.gmra.mxu0 %v1305
          %v1928 = vpop.f32.mrf.mxu0
          %v1929 = vadd.f32 %v1760, %v1928
          %v1930 = vpop.f32.mrf.mxu0
          %v1931 = vadd.f32 %v1762, %v1930
          %1932 = vmatmul.bf16.gmra.mxu0 %v1309
          %v1933 = vpop.f32.mrf.mxu0
          %v1934 = vadd.f32 %v1765, %v1933
          %v1935 = vpop.f32.mrf.mxu0
          %v1936 = vadd.f32 %v1767, %v1935
          %1937 = vmatmul.bf16.gmra.mxu0 %v1313
          %v1938 = vpop.f32.mrf.mxu0
          %v1939 = vadd.f32 %v1770, %v1938
          %v1940 = vpop.f32.mrf.mxu0
          %v1941 = vadd.f32 %v1772, %v1940
          %1942 = vmatmul.bf16.gmra.mxu0 %v1317
          %v1943 = vpop.f32.mrf.mxu0
          %v1944 = vadd.f32 %v1775, %v1943
          %v1945 = vpop.f32.mrf.mxu0
          %v1946 = vadd.f32 %v1777, %v1945
          %1947 = vmatmul.bf16.gmra.mxu0 %v1321
          %v1948 = vpop.f32.mrf.mxu0
          %v1949 = vadd.f32 %v1780, %v1948
          %v1950 = vpop.f32.mrf.mxu0
          %v1951 = vadd.f32 %v1782, %v1950
          %1952 = vmatmul.bf16.gmra.mxu0 %v1325
          %v1953 = vpop.f32.mrf.mxu0
          %v1954 = vadd.f32 %v1785, %v1953
          %v1955 = vpop.f32.mrf.mxu0
          %v1956 = vadd.f32 %v1787, %v1955
          %1957 = vmatmul.bf16.gmra.mxu0 %v1329
          %v1958 = vpop.f32.mrf.mxu0
          %v1959 = vadd.f32 %v1790, %v1958
          %v1960 = vpop.f32.mrf.mxu0
          %v1961 = vadd.f32 %v1792, %v1960
          %1962 = vmatmul.bf16.gmra.mxu0 %v1333
          %v1963 = vpop.f32.mrf.mxu0
          %v1964 = vadd.f32 %v1795, %v1963
          %v1965 = vpop.f32.mrf.mxu0
          %v1966 = vadd.f32 %v1797, %v1965
          %1967 = vmatmul.bf16.gmra.mxu0 %v1337
          %v1968 = vpop.f32.mrf.mxu0
          %v1969 = vadd.f32 %v1800, %v1968
          %v1970 = vpop.f32.mrf.mxu0
          %v1971 = vadd.f32 %v1802, %v1970
          %1972 = vmatmul.bf16.gmra.mxu0 %v1341
          %v1973 = vpop.f32.mrf.mxu0
          %v1974 = vadd.f32 %v1805, %v1973
          %v1975 = vpop.f32.mrf.mxu0
          %v1976 = vadd.f32 %v1807, %v1975
          %1977 = vdwg.mxu0
          %1978 = vmatpush.bf16.msra.mxu0 %v830
          %1979 = vmatpush.bf16.msra.mxu0 %v829
          %1980 = vmatpush.bf16.msra.mxu0 %v828
          %1981 = vmatpush.bf16.msra.mxu0 %v827
          %1982 = vmatpush.bf16.msra.mxu0 %v826
          %1983 = vmatpush.bf16.msra.mxu0 %v825
          %1984 = vmatpush.bf16.msra.mxu0 %v824
          %1985 = vmatpush.bf16.msra.mxu0 %v823
          %1986 = vmatmul.bf16.gmra.mxu0 %v1218
          %v1987 = vpop.f32.mrf.mxu0
          %v1988 = vadd.f32 %v1819, %v1987
          %v1989 = vpop.f32.mrf.mxu0
          %v1990 = vadd.f32 %v1821, %v1989
          %1991 = vmatmul.bf16.gmra.mxu0 %v1222
          %v1992 = vpop.f32.mrf.mxu0
          %v1993 = vadd.f32 %v1824, %v1992
          %v1994 = vpop.f32.mrf.mxu0
          %v1995 = vadd.f32 %v1826, %v1994
          %1996 = vmatmul.bf16.gmra.mxu0 %v1226
          %v1997 = vpop.f32.mrf.mxu0
          %v1998 = vadd.f32 %v1829, %v1997
          %v1999 = vpop.f32.mrf.mxu0
          %v2000 = vadd.f32 %v1831, %v1999
          %2001 = vmatmul.bf16.gmra.mxu0 %v1230
          %v2002 = vpop.f32.mrf.mxu0
          %v2003 = vadd.f32 %v1834, %v2002
          %v2004 = vpop.f32.mrf.mxu0
          %v2005 = vadd.f32 %v1836, %v2004
          %2006 = vmatmul.bf16.gmra.mxu0 %v1234
          %v2007 = vpop.f32.mrf.mxu0
          %v2008 = vadd.f32 %v1839, %v2007
          %v2009 = vpop.f32.mrf.mxu0
          %v2010 = vadd.f32 %v1841, %v2009
          %2011 = vmatmul.bf16.gmra.mxu0 %v1238
          %v2012 = vpop.f32.mrf.mxu0
          %v2013 = vadd.f32 %v1844, %v2012
          %v2014 = vpop.f32.mrf.mxu0
          %v2015 = vadd.f32 %v1846, %v2014
          %2016 = vmatmul.bf16.gmra.mxu0 %v1242
          %v2017 = vpop.f32.mrf.mxu0
          %v2018 = vadd.f32 %v1849, %v2017
          %v2019 = vpop.f32.mrf.mxu0
          %v2020 = vadd.f32 %v1851, %v2019
          %2021 = vmatmul.bf16.gmra.mxu0 %v1246
          %v2022 = vpop.f32.mrf.mxu0
          %v2023 = vadd.f32 %v1854, %v2022
          %v2024 = vpop.f32.mrf.mxu0
          %v2025 = vadd.f32 %v1856, %v2024
          %2026 = vmatmul.bf16.gmra.mxu0 %v1250
          %v2027 = vpop.f32.mrf.mxu0
          %v2028 = vadd.f32 %v1859, %v2027
          %v2029 = vpop.f32.mrf.mxu0
          %v2030 = vadd.f32 %v1861, %v2029
          %2031 = vmatmul.bf16.gmra.mxu0 %v1254
          %v2032 = vpop.f32.mrf.mxu0
          %v2033 = vadd.f32 %v1864, %v2032
          %v2034 = vpop.f32.mrf.mxu0
          %v2035 = vadd.f32 %v1866, %v2034
          %2036 = vmatmul.bf16.gmra.mxu0 %v1258
          %v2037 = vpop.f32.mrf.mxu0
          %v2038 = vadd.f32 %v1869, %v2037
          %v2039 = vpop.f32.mrf.mxu0
          %v2040 = vadd.f32 %v1871, %v2039
          %2041 = vmatmul.bf16.gmra.mxu0 %v1262
          %v2042 = vpop.f32.mrf.mxu0
          %v2043 = vadd.f32 %v1874, %v2042
          %v2044 = vpop.f32.mrf.mxu0
          %v2045 = vadd.f32 %v1876, %v2044
          %2046 = vmatmul.bf16.gmra.mxu0 %v1266
          %v2047 = vpop.f32.mrf.mxu0
          %v2048 = vadd.f32 %v1879, %v2047
          %v2049 = vpop.f32.mrf.mxu0
          %v2050 = vadd.f32 %v1881, %v2049
          %2051 = vmatmul.bf16.gmra.mxu0 %v1270
          %v2052 = vpop.f32.mrf.mxu0
          %v2053 = vadd.f32 %v1884, %v2052
          %v2054 = vpop.f32.mrf.mxu0
          %v2055 = vadd.f32 %v1886, %v2054
          %2056 = vmatmul.bf16.gmra.mxu0 %v1274
          %v2057 = vpop.f32.mrf.mxu0
          %v2058 = vadd.f32 %v1889, %v2057
          %v2059 = vpop.f32.mrf.mxu0
          %v2060 = vadd.f32 %v1891, %v2059
          %2061 = vmatmul.bf16.gmra.mxu0 %v1278
          %v2062 = vpop.f32.mrf.mxu0
          %v2063 = vadd.f32 %v1894, %v2062
          %v2064 = vpop.f32.mrf.mxu0
          %v2065 = vadd.f32 %v1896, %v2064
          %2066 = vmatmul.bf16.gmra.mxu0 %v1282
          %v2067 = vpop.f32.mrf.mxu0
          %v2068 = vadd.f32 %v1899, %v2067
          %v2069 = vpop.f32.mrf.mxu0
          %v2070 = vadd.f32 %v1901, %v2069
          %2071 = vmatmul.bf16.gmra.mxu0 %v1286
          %v2072 = vpop.f32.mrf.mxu0
          %v2073 = vadd.f32 %v1904, %v2072
          %v2074 = vpop.f32.mrf.mxu0
          %v2075 = vadd.f32 %v1906, %v2074
          %2076 = vmatmul.bf16.gmra.mxu0 %v1290
          %v2077 = vpop.f32.mrf.mxu0
          %v2078 = vadd.f32 %v1909, %v2077
          %v2079 = vpop.f32.mrf.mxu0
          %v2080 = vadd.f32 %v1911, %v2079
          %2081 = vmatmul.bf16.gmra.mxu0 %v1294
          %v2082 = vpop.f32.mrf.mxu0
          %v2083 = vadd.f32 %v1914, %v2082
          %v2084 = vpop.f32.mrf.mxu0
          %v2085 = vadd.f32 %v1916, %v2084
          %2086 = vmatmul.bf16.gmra.mxu0 %v1298
          %v2087 = vpop.f32.mrf.mxu0
          %v2088 = vadd.f32 %v1919, %v2087
          %v2089 = vpop.f32.mrf.mxu0
          %v2090 = vadd.f32 %v1921, %v2089
          %2091 = vmatmul.bf16.gmra.mxu0 %v1302
          %v2092 = vpop.f32.mrf.mxu0
          %v2093 = vadd.f32 %v1924, %v2092
          %v2094 = vpop.f32.mrf.mxu0
          %v2095 = vadd.f32 %v1926, %v2094
          %2096 = vmatmul.bf16.gmra.mxu0 %v1306
          %v2097 = vpop.f32.mrf.mxu0
          %v2098 = vadd.f32 %v1929, %v2097
          %v2099 = vpop.f32.mrf.mxu0
          %v2100 = vadd.f32 %v1931, %v2099
          %2101 = vmatmul.bf16.gmra.mxu0 %v1310
          %v2102 = vpop.f32.mrf.mxu0
          %v2103 = vadd.f32 %v1934, %v2102
          %v2104 = vpop.f32.mrf.mxu0
          %v2105 = vadd.f32 %v1936, %v2104
          %2106 = vmatmul.bf16.gmra.mxu0 %v1314
          %v2107 = vpop.f32.mrf.mxu0
          %v2108 = vadd.f32 %v1939, %v2107
          %v2109 = vpop.f32.mrf.mxu0
          %v2110 = vadd.f32 %v1941, %v2109
          %2111 = vmatmul.bf16.gmra.mxu0 %v1318
          %v2112 = vpop.f32.mrf.mxu0
          %v2113 = vadd.f32 %v1944, %v2112
          %v2114 = vpop.f32.mrf.mxu0
          %v2115 = vadd.f32 %v1946, %v2114
          %2116 = vmatmul.bf16.gmra.mxu0 %v1322
          %v2117 = vpop.f32.mrf.mxu0
          %v2118 = vadd.f32 %v1949, %v2117
          %v2119 = vpop.f32.mrf.mxu0
          %v2120 = vadd.f32 %v1951, %v2119
          %2121 = vmatmul.bf16.gmra.mxu0 %v1326
          %v2122 = vpop.f32.mrf.mxu0
          %v2123 = vadd.f32 %v1954, %v2122
          %v2124 = vpop.f32.mrf.mxu0
          %v2125 = vadd.f32 %v1956, %v2124
          %2126 = vmatmul.bf16.gmra.mxu0 %v1330
          %v2127 = vpop.f32.mrf.mxu0
          %v2128 = vadd.f32 %v1959, %v2127
          %v2129 = vpop.f32.mrf.mxu0
          %v2130 = vadd.f32 %v1961, %v2129
          %2131 = vmatmul.bf16.gmra.mxu0 %v1334
          %v2132 = vpop.f32.mrf.mxu0
          %v2133 = vadd.f32 %v1964, %v2132
          %v2134 = vpop.f32.mrf.mxu0
          %v2135 = vadd.f32 %v1966, %v2134
          %2136 = vmatmul.bf16.gmra.mxu0 %v1338
          %v2137 = vpop.f32.mrf.mxu0
          %v2138 = vadd.f32 %v1969, %v2137
          %v2139 = vpop.f32.mrf.mxu0
          %v2140 = vadd.f32 %v1971, %v2139
          %2141 = vmatmul.bf16.gmra.mxu0 %v1342
          %v2142 = vpop.f32.mrf.mxu0
          %v2143 = vadd.f32 %v1974, %v2142
          %v2144 = vpop.f32.mrf.mxu0
          %v2145 = vadd.f32 %v1976, %v2144
          %2146 = vdwg.mxu0
          %v2147 = vadd.f32 %v542, %v1988
          %v2148 = vadd.f32 %v543, %v1990
          %v2149 = vadd.f32 %v544, %v1993
          %v2150 = vadd.f32 %v545, %v1995
          %v2151 = vadd.f32 %v546, %v1998
          %v2152 = vadd.f32 %v547, %v2000
          %v2153 = vadd.f32 %v548, %v2003
          %v2154 = vadd.f32 %v549, %v2005
          %v2155 = vadd.f32 %v550, %v2008
          %v2156 = vadd.f32 %v551, %v2010
          %v2157 = vadd.f32 %v552, %v2013
          %v2158 = vadd.f32 %v553, %v2015
          %v2159 = vadd.f32 %v554, %v2018
          %v2160 = vadd.f32 %v555, %v2020
          %v2161 = vadd.f32 %v556, %v2023
          %v2162 = vadd.f32 %v557, %v2025
          %v2163 = vadd.f32 %v558, %v2028
          %v2164 = vadd.f32 %v559, %v2030
          %v2165 = vadd.f32 %v560, %v2033
          %v2166 = vadd.f32 %v561, %v2035
          %v2167 = vadd.f32 %v562, %v2038
          %v2168 = vadd.f32 %v563, %v2040
          %v2169 = vadd.f32 %v564, %v2043
          %v2170 = vadd.f32 %v565, %v2045
          %v2171 = vadd.f32 %v566, %v2048
          %v2172 = vadd.f32 %v567, %v2050
          %v2173 = vadd.f32 %v568, %v2053
          %v2174 = vadd.f32 %v569, %v2055
          %v2175 = vadd.f32 %v570, %v2058
          %v2176 = vadd.f32 %v571, %v2060
          %v2177 = vadd.f32 %v572, %v2063
          %v2178 = vadd.f32 %v573, %v2065
          %v2179 = vadd.f32 %v574, %v2068
          %v2180 = vadd.f32 %v575, %v2070
          %v2181 = vadd.f32 %v576, %v2073
          %v2182 = vadd.f32 %v577, %v2075
          %v2183 = vadd.f32 %v578, %v2078
          %v2184 = vadd.f32 %v579, %v2080
          %v2185 = vadd.f32 %v580, %v2083
          %v2186 = vadd.f32 %v581, %v2085
          %v2187 = vadd.f32 %v582, %v2088
          %v2188 = vadd.f32 %v583, %v2090
          %v2189 = vadd.f32 %v584, %v2093
          %v2190 = vadd.f32 %v585, %v2095
          %v2191 = vadd.f32 %v586, %v2098
          %v2192 = vadd.f32 %v587, %v2100
          %v2193 = vadd.f32 %v588, %v2103
          %v2194 = vadd.f32 %v589, %v2105
          %v2195 = vadd.f32 %v590, %v2108
          %v2196 = vadd.f32 %v591, %v2110
          %v2197 = vadd.f32 %v592, %v2113
          %v2198 = vadd.f32 %v593, %v2115
          %v2199 = vadd.f32 %v594, %v2118
          %v2200 = vadd.f32 %v595, %v2120
          %v2201 = vadd.f32 %v596, %v2123
          %v2202 = vadd.f32 %v597, %v2125
          %v2203 = vadd.f32 %v598, %v2128
          %v2204 = vadd.f32 %v599, %v2130
          %v2205 = vadd.f32 %v600, %v2133
          %v2206 = vadd.f32 %v601, %v2135
          %v2207 = vadd.f32 %v602, %v2138
          %v2208 = vadd.f32 %v603, %v2140
          %v2209 = vadd.f32 %v604, %v2143
          %v2210 = vadd.f32 %v605, %v2145
          %vm2211 = vcmask 523264
          %2212 = vst.msk [vmem:[#allocation3] sm:$0xff] %vm2211, %v2147
          %2213 = vst.msk [vmem:[#allocation3 + $0x8] sm:$0xff] %vm2211, %v2148
          %2214 = vst.msk [vmem:[#allocation3 + $0x10] sm:$0xff] %vm2211, %v2149
          %2215 = vst.msk [vmem:[#allocation3 + $0x18] sm:$0xff] %vm2211, %v2150
          %2216 = vst.msk [vmem:[#allocation3 + $0x20] sm:$0xff] %vm2211, %v2151
          %2217 = vst.msk [vmem:[#allocation3 + $0x28] sm:$0xff] %vm2211, %v2152
          %2218 = vst.msk [vmem:[#allocation3 + $0x30] sm:$0xff] %vm2211, %v2153
          %2219 = vst.msk [vmem:[#allocation3 + $0x38] sm:$0xff] %vm2211, %v2154
          %2220 = vst.msk [vmem:[#allocation3 + $0x40] sm:$0xff] %vm2211, %v2155
          %2221 = vst.msk [vmem:[#allocation3 + $0x48] sm:$0xff] %vm2211, %v2156
          %2222 = vst.msk [vmem:[#allocation3 + $0x50] sm:$0xff] %vm2211, %v2157
          %2223 = vst.msk [vmem:[#allocation3 + $0x58] sm:$0xff] %vm2211, %v2158
          %2224 = vst.msk [vmem:[#allocation3 + $0x60] sm:$0xff] %vm2211, %v2159
          %2225 = vst.msk [vmem:[#allocation3 + $0x68] sm:$0xff] %vm2211, %v2160
          %2226 = vst.msk [vmem:[#allocation3 + $0x70] sm:$0xff] %vm2211, %v2161
          %2227 = vst.msk [vmem:[#allocation3 + $0x78] sm:$0xff] %vm2211, %v2162
          %2228 = vst.msk [vmem:[#allocation3 + $0x80] sm:$0xff] %vm2211, %v2163
          %2229 = vst.msk [vmem:[#allocation3 + $0x88] sm:$0xff] %vm2211, %v2164
          %2230 = vst.msk [vmem:[#allocation3 + $0x90] sm:$0xff] %vm2211, %v2165
          %2231 = vst.msk [vmem:[#allocation3 + $0x98] sm:$0xff] %vm2211, %v2166
          %2232 = vst.msk [vmem:[#allocation3 + $0xa0] sm:$0xff] %vm2211, %v2167
          %2233 = vst.msk [vmem:[#allocation3 + $0xa8] sm:$0xff] %vm2211, %v2168
          %2234 = vst.msk [vmem:[#allocation3 + $0xb0] sm:$0xff] %vm2211, %v2169
          %2235 = vst.msk [vmem:[#allocation3 + $0xb8] sm:$0xff] %vm2211, %v2170
          %2236 = vst.msk [vmem:[#allocation3 + $0xc0] sm:$0xff] %vm2211, %v2171
          %2237 = vst.msk [vmem:[#allocation3 + $0xc8] sm:$0xff] %vm2211, %v2172
          %2238 = vst.msk [vmem:[#allocation3 + $0xd0] sm:$0xff] %vm2211, %v2173
          %2239 = vst.msk [vmem:[#allocation3 + $0xd8] sm:$0xff] %vm2211, %v2174
          %2240 = vst.msk [vmem:[#allocation3 + $0xe0] sm:$0xff] %vm2211, %v2175
          %2241 = vst.msk [vmem:[#allocation3 + $0xe8] sm:$0xff] %vm2211, %v2176
          %2242 = vst.msk [vmem:[#allocation3 + $0xf0] sm:$0xff] %vm2211, %v2177
          %2243 = vst.msk [vmem:[#allocation3 + $0xf8] sm:$0xff] %vm2211, %v2178
          %2244 = vst.msk [vmem:[#allocation3 + $0x100] sm:$0xff] %vm2211, %v2179
          %2245 = vst.msk [vmem:[#allocation3 + $0x108] sm:$0xff] %vm2211, %v2180
          %2246 = vst.msk [vmem:[#allocation3 + $0x110] sm:$0xff] %vm2211, %v2181
          %2247 = vst.msk [vmem:[#allocation3 + $0x118] sm:$0xff] %vm2211, %v2182
          %2248 = vst.msk [vmem:[#allocation3 + $0x120] sm:$0xff] %vm2211, %v2183
          %2249 = vst.msk [vmem:[#allocation3 + $0x128] sm:$0xff] %vm2211, %v2184
          %2250 = vst.msk [vmem:[#allocation3 + $0x130] sm:$0xff] %vm2211, %v2185
          %2251 = vst.msk [vmem:[#allocation3 + $0x138] sm:$0xff] %vm2211, %v2186
          %2252 = vst.msk [vmem:[#allocation3 + $0x140] sm:$0xff] %vm2211, %v2187
          %2253 = vst.msk [vmem:[#allocation3 + $0x148] sm:$0xff] %vm2211, %v2188
          %2254 = vst.msk [vmem:[#allocation3 + $0x150] sm:$0xff] %vm2211, %v2189
          %2255 = vst.msk [vmem:[#allocation3 + $0x158] sm:$0xff] %vm2211, %v2190
          %2256 = vst.msk [vmem:[#allocation3 + $0x160] sm:$0xff] %vm2211, %v2191
          %2257 = vst.msk [vmem:[#allocation3 + $0x168] sm:$0xff] %vm2211, %v2192
          %2258 = vst.msk [vmem:[#allocation3 + $0x170] sm:$0xff] %vm2211, %v2193
          %2259 = vst.msk [vmem:[#allocation3 + $0x178] sm:$0xff] %vm2211, %v2194
          %2260 = vst.msk [vmem:[#allocation3 + $0x180] sm:$0xff] %vm2211, %v2195
          %2261 = vst.msk [vmem:[#allocation3 + $0x188] sm:$0xff] %vm2211, %v2196
          %2262 = vst.msk [vmem:[#allocation3 + $0x190] sm:$0xff] %vm2211, %v2197
          %2263 = vst.msk [vmem:[#allocation3 + $0x198] sm:$0xff] %vm2211, %v2198
          %2264 = vst.msk [vmem:[#allocation3 + $0x1a0] sm:$0xff] %vm2211, %v2199
          %2265 = vst.msk [vmem:[#allocation3 + $0x1a8] sm:$0xff] %vm2211, %v2200
          %2266 = vst.msk [vmem:[#allocation3 + $0x1b0] sm:$0xff] %vm2211, %v2201
          %2267 = vst.msk [vmem:[#allocation3 + $0x1b8] sm:$0xff] %vm2211, %v2202
          %2268 = vst.msk [vmem:[#allocation3 + $0x1c0] sm:$0xff] %vm2211, %v2203
          %2269 = vst.msk [vmem:[#allocation3 + $0x1c8] sm:$0xff] %vm2211, %v2204
          %2270 = vst.msk [vmem:[#allocation3 + $0x1d0] sm:$0xff] %vm2211, %v2205
          %2271 = vst.msk [vmem:[#allocation3 + $0x1d8] sm:$0xff] %vm2211, %v2206
          %2272 = vst.msk [vmem:[#allocation3 + $0x1e0] sm:$0xff] %vm2211, %v2207
          %2273 = vst.msk [vmem:[#allocation3 + $0x1e8] sm:$0xff] %vm2211, %v2208
          %2274 = vst.msk [vmem:[#allocation3 + $0x1f0] sm:$0xff] %vm2211, %v2209
          %2275 = vst.msk [vmem:[#allocation3 + $0x1f8] sm:$0xff] %vm2211, %v2210
        $region59: #{_fused_propagate.1} parent=23 // pred_fallthru
          _
        // Predicated region
        $region60: #{_fused_propagate.1} parent=23 // pred_check
          %p2276 = pneg %p171
        $region61: #{_fused_propagate.1} parent=23 // pred_check_branch
          %2278 = sbr.rel (%p2276) target = $region63
        $region62: #{_fused_propagate.1} parent=23 // pred_region
          %v2279 = vld [vmem:[#allocation3] sm:$0xff]
          %v2280 = vld [vmem:[#allocation3 + $0x8] sm:$0xff]
          %v2281 = vld [vmem:[#allocation3 + $0x10] sm:$0xff]
          %v2282 = vld [vmem:[#allocation3 + $0x18] sm:$0xff]
          %v2283 = vld [vmem:[#allocation3 + $0x20] sm:$0xff]
          %v2284 = vld [vmem:[#allocation3 + $0x28] sm:$0xff]
          %v2285 = vld [vmem:[#allocation3 + $0x30] sm:$0xff]
          %v2286 = vld [vmem:[#allocation3 + $0x38] sm:$0xff]
          %v2287 = vld [vmem:[#allocation3 + $0x40] sm:$0xff]
          %v2288 = vld [vmem:[#allocation3 + $0x48] sm:$0xff]
          %v2289 = vld [vmem:[#allocation3 + $0x50] sm:$0xff]
          %v2290 = vld [vmem:[#allocation3 + $0x58] sm:$0xff]
          %v2291 = vld [vmem:[#allocation3 + $0x60] sm:$0xff]
          %v2292 = vld [vmem:[#allocation3 + $0x68] sm:$0xff]
          %v2293 = vld [vmem:[#allocation3 + $0x70] sm:$0xff]
          %v2294 = vld [vmem:[#allocation3 + $0x78] sm:$0xff]
          %v2295 = vld [vmem:[#allocation3 + $0x80] sm:$0xff]
          %v2296 = vld [vmem:[#allocation3 + $0x88] sm:$0xff]
          %v2297 = vld [vmem:[#allocation3 + $0x90] sm:$0xff]
          %v2298 = vld [vmem:[#allocation3 + $0x98] sm:$0xff]
          %v2299 = vld [vmem:[#allocation3 + $0xa0] sm:$0xff]
          %v2300 = vld [vmem:[#allocation3 + $0xa8] sm:$0xff]
          %v2301 = vld [vmem:[#allocation3 + $0xb0] sm:$0xff]
          %v2302 = vld [vmem:[#allocation3 + $0xb8] sm:$0xff]
          %v2303 = vld [vmem:[#allocation3 + $0xc0] sm:$0xff]
          %v2304 = vld [vmem:[#allocation3 + $0xc8] sm:$0xff]
          %v2305 = vld [vmem:[#allocation3 + $0xd0] sm:$0xff]
          %v2306 = vld [vmem:[#allocation3 + $0xd8] sm:$0xff]
          %v2307 = vld [vmem:[#allocation3 + $0xe0] sm:$0xff]
          %v2308 = vld [vmem:[#allocation3 + $0xe8] sm:$0xff]
          %v2309 = vld [vmem:[#allocation3 + $0xf0] sm:$0xff]
          %v2310 = vld [vmem:[#allocation3 + $0xf8] sm:$0xff]
          %v2311 = vld [vmem:[#allocation3 + $0x100] sm:$0xff]
          %v2312 = vld [vmem:[#allocation3 + $0x108] sm:$0xff]
          %v2313 = vld [vmem:[#allocation3 + $0x110] sm:$0xff]
          %v2314 = vld [vmem:[#allocation3 + $0x118] sm:$0xff]
          %v2315 = vld [vmem:[#allocation3 + $0x120] sm:$0xff]
          %v2316 = vld [vmem:[#allocation3 + $0x128] sm:$0xff]
          %v2317 = vld [vmem:[#allocation3 + $0x130] sm:$0xff]
          %v2318 = vld [vmem:[#allocation3 + $0x138] sm:$0xff]
          %v2319 = vld [vmem:[#allocation3 + $0x140] sm:$0xff]
          %v2320 = vld [vmem:[#allocation3 + $0x148] sm:$0xff]
          %v2321 = vld [vmem:[#allocation3 + $0x150] sm:$0xff]
          %v2322 = vld [vmem:[#allocation3 + $0x158] sm:$0xff]
          %v2323 = vld [vmem:[#allocation3 + $0x160] sm:$0xff]
          %v2324 = vld [vmem:[#allocation3 + $0x168] sm:$0xff]
          %v2325 = vld [vmem:[#allocation3 + $0x170] sm:$0xff]
          %v2326 = vld [vmem:[#allocation3 + $0x178] sm:$0xff]
          %v2327 = vld [vmem:[#allocation3 + $0x180] sm:$0xff]
          %v2328 = vld [vmem:[#allocation3 + $0x188] sm:$0xff]
          %v2329 = vld [vmem:[#allocation3 + $0x190] sm:$0xff]
          %v2330 = vld [vmem:[#allocation3 + $0x198] sm:$0xff]
          %v2331 = vld [vmem:[#allocation3 + $0x1a0] sm:$0xff]
          %v2332 = vld [vmem:[#allocation3 + $0x1a8] sm:$0xff]
          %v2333 = vld [vmem:[#allocation3 + $0x1b0] sm:$0xff]
          %v2334 = vld [vmem:[#allocation3 + $0x1b8] sm:$0xff]
          %v2335 = vld [vmem:[#allocation3 + $0x1c0] sm:$0xff]
          %v2336 = vld [vmem:[#allocation3 + $0x1c8] sm:$0xff]
          %v2337 = vld [vmem:[#allocation3 + $0x1d0] sm:$0xff]
          %v2338 = vld [vmem:[#allocation3 + $0x1d8] sm:$0xff]
          %v2339 = vld [vmem:[#allocation3 + $0x1e0] sm:$0xff]
          %v2340 = vld [vmem:[#allocation3 + $0x1e8] sm:$0xff]
          %v2341 = vld [vmem:[#allocation3 + $0x1f0] sm:$0xff]
          %v2342 = vld [vmem:[#allocation3 + $0x1f8] sm:$0xff]
          %s2343 = smul.u32 %s465, 1024
          %s2344 = smul.u32 %s22, 512
          %s2345 = sadd.s32 %s2343, %s2344
          %s2346 = scalar_lea.vmem [#allocation2], %s2345
          %vm2347 = vcmask 523264
          %2348 = vst.msk [vmem:[%s2346] sm:$0xff] %vm2347, %v2279
          %2349 = vst.msk [vmem:[%s2346 + $0x8] sm:$0xff] %vm2347, %v2280
          %2350 = vst.msk [vmem:[%s2346 + $0x10] sm:$0xff] %vm2347, %v2281
          %2351 = vst.msk [vmem:[%s2346 + $0x18] sm:$0xff] %vm2347, %v2282
          %2352 = vst.msk [vmem:[%s2346 + $0x20] sm:$0xff] %vm2347, %v2283
          %2353 = vst.msk [vmem:[%s2346 + $0x28] sm:$0xff] %vm2347, %v2284
          %2354 = vst.msk [vmem:[%s2346 + $0x30] sm:$0xff] %vm2347, %v2285
          %2355 = vst.msk [vmem:[%s2346 + $0x38] sm:$0xff] %vm2347, %v2286
          %2356 = vst.msk [vmem:[%s2346 + $0x40] sm:$0xff] %vm2347, %v2287
          %2357 = vst.msk [vmem:[%s2346 + $0x48] sm:$0xff] %vm2347, %v2288
          %2358 = vst.msk [vmem:[%s2346 + $0x50] sm:$0xff] %vm2347, %v2289
          %2359 = vst.msk [vmem:[%s2346 + $0x58] sm:$0xff] %vm2347, %v2290
          %2360 = vst.msk [vmem:[%s2346 + $0x60] sm:$0xff] %vm2347, %v2291
          %2361 = vst.msk [vmem:[%s2346 + $0x68] sm:$0xff] %vm2347, %v2292
          %2362 = vst.msk [vmem:[%s2346 + $0x70] sm:$0xff] %vm2347, %v2293
          %2363 = vst.msk [vmem:[%s2346 + $0x78] sm:$0xff] %vm2347, %v2294
          %2364 = vst.msk [vmem:[%s2346 + $0x80] sm:$0xff] %vm2347, %v2295
          %2365 = vst.msk [vmem:[%s2346 + $0x88] sm:$0xff] %vm2347, %v2296
          %2366 = vst.msk [vmem:[%s2346 + $0x90] sm:$0xff] %vm2347, %v2297
          %2367 = vst.msk [vmem:[%s2346 + $0x98] sm:$0xff] %vm2347, %v2298
          %2368 = vst.msk [vmem:[%s2346 + $0xa0] sm:$0xff] %vm2347, %v2299
          %2369 = vst.msk [vmem:[%s2346 + $0xa8] sm:$0xff] %vm2347, %v2300
          %2370 = vst.msk [vmem:[%s2346 + $0xb0] sm:$0xff] %vm2347, %v2301
          %2371 = vst.msk [vmem:[%s2346 + $0xb8] sm:$0xff] %vm2347, %v2302
          %2372 = vst.msk [vmem:[%s2346 + $0xc0] sm:$0xff] %vm2347, %v2303
          %2373 = vst.msk [vmem:[%s2346 + $0xc8] sm:$0xff] %vm2347, %v2304
          %2374 = vst.msk [vmem:[%s2346 + $0xd0] sm:$0xff] %vm2347, %v2305
          %2375 = vst.msk [vmem:[%s2346 + $0xd8] sm:$0xff] %vm2347, %v2306
          %2376 = vst.msk [vmem:[%s2346 + $0xe0] sm:$0xff] %vm2347, %v2307
          %2377 = vst.msk [vmem:[%s2346 + $0xe8] sm:$0xff] %vm2347, %v2308
          %2378 = vst.msk [vmem:[%s2346 + $0xf0] sm:$0xff] %vm2347, %v2309
          %2379 = vst.msk [vmem:[%s2346 + $0xf8] sm:$0xff] %vm2347, %v2310
          %2380 = vst.msk [vmem:[%s2346 + $0x100] sm:$0xff] %vm2347, %v2311
          %2381 = vst.msk [vmem:[%s2346 + $0x108] sm:$0xff] %vm2347, %v2312
          %2382 = vst.msk [vmem:[%s2346 + $0x110] sm:$0xff] %vm2347, %v2313
          %2383 = vst.msk [vmem:[%s2346 + $0x118] sm:$0xff] %vm2347, %v2314
          %2384 = vst.msk [vmem:[%s2346 + $0x120] sm:$0xff] %vm2347, %v2315
          %2385 = vst.msk [vmem:[%s2346 + $0x128] sm:$0xff] %vm2347, %v2316
          %2386 = vst.msk [vmem:[%s2346 + $0x130] sm:$0xff] %vm2347, %v2317
          %2387 = vst.msk [vmem:[%s2346 + $0x138] sm:$0xff] %vm2347, %v2318
          %2388 = vst.msk [vmem:[%s2346 + $0x140] sm:$0xff] %vm2347, %v2319
          %2389 = vst.msk [vmem:[%s2346 + $0x148] sm:$0xff] %vm2347, %v2320
          %2390 = vst.msk [vmem:[%s2346 + $0x150] sm:$0xff] %vm2347, %v2321
          %2391 = vst.msk [vmem:[%s2346 + $0x158] sm:$0xff] %vm2347, %v2322
          %2392 = vst.msk [vmem:[%s2346 + $0x160] sm:$0xff] %vm2347, %v2323
          %2393 = vst.msk [vmem:[%s2346 + $0x168] sm:$0xff] %vm2347, %v2324
          %2394 = vst.msk [vmem:[%s2346 + $0x170] sm:$0xff] %vm2347, %v2325
          %2395 = vst.msk [vmem:[%s2346 + $0x178] sm:$0xff] %vm2347, %v2326
          %2396 = vst.msk [vmem:[%s2346 + $0x180] sm:$0xff] %vm2347, %v2327
          %2397 = vst.msk [vmem:[%s2346 + $0x188] sm:$0xff] %vm2347, %v2328
          %2398 = vst.msk [vmem:[%s2346 + $0x190] sm:$0xff] %vm2347, %v2329
          %2399 = vst.msk [vmem:[%s2346 + $0x198] sm:$0xff] %vm2347, %v2330
          %2400 = vst.msk [vmem:[%s2346 + $0x1a0] sm:$0xff] %vm2347, %v2331
          %2401 = vst.msk [vmem:[%s2346 + $0x1a8] sm:$0xff] %vm2347, %v2332
          %2402 = vst.msk [vmem:[%s2346 + $0x1b0] sm:$0xff] %vm2347, %v2333
          %2403 = vst.msk [vmem:[%s2346 + $0x1b8] sm:$0xff] %vm2347, %v2334
          %2404 = vst.msk [vmem:[%s2346 + $0x1c0] sm:$0xff] %vm2347, %v2335
          %2405 = vst.msk [vmem:[%s2346 + $0x1c8] sm:$0xff] %vm2347, %v2336
          %2406 = vst.msk [vmem:[%s2346 + $0x1d0] sm:$0xff] %vm2347, %v2337
          %2407 = vst.msk [vmem:[%s2346 + $0x1d8] sm:$0xff] %vm2347, %v2338
          %2408 = vst.msk [vmem:[%s2346 + $0x1e0] sm:$0xff] %vm2347, %v2339
          %2409 = vst.msk [vmem:[%s2346 + $0x1e8] sm:$0xff] %vm2347, %v2340
          %2410 = vst.msk [vmem:[%s2346 + $0x1f0] sm:$0xff] %vm2347, %v2341
          %2411 = vst.msk [vmem:[%s2346 + $0x1f8] sm:$0xff] %vm2347, %v2342
          // Predicated region
          $region64: #{_fused_propagate.1} parent=62 // pred_check
            %p2412 = pneg %p167
          $region65: #{_fused_propagate.1} parent=62 // pred_check_branch
            %2414 = sbr.rel (%p2412) target = $region67
          $region66: #{_fused_propagate.1} parent=62 // pred_region
            %s2415 = scalar_lea.vmem [#allocation4], %s2344
            %2416 = vst.msk [vmem:[%s2415] sm:$0xff] %vm2347, %v2279
            %2417 = vst.msk [vmem:[%s2415 + $0x8] sm:$0xff] %vm2347, %v2280
            %2418 = vst.msk [vmem:[%s2415 + $0x10] sm:$0xff] %vm2347, %v2281
            %2419 = vst.msk [vmem:[%s2415 + $0x18] sm:$0xff] %vm2347, %v2282
            %2420 = vst.msk [vmem:[%s2415 + $0x20] sm:$0xff] %vm2347, %v2283
            %2421 = vst.msk [vmem:[%s2415 + $0x28] sm:$0xff] %vm2347, %v2284
            %2422 = vst.msk [vmem:[%s2415 + $0x30] sm:$0xff] %vm2347, %v2285
            %2423 = vst.msk [vmem:[%s2415 + $0x38] sm:$0xff] %vm2347, %v2286
            %2424 = vst.msk [vmem:[%s2415 + $0x40] sm:$0xff] %vm2347, %v2287
            %2425 = vst.msk [vmem:[%s2415 + $0x48] sm:$0xff] %vm2347, %v2288
            %2426 = vst.msk [vmem:[%s2415 + $0x50] sm:$0xff] %vm2347, %v2289
            %2427 = vst.msk [vmem:[%s2415 + $0x58] sm:$0xff] %vm2347, %v2290
            %2428 = vst.msk [vmem:[%s2415 + $0x60] sm:$0xff] %vm2347, %v2291
            %2429 = vst.msk [vmem:[%s2415 + $0x68] sm:$0xff] %vm2347, %v2292
            %2430 = vst.msk [vmem:[%s2415 + $0x70] sm:$0xff] %vm2347, %v2293
            %2431 = vst.msk [vmem:[%s2415 + $0x78] sm:$0xff] %vm2347, %v2294
            %2432 = vst.msk [vmem:[%s2415 + $0x80] sm:$0xff] %vm2347, %v2295
            %2433 = vst.msk [vmem:[%s2415 + $0x88] sm:$0xff] %vm2347, %v2296
            %2434 = vst.msk [vmem:[%s2415 + $0x90] sm:$0xff] %vm2347, %v2297
            %2435 = vst.msk [vmem:[%s2415 + $0x98] sm:$0xff] %vm2347, %v2298
            %2436 = vst.msk [vmem:[%s2415 + $0xa0] sm:$0xff] %vm2347, %v2299
            %2437 = vst.msk [vmem:[%s2415 + $0xa8] sm:$0xff] %vm2347, %v2300
            %2438 = vst.msk [vmem:[%s2415 + $0xb0] sm:$0xff] %vm2347, %v2301
            %2439 = vst.msk [vmem:[%s2415 + $0xb8] sm:$0xff] %vm2347, %v2302
            %2440 = vst.msk [vmem:[%s2415 + $0xc0] sm:$0xff] %vm2347, %v2303
            %2441 = vst.msk [vmem:[%s2415 + $0xc8] sm:$0xff] %vm2347, %v2304
            %2442 = vst.msk [vmem:[%s2415 + $0xd0] sm:$0xff] %vm2347, %v2305
            %2443 = vst.msk [vmem:[%s2415 + $0xd8] sm:$0xff] %vm2347, %v2306
            %2444 = vst.msk [vmem:[%s2415 + $0xe0] sm:$0xff] %vm2347, %v2307
            %2445 = vst.msk [vmem:[%s2415 + $0xe8] sm:$0xff] %vm2347, %v2308
            %2446 = vst.msk [vmem:[%s2415 + $0xf0] sm:$0xff] %vm2347, %v2309
            %2447 = vst.msk [vmem:[%s2415 + $0xf8] sm:$0xff] %vm2347, %v2310
            %2448 = vst.msk [vmem:[%s2415 + $0x100] sm:$0xff] %vm2347, %v2311
            %2449 = vst.msk [vmem:[%s2415 + $0x108] sm:$0xff] %vm2347, %v2312
            %2450 = vst.msk [vmem:[%s2415 + $0x110] sm:$0xff] %vm2347, %v2313
            %2451 = vst.msk [vmem:[%s2415 + $0x118] sm:$0xff] %vm2347, %v2314
            %2452 = vst.msk [vmem:[%s2415 + $0x120] sm:$0xff] %vm2347, %v2315
            %2453 = vst.msk [vmem:[%s2415 + $0x128] sm:$0xff] %vm2347, %v2316
            %2454 = vst.msk [vmem:[%s2415 + $0x130] sm:$0xff] %vm2347, %v2317
            %2455 = vst.msk [vmem:[%s2415 + $0x138] sm:$0xff] %vm2347, %v2318
            %2456 = vst.msk [vmem:[%s2415 + $0x140] sm:$0xff] %vm2347, %v2319
            %2457 = vst.msk [vmem:[%s2415 + $0x148] sm:$0xff] %vm2347, %v2320
            %2458 = vst.msk [vmem:[%s2415 + $0x150] sm:$0xff] %vm2347, %v2321
            %2459 = vst.msk [vmem:[%s2415 + $0x158] sm:$0xff] %vm2347, %v2322
            %2460 = vst.msk [vmem:[%s2415 + $0x160] sm:$0xff] %vm2347, %v2323
            %2461 = vst.msk [vmem:[%s2415 + $0x168] sm:$0xff] %vm2347, %v2324
            %2462 = vst.msk [vmem:[%s2415 + $0x170] sm:$0xff] %vm2347, %v2325
            %2463 = vst.msk [vmem:[%s2415 + $0x178] sm:$0xff] %vm2347, %v2326
            %2464 = vst.msk [vmem:[%s2415 + $0x180] sm:$0xff] %vm2347, %v2327
            %2465 = vst.msk [vmem:[%s2415 + $0x188] sm:$0xff] %vm2347, %v2328
            %2466 = vst.msk [vmem:[%s2415 + $0x190] sm:$0xff] %vm2347, %v2329
            %2467 = vst.msk [vmem:[%s2415 + $0x198] sm:$0xff] %vm2347, %v2330
            %2468 = vst.msk [vmem:[%s2415 + $0x1a0] sm:$0xff] %vm2347, %v2331
            %2469 = vst.msk [vmem:[%s2415 + $0x1a8] sm:$0xff] %vm2347, %v2332
            %2470 = vst.msk [vmem:[%s2415 + $0x1b0] sm:$0xff] %vm2347, %v2333
            %2471 = vst.msk [vmem:[%s2415 + $0x1b8] sm:$0xff] %vm2347, %v2334
            %2472 = vst.msk [vmem:[%s2415 + $0x1c0] sm:$0xff] %vm2347, %v2335
            %2473 = vst.msk [vmem:[%s2415 + $0x1c8] sm:$0xff] %vm2347, %v2336
            %2474 = vst.msk [vmem:[%s2415 + $0x1d0] sm:$0xff] %vm2347, %v2337
            %2475 = vst.msk [vmem:[%s2415 + $0x1d8] sm:$0xff] %vm2347, %v2338
            %2476 = vst.msk [vmem:[%s2415 + $0x1e0] sm:$0xff] %vm2347, %v2339
            %2477 = vst.msk [vmem:[%s2415 + $0x1e8] sm:$0xff] %vm2347, %v2340
            %2478 = vst.msk [vmem:[%s2415 + $0x1f0] sm:$0xff] %vm2347, %v2341
            %2479 = vst.msk [vmem:[%s2415 + $0x1f8] sm:$0xff] %vm2347, %v2342
          $region67: #{_fused_propagate.1} parent=62 // pred_fallthru
            _
          %p2480 = scmp.ne.s32.totalorder %s21, 0
          // Predicated region
          $region68: #{_fused_propagate.1} parent=62 // pred_check
            %p2481 = pneg %p2480
          $region69: #{_fused_propagate.1} parent=62 // pred_check_branch
            %2483 = sbr.rel (%p2481) target = $region71
          $region70: #{_fused_propagate.1} parent=62 // pred_region
            %s2484 = scalar_lea.vmem [#allocation4], %s2344
            %v2485 = vld [vmem:[%s2484] sm:$0xff]
            %v2486 = vld [vmem:[%s2484 + $0x8] sm:$0xff]
            %v2487 = vld [vmem:[%s2484 + $0x10] sm:$0xff]
            %v2488 = vld [vmem:[%s2484 + $0x18] sm:$0xff]
            %v2489 = vld [vmem:[%s2484 + $0x20] sm:$0xff]
            %v2490 = vld [vmem:[%s2484 + $0x28] sm:$0xff]
            %v2491 = vld [vmem:[%s2484 + $0x30] sm:$0xff]
            %v2492 = vld [vmem:[%s2484 + $0x38] sm:$0xff]
            %v2493 = vld [vmem:[%s2484 + $0x40] sm:$0xff]
            %v2494 = vld [vmem:[%s2484 + $0x48] sm:$0xff]
            %v2495 = vld [vmem:[%s2484 + $0x50] sm:$0xff]
            %v2496 = vld [vmem:[%s2484 + $0x58] sm:$0xff]
            %v2497 = vld [vmem:[%s2484 + $0x60] sm:$0xff]
            %v2498 = vld [vmem:[%s2484 + $0x68] sm:$0xff]
            %v2499 = vld [vmem:[%s2484 + $0x70] sm:$0xff]
            %v2500 = vld [vmem:[%s2484 + $0x78] sm:$0xff]
            %v2501 = vld [vmem:[%s2484 + $0x80] sm:$0xff]
            %v2502 = vld [vmem:[%s2484 + $0x88] sm:$0xff]
            %v2503 = vld [vmem:[%s2484 + $0x90] sm:$0xff]
            %v2504 = vld [vmem:[%s2484 + $0x98] sm:$0xff]
            %v2505 = vld [vmem:[%s2484 + $0xa0] sm:$0xff]
            %v2506 = vld [vmem:[%s2484 + $0xa8] sm:$0xff]
            %v2507 = vld [vmem:[%s2484 + $0xb0] sm:$0xff]
            %v2508 = vld [vmem:[%s2484 + $0xb8] sm:$0xff]
            %v2509 = vld [vmem:[%s2484 + $0xc0] sm:$0xff]
            %v2510 = vld [vmem:[%s2484 + $0xc8] sm:$0xff]
            %v2511 = vld [vmem:[%s2484 + $0xd0] sm:$0xff]
            %v2512 = vld [vmem:[%s2484 + $0xd8] sm:$0xff]
            %v2513 = vld [vmem:[%s2484 + $0xe0] sm:$0xff]
            %v2514 = vld [vmem:[%s2484 + $0xe8] sm:$0xff]
            %v2515 = vld [vmem:[%s2484 + $0xf0] sm:$0xff]
            %v2516 = vld [vmem:[%s2484 + $0xf8] sm:$0xff]
            %v2517 = vld [vmem:[%s2484 + $0x100] sm:$0xff]
            %v2518 = vld [vmem:[%s2484 + $0x108] sm:$0xff]
            %v2519 = vld [vmem:[%s2484 + $0x110] sm:$0xff]
            %v2520 = vld [vmem:[%s2484 + $0x118] sm:$0xff]
            %v2521 = vld [vmem:[%s2484 + $0x120] sm:$0xff]
            %v2522 = vld [vmem:[%s2484 + $0x128] sm:$0xff]
            %v2523 = vld [vmem:[%s2484 + $0x130] sm:$0xff]
            %v2524 = vld [vmem:[%s2484 + $0x138] sm:$0xff]
            %v2525 = vld [vmem:[%s2484 + $0x140] sm:$0xff]
            %v2526 = vld [vmem:[%s2484 + $0x148] sm:$0xff]
            %v2527 = vld [vmem:[%s2484 + $0x150] sm:$0xff]
            %v2528 = vld [vmem:[%s2484 + $0x158] sm:$0xff]
            %v2529 = vld [vmem:[%s2484 + $0x160] sm:$0xff]
            %v2530 = vld [vmem:[%s2484 + $0x168] sm:$0xff]
            %v2531 = vld [vmem:[%s2484 + $0x170] sm:$0xff]
            %v2532 = vld [vmem:[%s2484 + $0x178] sm:$0xff]
            %v2533 = vld [vmem:[%s2484 + $0x180] sm:$0xff]
            %v2534 = vld [vmem:[%s2484 + $0x188] sm:$0xff]
            %v2535 = vld [vmem:[%s2484 + $0x190] sm:$0xff]
            %v2536 = vld [vmem:[%s2484 + $0x198] sm:$0xff]
            %v2537 = vld [vmem:[%s2484 + $0x1a0] sm:$0xff]
            %v2538 = vld [vmem:[%s2484 + $0x1a8] sm:$0xff]
            %v2539 = vld [vmem:[%s2484 + $0x1b0] sm:$0xff]
            %v2540 = vld [vmem:[%s2484 + $0x1b8] sm:$0xff]
            %v2541 = vld [vmem:[%s2484 + $0x1c0] sm:$0xff]
            %v2542 = vld [vmem:[%s2484 + $0x1c8] sm:$0xff]
            %v2543 = vld [vmem:[%s2484 + $0x1d0] sm:$0xff]
            %v2544 = vld [vmem:[%s2484 + $0x1d8] sm:$0xff]
            %v2545 = vld [vmem:[%s2484 + $0x1e0] sm:$0xff]
            %v2546 = vld [vmem:[%s2484 + $0x1e8] sm:$0xff]
            %v2547 = vld [vmem:[%s2484 + $0x1f0] sm:$0xff]
            %v2548 = vld [vmem:[%s2484 + $0x1f8] sm:$0xff]
            %v2549 = vadd.f32 %v2485, %v2279
            %v2550 = vadd.f32 %v2486, %v2280
            %v2551 = vadd.f32 %v2487, %v2281
            %v2552 = vadd.f32 %v2488, %v2282
            %v2553 = vadd.f32 %v2489, %v2283
            %v2554 = vadd.f32 %v2490, %v2284
            %v2555 = vadd.f32 %v2491, %v2285
            %v2556 = vadd.f32 %v2492, %v2286
            %v2557 = vadd.f32 %v2493, %v2287
            %v2558 = vadd.f32 %v2494, %v2288
            %v2559 = vadd.f32 %v2495, %v2289
            %v2560 = vadd.f32 %v2496, %v2290
            %v2561 = vadd.f32 %v2497, %v2291
            %v2562 = vadd.f32 %v2498, %v2292
            %v2563 = vadd.f32 %v2499, %v2293
            %v2564 = vadd.f32 %v2500, %v2294
            %v2565 = vadd.f32 %v2501, %v2295
            %v2566 = vadd.f32 %v2502, %v2296
            %v2567 = vadd.f32 %v2503, %v2297
            %v2568 = vadd.f32 %v2504, %v2298
            %v2569 = vadd.f32 %v2505, %v2299
            %v2570 = vadd.f32 %v2506, %v2300
            %v2571 = vadd.f32 %v2507, %v2301
            %v2572 = vadd.f32 %v2508, %v2302
            %v2573 = vadd.f32 %v2509, %v2303
            %v2574 = vadd.f32 %v2510, %v2304
            %v2575 = vadd.f32 %v2511, %v2305
            %v2576 = vadd.f32 %v2512, %v2306
            %v2577 = vadd.f32 %v2513, %v2307
            %v2578 = vadd.f32 %v2514, %v2308
            %v2579 = vadd.f32 %v2515, %v2309
            %v2580 = vadd.f32 %v2516, %v2310
            %v2581 = vadd.f32 %v2517, %v2311
            %v2582 = vadd.f32 %v2518, %v2312
            %v2583 = vadd.f32 %v2519, %v2313
            %v2584 = vadd.f32 %v2520, %v2314
            %v2585 = vadd.f32 %v2521, %v2315
            %v2586 = vadd.f32 %v2522, %v2316
            %v2587 = vadd.f32 %v2523, %v2317
            %v2588 = vadd.f32 %v2524, %v2318
            %v2589 = vadd.f32 %v2525, %v2319
            %v2590 = vadd.f32 %v2526, %v2320
            %v2591 = vadd.f32 %v2527, %v2321
            %v2592 = vadd.f32 %v2528, %v2322
            %v2593 = vadd.f32 %v2529, %v2323
            %v2594 = vadd.f32 %v2530, %v2324
            %v2595 = vadd.f32 %v2531, %v2325
            %v2596 = vadd.f32 %v2532, %v2326
            %v2597 = vadd.f32 %v2533, %v2327
            %v2598 = vadd.f32 %v2534, %v2328
            %v2599 = vadd.f32 %v2535, %v2329
            %v2600 = vadd.f32 %v2536, %v2330
            %v2601 = vadd.f32 %v2537, %v2331
            %v2602 = vadd.f32 %v2538, %v2332
            %v2603 = vadd.f32 %v2539, %v2333
            %v2604 = vadd.f32 %v2540, %v2334
            %v2605 = vadd.f32 %v2541, %v2335
            %v2606 = vadd.f32 %v2542, %v2336
            %v2607 = vadd.f32 %v2543, %v2337
            %v2608 = vadd.f32 %v2544, %v2338
            %v2609 = vadd.f32 %v2545, %v2339
            %v2610 = vadd.f32 %v2546, %v2340
            %v2611 = vadd.f32 %v2547, %v2341
            %v2612 = vadd.f32 %v2548, %v2342
            %2613 = vst.msk [vmem:[%s2484] sm:$0xff] %vm2347, %v2549
            %2614 = vst.msk [vmem:[%s2484 + $0x8] sm:$0xff] %vm2347, %v2550
            %2615 = vst.msk [vmem:[%s2484 + $0x10] sm:$0xff] %vm2347, %v2551
            %2616 = vst.msk [vmem:[%s2484 + $0x18] sm:$0xff] %vm2347, %v2552
            %2617 = vst.msk [vmem:[%s2484 + $0x20] sm:$0xff] %vm2347, %v2553
            %2618 = vst.msk [vmem:[%s2484 + $0x28] sm:$0xff] %vm2347, %v2554
            %2619 = vst.msk [vmem:[%s2484 + $0x30] sm:$0xff] %vm2347, %v2555
            %2620 = vst.msk [vmem:[%s2484 + $0x38] sm:$0xff] %vm2347, %v2556
            %2621 = vst.msk [vmem:[%s2484 + $0x40] sm:$0xff] %vm2347, %v2557
            %2622 = vst.msk [vmem:[%s2484 + $0x48] sm:$0xff] %vm2347, %v2558
            %2623 = vst.msk [vmem:[%s2484 + $0x50] sm:$0xff] %vm2347, %v2559
            %2624 = vst.msk [vmem:[%s2484 + $0x58] sm:$0xff] %vm2347, %v2560
            %2625 = vst.msk [vmem:[%s2484 + $0x60] sm:$0xff] %vm2347, %v2561
            %2626 = vst.msk [vmem:[%s2484 + $0x68] sm:$0xff] %vm2347, %v2562
            %2627 = vst.msk [vmem:[%s2484 + $0x70] sm:$0xff] %vm2347, %v2563
            %2628 = vst.msk [vmem:[%s2484 + $0x78] sm:$0xff] %vm2347, %v2564
            %2629 = vst.msk [vmem:[%s2484 + $0x80] sm:$0xff] %vm2347, %v2565
            %2630 = vst.msk [vmem:[%s2484 + $0x88] sm:$0xff] %vm2347, %v2566
            %2631 = vst.msk [vmem:[%s2484 + $0x90] sm:$0xff] %vm2347, %v2567
            %2632 = vst.msk [vmem:[%s2484 + $0x98] sm:$0xff] %vm2347, %v2568
            %2633 = vst.msk [vmem:[%s2484 + $0xa0] sm:$0xff] %vm2347, %v2569
            %2634 = vst.msk [vmem:[%s2484 + $0xa8] sm:$0xff] %vm2347, %v2570
            %2635 = vst.msk [vmem:[%s2484 + $0xb0] sm:$0xff] %vm2347, %v2571
            %2636 = vst.msk [vmem:[%s2484 + $0xb8] sm:$0xff] %vm2347, %v2572
            %2637 = vst.msk [vmem:[%s2484 + $0xc0] sm:$0xff] %vm2347, %v2573
            %2638 = vst.msk [vmem:[%s2484 + $0xc8] sm:$0xff] %vm2347, %v2574
            %2639 = vst.msk [vmem:[%s2484 + $0xd0] sm:$0xff] %vm2347, %v2575
            %2640 = vst.msk [vmem:[%s2484 + $0xd8] sm:$0xff] %vm2347, %v2576
            %2641 = vst.msk [vmem:[%s2484 + $0xe0] sm:$0xff] %vm2347, %v2577
            %2642 = vst.msk [vmem:[%s2484 + $0xe8] sm:$0xff] %vm2347, %v2578
            %2643 = vst.msk [vmem:[%s2484 + $0xf0] sm:$0xff] %vm2347, %v2579
            %2644 = vst.msk [vmem:[%s2484 + $0xf8] sm:$0xff] %vm2347, %v2580
            %2645 = vst.msk [vmem:[%s2484 + $0x100] sm:$0xff] %vm2347, %v2581
            %2646 = vst.msk [vmem:[%s2484 + $0x108] sm:$0xff] %vm2347, %v2582
            %2647 = vst.msk [vmem:[%s2484 + $0x110] sm:$0xff] %vm2347, %v2583
            %2648 = vst.msk [vmem:[%s2484 + $0x118] sm:$0xff] %vm2347, %v2584
            %2649 = vst.msk [vmem:[%s2484 + $0x120] sm:$0xff] %vm2347, %v2585
            %2650 = vst.msk [vmem:[%s2484 + $0x128] sm:$0xff] %vm2347, %v2586
            %2651 = vst.msk [vmem:[%s2484 + $0x130] sm:$0xff] %vm2347, %v2587
            %2652 = vst.msk [vmem:[%s2484 + $0x138] sm:$0xff] %vm2347, %v2588
            %2653 = vst.msk [vmem:[%s2484 + $0x140] sm:$0xff] %vm2347, %v2589
            %2654 = vst.msk [vmem:[%s2484 + $0x148] sm:$0xff] %vm2347, %v2590
            %2655 = vst.msk [vmem:[%s2484 + $0x150] sm:$0xff] %vm2347, %v2591
            %2656 = vst.msk [vmem:[%s2484 + $0x158] sm:$0xff] %vm2347, %v2592
            %2657 = vst.msk [vmem:[%s2484 + $0x160] sm:$0xff] %vm2347, %v2593
            %2658 = vst.msk [vmem:[%s2484 + $0x168] sm:$0xff] %vm2347, %v2594
            %2659 = vst.msk [vmem:[%s2484 + $0x170] sm:$0xff] %vm2347, %v2595
            %2660 = vst.msk [vmem:[%s2484 + $0x178] sm:$0xff] %vm2347, %v2596
            %2661 = vst.msk [vmem:[%s2484 + $0x180] sm:$0xff] %vm2347, %v2597
            %2662 = vst.msk [vmem:[%s2484 + $0x188] sm:$0xff] %vm2347, %v2598
            %2663 = vst.msk [vmem:[%s2484 + $0x190] sm:$0xff] %vm2347, %v2599
            %2664 = vst.msk [vmem:[%s2484 + $0x198] sm:$0xff] %vm2347, %v2600
            %2665 = vst.msk [vmem:[%s2484 + $0x1a0] sm:$0xff] %vm2347, %v2601
            %2666 = vst.msk [vmem:[%s2484 + $0x1a8] sm:$0xff] %vm2347, %v2602
            %2667 = vst.msk [vmem:[%s2484 + $0x1b0] sm:$0xff] %vm2347, %v2603
            %2668 = vst.msk [vmem:[%s2484 + $0x1b8] sm:$0xff] %vm2347, %v2604
            %2669 = vst.msk [vmem:[%s2484 + $0x1c0] sm:$0xff] %vm2347, %v2605
            %2670 = vst.msk [vmem:[%s2484 + $0x1c8] sm:$0xff] %vm2347, %v2606
            %2671 = vst.msk [vmem:[%s2484 + $0x1d0] sm:$0xff] %vm2347, %v2607
            %2672 = vst.msk [vmem:[%s2484 + $0x1d8] sm:$0xff] %vm2347, %v2608
            %2673 = vst.msk [vmem:[%s2484 + $0x1e0] sm:$0xff] %vm2347, %v2609
            %2674 = vst.msk [vmem:[%s2484 + $0x1e8] sm:$0xff] %vm2347, %v2610
            %2675 = vst.msk [vmem:[%s2484 + $0x1f0] sm:$0xff] %vm2347, %v2611
            %2676 = vst.msk [vmem:[%s2484 + $0x1f8] sm:$0xff] %vm2347, %v2612
          $region71: #{_fused_propagate.1} parent=62 // pred_fallthru
            _
          %p2677 = scmp.eq.s32.totalorder %s21, 2
          // Predicated region
          $region72: #{_fused_propagate.1} parent=62 // pred_check
            %p2678 = pneg %p2677
          $region73: #{_fused_propagate.1} parent=62 // pred_check_branch
            %2680 = sbr.rel (%p2678) target = $region75
          $region74: #{_fused_propagate.1} parent=62 // pred_region
            %s2681 = scalar_lea.vmem [#allocation4], %s2344
            %v2682 = vld [vmem:[%s2681] sm:$0xff]
            %v2683 = vld [vmem:[%s2681 + $0x8] sm:$0xff]
            %v2684 = vld [vmem:[%s2681 + $0x10] sm:$0xff]
            %v2685 = vld [vmem:[%s2681 + $0x18] sm:$0xff]
            %v2686 = vld [vmem:[%s2681 + $0x20] sm:$0xff]
            %v2687 = vld [vmem:[%s2681 + $0x28] sm:$0xff]
            %v2688 = vld [vmem:[%s2681 + $0x30] sm:$0xff]
            %v2689 = vld [vmem:[%s2681 + $0x38] sm:$0xff]
            %v2690 = vld [vmem:[%s2681 + $0x40] sm:$0xff]
            %v2691 = vld [vmem:[%s2681 + $0x48] sm:$0xff]
            %v2692 = vld [vmem:[%s2681 + $0x50] sm:$0xff]
            %v2693 = vld [vmem:[%s2681 + $0x58] sm:$0xff]
            %v2694 = vld [vmem:[%s2681 + $0x60] sm:$0xff]
            %v2695 = vld [vmem:[%s2681 + $0x68] sm:$0xff]
            %v2696 = vld [vmem:[%s2681 + $0x70] sm:$0xff]
            %v2697 = vld [vmem:[%s2681 + $0x78] sm:$0xff]
            %v2698 = vld [vmem:[%s2681 + $0x80] sm:$0xff]
            %v2699 = vld [vmem:[%s2681 + $0x88] sm:$0xff]
            %v2700 = vld [vmem:[%s2681 + $0x90] sm:$0xff]
            %v2701 = vld [vmem:[%s2681 + $0x98] sm:$0xff]
            %v2702 = vld [vmem:[%s2681 + $0xa0] sm:$0xff]
            %v2703 = vld [vmem:[%s2681 + $0xa8] sm:$0xff]
            %v2704 = vld [vmem:[%s2681 + $0xb0] sm:$0xff]
            %v2705 = vld [vmem:[%s2681 + $0xb8] sm:$0xff]
            %v2706 = vld [vmem:[%s2681 + $0xc0] sm:$0xff]
            %v2707 = vld [vmem:[%s2681 + $0xc8] sm:$0xff]
            %v2708 = vld [vmem:[%s2681 + $0xd0] sm:$0xff]
            %v2709 = vld [vmem:[%s2681 + $0xd8] sm:$0xff]
            %v2710 = vld [vmem:[%s2681 + $0xe0] sm:$0xff]
            %v2711 = vld [vmem:[%s2681 + $0xe8] sm:$0xff]
            %v2712 = vld [vmem:[%s2681 + $0xf0] sm:$0xff]
            %v2713 = vld [vmem:[%s2681 + $0xf8] sm:$0xff]
            %v2714 = vld [vmem:[%s2681 + $0x100] sm:$0xff]
            %v2715 = vld [vmem:[%s2681 + $0x108] sm:$0xff]
            %v2716 = vld [vmem:[%s2681 + $0x110] sm:$0xff]
            %v2717 = vld [vmem:[%s2681 + $0x118] sm:$0xff]
            %v2718 = vld [vmem:[%s2681 + $0x120] sm:$0xff]
            %v2719 = vld [vmem:[%s2681 + $0x128] sm:$0xff]
            %v2720 = vld [vmem:[%s2681 + $0x130] sm:$0xff]
            %v2721 = vld [vmem:[%s2681 + $0x138] sm:$0xff]
            %v2722 = vld [vmem:[%s2681 + $0x140] sm:$0xff]
            %v2723 = vld [vmem:[%s2681 + $0x148] sm:$0xff]
            %v2724 = vld [vmem:[%s2681 + $0x150] sm:$0xff]
            %v2725 = vld [vmem:[%s2681 + $0x158] sm:$0xff]
            %v2726 = vld [vmem:[%s2681 + $0x160] sm:$0xff]
            %v2727 = vld [vmem:[%s2681 + $0x168] sm:$0xff]
            %v2728 = vld [vmem:[%s2681 + $0x170] sm:$0xff]
            %v2729 = vld [vmem:[%s2681 + $0x178] sm:$0xff]
            %v2730 = vld [vmem:[%s2681 + $0x180] sm:$0xff]
            %v2731 = vld [vmem:[%s2681 + $0x188] sm:$0xff]
            %v2732 = vld [vmem:[%s2681 + $0x190] sm:$0xff]
            %v2733 = vld [vmem:[%s2681 + $0x198] sm:$0xff]
            %v2734 = vld [vmem:[%s2681 + $0x1a0] sm:$0xff]
            %v2735 = vld [vmem:[%s2681 + $0x1a8] sm:$0xff]
            %v2736 = vld [vmem:[%s2681 + $0x1b0] sm:$0xff]
            %v2737 = vld [vmem:[%s2681 + $0x1b8] sm:$0xff]
            %v2738 = vld [vmem:[%s2681 + $0x1c0] sm:$0xff]
            %v2739 = vld [vmem:[%s2681 + $0x1c8] sm:$0xff]
            %v2740 = vld [vmem:[%s2681 + $0x1d0] sm:$0xff]
            %v2741 = vld [vmem:[%s2681 + $0x1d8] sm:$0xff]
            %v2742 = vld [vmem:[%s2681 + $0x1e0] sm:$0xff]
            %v2743 = vld [vmem:[%s2681 + $0x1e8] sm:$0xff]
            %v2744 = vld [vmem:[%s2681 + $0x1f0] sm:$0xff]
            %v2745 = vld [vmem:[%s2681 + $0x1f8] sm:$0xff]
            %v2746 = vmul.f32 %v2682, 0.33333334
            %v2747 = vmul.f32 %v2683, 0.33333334
            %v2748 = vmul.f32 %v2684, 0.33333334
            %v2749 = vmul.f32 %v2685, 0.33333334
            %v2750 = vmul.f32 %v2686, 0.33333334
            %v2751 = vmul.f32 %v2687, 0.33333334
            %v2752 = vmul.f32 %v2688, 0.33333334
            %v2753 = vmul.f32 %v2689, 0.33333334
            %v2754 = vmul.f32 %v2690, 0.33333334
            %v2755 = vmul.f32 %v2691, 0.33333334
            %v2756 = vmul.f32 %v2692, 0.33333334
            %v2757 = vmul.f32 %v2693, 0.33333334
            %v2758 = vmul.f32 %v2694, 0.33333334
            %v2759 = vmul.f32 %v2695, 0.33333334
            %v2760 = vmul.f32 %v2696, 0.33333334
            %v2761 = vmul.f32 %v2697, 0.33333334
            %v2762 = vmul.f32 %v2698, 0.33333334
            %v2763 = vmul.f32 %v2699, 0.33333334
            %v2764 = vmul.f32 %v2700, 0.33333334
            %v2765 = vmul.f32 %v2701, 0.33333334
            %v2766 = vmul.f32 %v2702, 0.33333334
            %v2767 = vmul.f32 %v2703, 0.33333334
            %v2768 = vmul.f32 %v2704, 0.33333334
            %v2769 = vmul.f32 %v2705, 0.33333334
            %v2770 = vmul.f32 %v2706, 0.33333334
            %v2771 = vmul.f32 %v2707, 0.33333334
            %v2772 = vmul.f32 %v2708, 0.33333334
            %v2773 = vmul.f32 %v2709, 0.33333334
            %v2774 = vmul.f32 %v2710, 0.33333334
            %v2775 = vmul.f32 %v2711, 0.33333334
            %v2776 = vmul.f32 %v2712, 0.33333334
            %v2777 = vmul.f32 %v2713, 0.33333334
            %v2778 = vmul.f32 %v2714, 0.33333334
            %v2779 = vmul.f32 %v2715, 0.33333334
            %v2780 = vmul.f32 %v2716, 0.33333334
            %v2781 = vmul.f32 %v2717, 0.33333334
            %v2782 = vmul.f32 %v2718, 0.33333334
            %v2783 = vmul.f32 %v2719, 0.33333334
            %v2784 = vmul.f32 %v2720, 0.33333334
            %v2785 = vmul.f32 %v2721, 0.33333334
            %v2786 = vmul.f32 %v2722, 0.33333334
            %v2787 = vmul.f32 %v2723, 0.33333334
            %v2788 = vmul.f32 %v2724, 0.33333334
            %v2789 = vmul.f32 %v2725, 0.33333334
            %v2790 = vmul.f32 %v2726, 0.33333334
            %v2791 = vmul.f32 %v2727, 0.33333334
            %v2792 = vmul.f32 %v2728, 0.33333334
            %v2793 = vmul.f32 %v2729, 0.33333334
            %v2794 = vmul.f32 %v2730, 0.33333334
            %v2795 = vmul.f32 %v2731, 0.33333334
            %v2796 = vmul.f32 %v2732, 0.33333334
            %v2797 = vmul.f32 %v2733, 0.33333334
            %v2798 = vmul.f32 %v2734, 0.33333334
            %v2799 = vmul.f32 %v2735, 0.33333334
            %v2800 = vmul.f32 %v2736, 0.33333334
            %v2801 = vmul.f32 %v2737, 0.33333334
            %v2802 = vmul.f32 %v2738, 0.33333334
            %v2803 = vmul.f32 %v2739, 0.33333334
            %v2804 = vmul.f32 %v2740, 0.33333334
            %v2805 = vmul.f32 %v2741, 0.33333334
            %v2806 = vmul.f32 %v2742, 0.33333334
            %v2807 = vmul.f32 %v2743, 0.33333334
            %v2808 = vmul.f32 %v2744, 0.33333334
            %v2809 = vmul.f32 %v2745, 0.33333334
            %2810 = vst.msk [vmem:[%s165] sm:$0xff] %vm2347, %v2746
            %2811 = vst.msk [vmem:[%s165 + $0x8] sm:$0xff] %vm2347, %v2747
            %2812 = vst.msk [vmem:[%s165 + $0x10] sm:$0xff] %vm2347, %v2748
            %2813 = vst.msk [vmem:[%s165 + $0x18] sm:$0xff] %vm2347, %v2749
            %2814 = vst.msk [vmem:[%s165 + $0x20] sm:$0xff] %vm2347, %v2750
            %2815 = vst.msk [vmem:[%s165 + $0x28] sm:$0xff] %vm2347, %v2751
            %2816 = vst.msk [vmem:[%s165 + $0x30] sm:$0xff] %vm2347, %v2752
            %2817 = vst.msk [vmem:[%s165 + $0x38] sm:$0xff] %vm2347, %v2753
            %2818 = vst.msk [vmem:[%s165 + $0x40] sm:$0xff] %vm2347, %v2754
            %2819 = vst.msk [vmem:[%s165 + $0x48] sm:$0xff] %vm2347, %v2755
            %2820 = vst.msk [vmem:[%s165 + $0x50] sm:$0xff] %vm2347, %v2756
            %2821 = vst.msk [vmem:[%s165 + $0x58] sm:$0xff] %vm2347, %v2757
            %2822 = vst.msk [vmem:[%s165 + $0x60] sm:$0xff] %vm2347, %v2758
            %2823 = vst.msk [vmem:[%s165 + $0x68] sm:$0xff] %vm2347, %v2759
            %2824 = vst.msk [vmem:[%s165 + $0x70] sm:$0xff] %vm2347, %v2760
            %2825 = vst.msk [vmem:[%s165 + $0x78] sm:$0xff] %vm2347, %v2761
            %2826 = vst.msk [vmem:[%s165 + $0x80] sm:$0xff] %vm2347, %v2762
            %2827 = vst.msk [vmem:[%s165 + $0x88] sm:$0xff] %vm2347, %v2763
            %2828 = vst.msk [vmem:[%s165 + $0x90] sm:$0xff] %vm2347, %v2764
            %2829 = vst.msk [vmem:[%s165 + $0x98] sm:$0xff] %vm2347, %v2765
            %2830 = vst.msk [vmem:[%s165 + $0xa0] sm:$0xff] %vm2347, %v2766
            %2831 = vst.msk [vmem:[%s165 + $0xa8] sm:$0xff] %vm2347, %v2767
            %2832 = vst.msk [vmem:[%s165 + $0xb0] sm:$0xff] %vm2347, %v2768
            %2833 = vst.msk [vmem:[%s165 + $0xb8] sm:$0xff] %vm2347, %v2769
            %2834 = vst.msk [vmem:[%s165 + $0xc0] sm:$0xff] %vm2347, %v2770
            %2835 = vst.msk [vmem:[%s165 + $0xc8] sm:$0xff] %vm2347, %v2771
            %2836 = vst.msk [vmem:[%s165 + $0xd0] sm:$0xff] %vm2347, %v2772
            %2837 = vst.msk [vmem:[%s165 + $0xd8] sm:$0xff] %vm2347, %v2773
            %2838 = vst.msk [vmem:[%s165 + $0xe0] sm:$0xff] %vm2347, %v2774
            %2839 = vst.msk [vmem:[%s165 + $0xe8] sm:$0xff] %vm2347, %v2775
            %2840 = vst.msk [vmem:[%s165 + $0xf0] sm:$0xff] %vm2347, %v2776
            %2841 = vst.msk [vmem:[%s165 + $0xf8] sm:$0xff] %vm2347, %v2777
            %2842 = vst.msk [vmem:[%s165 + $0x100] sm:$0xff] %vm2347, %v2778
            %2843 = vst.msk [vmem:[%s165 + $0x108] sm:$0xff] %vm2347, %v2779
            %2844 = vst.msk [vmem:[%s165 + $0x110] sm:$0xff] %vm2347, %v2780
            %2845 = vst.msk [vmem:[%s165 + $0x118] sm:$0xff] %vm2347, %v2781
            %2846 = vst.msk [vmem:[%s165 + $0x120] sm:$0xff] %vm2347, %v2782
            %2847 = vst.msk [vmem:[%s165 + $0x128] sm:$0xff] %vm2347, %v2783
            %2848 = vst.msk [vmem:[%s165 + $0x130] sm:$0xff] %vm2347, %v2784
            %2849 = vst.msk [vmem:[%s165 + $0x138] sm:$0xff] %vm2347, %v2785
            %2850 = vst.msk [vmem:[%s165 + $0x140] sm:$0xff] %vm2347, %v2786
            %2851 = vst.msk [vmem:[%s165 + $0x148] sm:$0xff] %vm2347, %v2787
            %2852 = vst.msk [vmem:[%s165 + $0x150] sm:$0xff] %vm2347, %v2788
            %2853 = vst.msk [vmem:[%s165 + $0x158] sm:$0xff] %vm2347, %v2789
            %2854 = vst.msk [vmem:[%s165 + $0x160] sm:$0xff] %vm2347, %v2790
            %2855 = vst.msk [vmem:[%s165 + $0x168] sm:$0xff] %vm2347, %v2791
            %2856 = vst.msk [vmem:[%s165 + $0x170] sm:$0xff] %vm2347, %v2792
            %2857 = vst.msk [vmem:[%s165 + $0x178] sm:$0xff] %vm2347, %v2793
            %2858 = vst.msk [vmem:[%s165 + $0x180] sm:$0xff] %vm2347, %v2794
            %2859 = vst.msk [vmem:[%s165 + $0x188] sm:$0xff] %vm2347, %v2795
            %2860 = vst.msk [vmem:[%s165 + $0x190] sm:$0xff] %vm2347, %v2796
            %2861 = vst.msk [vmem:[%s165 + $0x198] sm:$0xff] %vm2347, %v2797
            %2862 = vst.msk [vmem:[%s165 + $0x1a0] sm:$0xff] %vm2347, %v2798
            %2863 = vst.msk [vmem:[%s165 + $0x1a8] sm:$0xff] %vm2347, %v2799
            %2864 = vst.msk [vmem:[%s165 + $0x1b0] sm:$0xff] %vm2347, %v2800
            %2865 = vst.msk [vmem:[%s165 + $0x1b8] sm:$0xff] %vm2347, %v2801
            %2866 = vst.msk [vmem:[%s165 + $0x1c0] sm:$0xff] %vm2347, %v2802
            %2867 = vst.msk [vmem:[%s165 + $0x1c8] sm:$0xff] %vm2347, %v2803
            %2868 = vst.msk [vmem:[%s165 + $0x1d0] sm:$0xff] %vm2347, %v2804
            %2869 = vst.msk [vmem:[%s165 + $0x1d8] sm:$0xff] %vm2347, %v2805
            %2870 = vst.msk [vmem:[%s165 + $0x1e0] sm:$0xff] %vm2347, %v2806
            %2871 = vst.msk [vmem:[%s165 + $0x1e8] sm:$0xff] %vm2347, %v2807
            %2872 = vst.msk [vmem:[%s165 + $0x1f0] sm:$0xff] %vm2347, %v2808
            %2873 = vst.msk [vmem:[%s165 + $0x1f8] sm:$0xff] %vm2347, %v2809
          $region75: #{_fused_propagate.1} parent=62 // pred_fallthru
            _
        $region63: #{_fused_propagate.1} parent=23 // pred_fallthru
          _
        %s2874 = smul.u32 64, %s22
        %p2875 = scmp.lt.s32.totalorder %s2874, 127
        %s2876 = scalar_select %p2875, %s2874, 127
        %s2877 = smul.addr %s2876, 8
        %s2878 = scalar_lea.vmem %s2, %s2877
        // Predicated region
        $region76: #{_fused_propagate.1} parent=23 // pred_check
          %p2879 = pneg %p81
        $region77: #{_fused_propagate.1} parent=23 // pred_check_branch
          %2881 = sbr.rel (%p2879) target = $region79
        $region78: #{_fused_propagate.1} parent=23 // pred_region
          %s2882 = smul.u32 64, %s22
        $region79: #{_fused_propagate.1} parent=23 // pred_fallthru
          _
      $region24: #{_fused_propagate.1} parent=5 // pred_fallthru
        _
      %p2883 = scmp.le.s32.totalorder 2, %s11
      // Predicated region
      $region80: #{_fused_propagate.1} parent=5 // pred_check
        %p2884 = pneg %p2883
      $region81: #{_fused_propagate.1} parent=5 // pred_check_branch
        %2886 = sbr.rel (%p2884) target = $region83
      $region82: #{_fused_propagate.1} parent=5 // pred_region
        %s2887 = ssub.s32 %s11, 2
        // Predicated region
        $region84: #{_fused_propagate.1} parent=82 // pred_check
          %p2888 = pneg %p87
        $region85: #{_fused_propagate.1} parent=82 // pred_check_branch
          %2890 = sbr.rel (%p2888) target = $region87
        $region86: #{_fused_propagate.1} parent=82 // pred_region
          %s2891 = smul.u32 64, %s25
          %p2892 = scmp.lt.s32.totalorder %s2891, 127
          %s2893 = scalar_select %p2892, %s2891, 127
          %s2894 = smul.addr %s2893, 8
          %s2895 = scalar_lea.vmem %s2, %s2894
        $region87: #{_fused_propagate.1} parent=82 // pred_fallthru
          _
      $region83: #{_fused_propagate.1} parent=5 // pred_fallthru
        _
    $region6: #{_fused_propagate.1} parent=1 // loop_footer
      %s15 = sadd.s32 1, %s11
    $region7: #{_fused_propagate.1} parent=1 // loop_footer_branch
      %10 = sbr.rel target = $region3
    $region8: #{_fused_propagate.1} parent=1 // loop_exit
      _
    %2896 = vsyncpa [#allocation7], 1
    %s2897 = scalar_lea.sflag [#allocation7], 1
    %2898 = vsyncpa %s2897, 1
  %2899 = vsyncmov [#allocation5]
  %s2900 = vpop.sfrf %2899
  %p2901 = scmp.eq.s32.totalorder %s2900, 0
  %p2902 = pneg %p2901
  %2904 = shalt.err (%p2902)

</llo_original>
